<compile_context>
chip_gen: v7x
topology: tpu7x:2x2x1
jax: 0.10.0
libtpu: 0.0.40
codegen_flags: <defaults>
</compile_context>

<pallas_src>
import math

import jax
import jax.numpy as jnp
from jax.experimental import pallas as pl
from jax.experimental.pallas import tpu as pltpu

# ----- model hyper-parameters (small, consistent with the module's forward) -----
S = 8           # src / tgt sequence length
B = 2           # batch size
E = 32          # emb_size (decoder.emb_size)
H = 2           # attention heads
DH = E // H     # head dim
F = 64          # feed-forward hidden
VOCAB = 16      # vocab_size
M = B * S       # flattened tokens per sequence side
PAD, SOS = 1, 2
NEG_INF = float("-inf")   # only used to mirror the reference create_mask for the dim checks
NEG_BIG = -1e30           # finite mask value used inside the kernel (avoids NaN softmax rows)
LN_EPS = 1e-5


# ============================ the fused Pallas kernel ============================

def _seq2seq_kernel(
    # activations / biases
    x_enc_ref, x_dec_ref, enc_bias_ref, dec_bias_ref, cross_bias_ref,
    # encoder layer params
    e_wqkv_ref, e_bqkv_ref, e_wo_ref, e_bo_ref,
    e_ln1g_ref, e_ln1b_ref, e_w1_ref, e_b1_ref, e_w2_ref, e_b2_ref,
    e_ln2g_ref, e_ln2b_ref,
    # decoder layer params
    d_wqkv_ref, d_bqkv_ref, d_wo_ref, d_bo_ref,
    c_wqkv_ref, c_bqkv_ref, c_wo_ref, c_bo_ref,
    d_ln1g_ref, d_ln1b_ref, d_ln2g_ref, d_ln2b_ref, d_ln3g_ref, d_ln3b_ref,
    d_w1_ref, d_b1_ref, d_w2_ref, d_b2_ref,
    # final projection
    fc_w_ref, fc_b_ref,
    # output
    logits_ref,
):
    f32, bf16 = jnp.float32, jnp.bfloat16

    def mm(x, w, b=None):
        # MXU matmul: bf16 operands, fp32 accumulation.
        y = jnp.dot(x.astype(bf16), w.astype(bf16), preferred_element_type=f32)
        return y if b is None else y + b

    def layer_norm(x, g_ref, b_ref):
        mu = jnp.mean(x, axis=-1, keepdims=True)
        var = jnp.mean(jnp.square(x - mu), axis=-1, keepdims=True)
        return (x - mu) * jax.lax.rsqrt(var + LN_EPS) * g_ref[...] + b_ref[...]

    def mha(xq, xkv, wqkv_ref, bqkv_ref, wo_ref, bo_ref, bias):
        # xq / xkv: [B*S, E] (batch-major rows), bias: [B, S, S] additive.
        # Head loop is tiny (H=2) and statically unrolled; 1/sqrt(DH) is pre-folded into
        # the q weights/bias in the wrapper.
        wo = wo_ref[...]
        out = None
        for h in range(H):
            qh = mm(xq, wqkv_ref[0, h], bqkv_ref[0, h]).reshape(B, S, DH)
            kh = mm(xkv, wqkv_ref[1, h], bqkv_ref[1, h]).reshape(B, S, DH)
            vh = mm(xkv, wqkv_ref[2, h], bqkv_ref[2, h]).reshape(B, S, DH)
            s = jnp.einsum("bqd,bkd->bqk", qh.astype(bf16), kh.astype(bf16),
                           preferred_element_type=f32) + bias
            s = s - jnp.max(s, axis=-1, keepdims=True)
            p = jnp.exp(s)
            p = p * pl.reciprocal(jnp.sum(p, axis=-1, keepdims=True), approx=True)
            oh = jnp.einsum("bqk,bkd->bqd", p.astype(bf16), vh.astype(bf16),
                            preferred_element_type=f32).reshape(B * S, DH)
            c = mm(oh, wo[h * DH:(h + 1) * DH, :])   # sublane-aligned weight slice
            out = c if out is None else out + c
        return out + bo_ref[...]

    # ---------------- encoder layer (post-LN) ----------------
    x = x_enc_ref[...]
    x = layer_norm(
        x + mha(x, x, e_wqkv_ref, e_bqkv_ref, e_wo_ref, e_bo_ref, enc_bias_ref[...]),
        e_ln1g_ref, e_ln1b_ref)
    ff = mm(jnp.maximum(mm(x, e_w1_ref[...], e_b1_ref[...]), 0.0),
            e_w2_ref[...], e_b2_ref[...])
    memory = layer_norm(x + ff, e_ln2g_ref, e_ln2b_ref)

    # ---------------- decoder layer (post-LN) ----------------
    y = x_dec_ref[...]
    y = layer_norm(
        y + mha(y, y, d_wqkv_ref, d_bqkv_ref, d_wo_ref, d_bo_ref, dec_bias_ref[...]),
        d_ln1g_ref, d_ln1b_ref)
    y = layer_norm(
        y + mha(y, memory, c_wqkv_ref, c_bqkv_ref, c_wo_ref, c_bo_ref, cross_bias_ref[...]),
        d_ln2g_ref, d_ln2b_ref)
    ff = mm(jnp.maximum(mm(y, d_w1_ref[...], d_b1_ref[...]), 0.0),
            d_w2_ref[...], d_b2_ref[...])
    y = layer_norm(y + ff, d_ln3g_ref, d_ln3b_ref)

    # ---------------- final vocab projection (fused, stays in VMEM) ----------------
    logits_ref[...] = mm(y, fc_w_ref[...], fc_b_ref[...])


def fused_transformer(*operands):
    """Single pallas_call for the whole forward pass. All operands fit trivially in VMEM."""
    in_specs = []
    for op in operands:
        nd = op.ndim
        in_specs.append(pl.BlockSpec(op.shape, lambda i, _nd=nd: (0,) * _nd))
    return pl.pallas_call(
        _seq2seq_kernel,
        out_shape=jax.ShapeDtypeStruct((M, VOCAB), jnp.float32),
        grid=(1,),
        in_specs=in_specs,
        out_specs=pl.BlockSpec((M, VOCAB), lambda i: (0, 0)),
        compiler_params=pltpu.CompilerParams(dimension_semantics=("arbitrary",)),
    )(*operands)


# ============================ JAX glue (runs once per jit'ed call) ============================

def sinusoid_pe(maxlen, d):
    pos = jnp.arange(maxlen, dtype=jnp.float32)[:, None]
    div = jnp.exp(-jnp.arange(0, d, 2, dtype=jnp.float32) * (math.log(10000.0) / d))
    pe = jnp.zeros((maxlen, d), jnp.float32)
    pe = pe.at[:, 0::2].set(jnp.sin(pos * div))
    pe = pe.at[:, 1::2].set(jnp.cos(pos * div))
    return pe


def embed(tokens, table):
    """tokens: [S, B] int -> [B*S, E] (scaled embedding + sinusoidal PE, batch-major rows)."""
    x = jnp.take(table, tokens, axis=0) * math.sqrt(E)          # [S, B, E]
    x = x + sinusoid_pe(tokens.shape[0], E)[:, None, :]
    return x.transpose(1, 0, 2).reshape(B * S, E).astype(jnp.float32)


def build_biases(src, tgt):
    """Additive attention biases [B, Tq, Tk]; finite NEG_BIG so fully-masked rows can't NaN."""
    src_pad = (src == PAD).T                                     # [B, S]
    tgt_pad = (tgt == PAD).T
    key_src = jnp.where(src_pad, NEG_BIG, 0.0)[:, None, :]       # [B, 1, S]
    key_tgt = jnp.where(tgt_pad, NEG_BIG, 0.0)[:, None, :]
    causal = jnp.where(jnp.tril(jnp.ones((S, S), bool)), 0.0, NEG_BIG)[None, :, :]
    enc_bias = jnp.broadcast_to(key_src, (B, S, S)).astype(jnp.float32)
    dec_self_bias = jnp.broadcast_to(causal + key_tgt, (B, S, S)).astype(jnp.float32)
    cross_bias = jnp.broadcast_to(key_src, (B, S, S)).astype(jnp.float32)
    return enc_bias, dec_self_bias, cross_bias


def pack_mha_params(p, scale_q):
    """wq/wk/wv [E,E], biases [E] -> head-structured stacks; 1/sqrt(DH) folded into q."""
    def heads_w(w):
        return w.reshape(E, H, DH).transpose(1, 0, 2)            # [H, E, DH]

    def heads_b(b):
        return b.reshape(H, 1, DH)                               # [H, 1, DH]

    wqkv = jnp.stack([heads_w(p["wq"]) * scale_q, heads_w(p["wk"]), heads_w(p["wv"])], 0)
    bqkv = jnp.stack([heads_b(p["bq"]) * scale_q, heads_b(p["bk"]), heads_b(p["bv"])], 0)
    return wqkv, bqkv, p["wo"], p["bo"].reshape(1, E)


def pack_operands(params, x_enc, x_dec, enc_bias, dec_self_bias, cross_bias):
    el = params["enc"]["layer"]
    dl = params["dec"]["layer"]
    scale = 1.0 / math.sqrt(DH)
    e_wqkv, e_bqkv, e_wo, e_bo = pack_mha_params(el["self_attn"], scale)
    d_wqkv, d_bqkv, d_wo, d_bo = pack_mha_params(dl["self_attn"], scale)
    c_wqkv, c_bqkv, c_wo, c_bo = pack_mha_params(dl["cross_attn"], scale)
    return [
        x_enc, x_dec, enc_bias, dec_self_bias, cross_bias,
        e_wqkv, e_bqkv, e_wo, e_bo,
        el["ln1_g"].reshape(1, E), el["ln1_b"].reshape(1, E),
        el["w1"], el["b1"].reshape(1, F), el["w2"], el["b2"].reshape(1, E),
        el["ln2_g"].reshape(1, E), el["ln2_b"].reshape(1, E),
        d_wqkv, d_bqkv, d_wo, d_bo,
        c_wqkv, c_bqkv, c_wo, c_bo,
        dl["ln1_g"].reshape(1, E), dl["ln1_b"].reshape(1, E),
        dl["ln2_g"].reshape(1, E), dl["ln2_b"].reshape(1, E),
        dl["ln3_g"].reshape(1, E), dl["ln3_b"].reshape(1, E),
        dl["w1"], dl["b1"].reshape(1, F), dl["w2"], dl["b2"].reshape(1, E),
        params["fc_w"], params["fc_b"].reshape(1, VOCAB),
    ]


# ============================ Seq2SeqTransformer semantics ============================

def shift_right(src):
    # Mirrors the reference exactly: prepend an SOS column along dim 1 and drop the last column.
    d0, _ = src.shape
    sos = jnp.full((d0, 1), SOS, dtype=src.dtype)
    return jnp.concatenate([sos, src[:, :-1]], axis=1)


def create_mask(src, tgt):
    src_len, tgt_len = src.shape[0], tgt.shape[0]
    causal = jnp.tril(jnp.ones((tgt_len, tgt_len), dtype=bool))
    tgt_mask = jnp.where(causal, 0.0, NEG_INF).astype(jnp.float32)
    src_mask = jnp.zeros((src_len, src_len), jnp.float32)
    src_padding_mask = (src == PAD).T
    tgt_padding_mask = (tgt == PAD).T
    return src_mask, tgt_mask, src_padding_mask, tgt_padding_mask


def check_transformer_input_dimensions(src, tgt, src_mask, tgt_mask,
                                        src_padding_mask, tgt_padding_mask,
                                        memory_key_padding_mask):
    # Static (shape-only) checks: jit-safe, evaluated at trace time.
    batch_size, src_seq_len, tgt_seq_len = src.shape[1], src.shape[0], tgt.shape[0]
    assert src.ndim == 2 and tgt.ndim == 2
    assert tgt.shape[1] == batch_size
    assert src_mask.shape == (src_seq_len, src_seq_len)
    assert tgt_mask.shape == (tgt_seq_len, tgt_seq_len)
    assert src_padding_mask.shape == (batch_size, src_seq_len)
    assert memory_key_padding_mask.shape == (batch_size, src_seq_len)
    assert tgt_padding_mask.shape == (batch_size, tgt_seq_len)
    # TODO(synk): the reference's torch.isnan(...) value asserts require a host sync and are not
    # jit-compatible; NaN checking is done on the final output outside the traced path.


@jax.jit
def seq2seq_forward(params, x):
    src = x
    tgt = shift_right(src)
    src_mask, tgt_mask, src_pad, tgt_pad = create_mask(src, tgt)
    check_transformer_input_dimensions(src, tgt, src_mask, tgt_mask, src_pad, tgt_pad, src_pad)

    x_enc = embed(src, params["enc"]["emb"])
    x_dec = embed(tgt, params["dec"]["emb"])
    enc_bias, dec_self_bias, cross_bias = build_biases(src, tgt)

    ops = pack_operands(params, x_enc, x_dec, enc_bias, dec_self_bias, cross_bias)
    logits_flat = fused_transformer(*ops)                        # [B*S, VOCAB], row = b*S + s
    logits = logits_flat.reshape(B, S, VOCAB).transpose(1, 0, 2)  # [S, B, VOCAB]
    return logits, tgt


# ============================ deterministic parameter init ============================

def kaiming_uniform(key, fan_in, shape):
    bound = math.sqrt(6.0 / fan_in)   # kaiming_uniform_ with nonlinearity='relu'
    return jax.random.uniform(key, shape, jnp.float32, -bound, bound)


def init_mha(key):
    ks = jax.random.split(key, 4)
    return {
        "wq": kaiming_uniform(ks[0], E, (E, E)), "bq": jnp.zeros((E,), jnp.float32),
        "wk": kaiming_uniform(ks[1], E, (E, E)), "bk": jnp.zeros((E,), jnp.float32),
        "wv": kaiming_uniform(ks[2], E, (E, E)), "bv": jnp.zeros((E,), jnp.float32),
        "wo": kaiming_uniform(ks[3], E, (E, E)), "bo": jnp.zeros((E,), jnp.float32),
    }


def init_params(key):
    ke, kd, kf = jax.random.split(key, 3)

    ke_emb, ke_sa, ke_w1, ke_w2 = jax.random.split(ke, 4)
    enc_layer = {
        "self_attn": init_mha(ke_sa),
        "ln1_g": jnp.ones((E,), jnp.float32), "ln1_b": jnp.zeros((E,), jnp.float32),
        "ln2_g": jnp.ones((E,), jnp.float32), "ln2_b": jnp.zeros((E,), jnp.float32),
        "w1": kaiming_uniform(ke_w1, E, (E, F)), "b1": jnp.zeros((F,), jnp.float32),
        "w2": kaiming_uniform(ke_w2, F, (F, E)), "b2": jnp.zeros((E,), jnp.float32),
    }
    enc = {"emb": jax.random.uniform(ke_emb, (VOCAB, E), jnp.float32, -0.05, 0.05),
           "layer": enc_layer}

    kd_emb, kd_sa, kd_ca, kd_w1, kd_w2 = jax.random.split(kd, 5)
    dec_layer = {
        "self_attn": init_mha(kd_sa),
        "cross_attn": init_mha(kd_ca),
        "ln1_g": jnp.ones((E,), jnp.float32), "ln1_b": jnp.zeros((E,), jnp.float32),
        "ln2_g": jnp.ones((E,), jnp.float32), "ln2_b": jnp.zeros((E,), jnp.float32),
        "ln3_g": jnp.ones((E,), jnp.float32), "ln3_b": jnp.zeros((E,), jnp.float32),
        "w1": kaiming_uniform(kd_w1, E, (E, F)), "b1": jnp.zeros((F,), jnp.float32),
        "w2": kaiming_uniform(kd_w2, F, (F, E)), "b2": jnp.zeros((E,), jnp.float32),
    }
    dec = {"emb": jax.random.uniform(kd_emb, (VOCAB, E), jnp.float32, -0.05, 0.05),
           "layer": dec_layer}

    fc_w = kaiming_uniform(kf, E, (E, VOCAB))
    fc_b = jnp.zeros((VOCAB,), jnp.float32)
    return {"enc": enc, "dec": dec, "fc_w": fc_w, "fc_b": fc_b}


# ============================ main ============================

if __name__ == "__main__":
    key = jax.random.PRNGKey(0)
    k_tok, k_params = jax.random.split(key)
    # token ids in [3, VOCAB): avoids PAD so behavior matches the reference's -inf masking.
    src = jax.random.randint(k_tok, (S, B), 3, VOCAB, dtype=jnp.int32)
    params = init_params(k_params)

    logits, tgt = seq2seq_forward(params, src)
    jax.block_until_ready(logits)
    jax.block_until_ready(tgt)

    assert logits.shape == (S, B, VOCAB) and logits.dtype == jnp.float32
    assert tgt.shape == (S, B)
    assert not bool(jnp.isnan(logits).any())
    print("KERNEL_OK")
</pallas_src>

<mosaic_0001>
module attributes {stable_mosaic.version = 11 : i64} {
  func.func @_seq2seq_kernel(%arg0: i32, %arg1: memref<16x32xf32, #tpu.memory_space<vmem>>, %arg2: memref<16x32xf32, #tpu.memory_space<vmem>>, %arg3: memref<2x8x8xf32, #tpu.memory_space<vmem>>, %arg4: memref<2x8x8xf32, #tpu.memory_space<vmem>>, %arg5: memref<2x8x8xf32, #tpu.memory_space<vmem>>, %arg6: memref<3x2x32x16xf32, #tpu.memory_space<vmem>>, %arg7: memref<3x2x1x16xf32, #tpu.memory_space<vmem>>, %arg8: memref<32x32xf32, #tpu.memory_space<vmem>>, %arg9: memref<1x32xf32, #tpu.memory_space<vmem>>, %arg10: memref<1x32xf32, #tpu.memory_space<vmem>>, %arg11: memref<1x32xf32, #tpu.memory_space<vmem>>, %arg12: memref<32x64xf32, #tpu.memory_space<vmem>>, %arg13: memref<1x64xf32, #tpu.memory_space<vmem>>, %arg14: memref<64x32xf32, #tpu.memory_space<vmem>>, %arg15: memref<1x32xf32, #tpu.memory_space<vmem>>, %arg16: memref<1x32xf32, #tpu.memory_space<vmem>>, %arg17: memref<1x32xf32, #tpu.memory_space<vmem>>, %arg18: memref<3x2x32x16xf32, #tpu.memory_space<vmem>>, %arg19: memref<3x2x1x16xf32, #tpu.memory_space<vmem>>, %arg20: memref<32x32xf32, #tpu.memory_space<vmem>>, %arg21: memref<1x32xf32, #tpu.memory_space<vmem>>, %arg22: memref<3x2x32x16xf32, #tpu.memory_space<vmem>>, %arg23: memref<3x2x1x16xf32, #tpu.memory_space<vmem>>, %arg24: memref<32x32xf32, #tpu.memory_space<vmem>>, %arg25: memref<1x32xf32, #tpu.memory_space<vmem>>, %arg26: memref<1x32xf32, #tpu.memory_space<vmem>>, %arg27: memref<1x32xf32, #tpu.memory_space<vmem>>, %arg28: memref<1x32xf32, #tpu.memory_space<vmem>>, %arg29: memref<1x32xf32, #tpu.memory_space<vmem>>, %arg30: memref<1x32xf32, #tpu.memory_space<vmem>>, %arg31: memref<1x32xf32, #tpu.memory_space<vmem>>, %arg32: memref<32x64xf32, #tpu.memory_space<vmem>>, %arg33: memref<1x64xf32, #tpu.memory_space<vmem>>, %arg34: memref<64x32xf32, #tpu.memory_space<vmem>>, %arg35: memref<1x32xf32, #tpu.memory_space<vmem>>, %arg36: memref<32x16xf32, #tpu.memory_space<vmem>>, %arg37: memref<1x16xf32, #tpu.memory_space<vmem>>, %arg38: memref<16x16xf32, #tpu.memory_space<vmem>>) attributes {dimension_semantics = [#tpu.dimension_semantics<arbitrary>], iteration_bounds = array<i64: 1>, scalar_prefetch = 0 : i64, scratch_operands = 0 : i64, tpu.core_type = #tpu.core_type<tc>, window_params = [{pipeline_mode = #tpu.pipeline_mode<synchronous>, transform_indices = @transform_0, window_bounds = array<i64: 16, 32>}, {pipeline_mode = #tpu.pipeline_mode<synchronous>, transform_indices = @transform_1, window_bounds = array<i64: 16, 32>}, {pipeline_mode = #tpu.pipeline_mode<synchronous>, transform_indices = @transform_2, window_bounds = array<i64: 2, 8, 8>}, {pipeline_mode = #tpu.pipeline_mode<synchronous>, transform_indices = @transform_3, window_bounds = array<i64: 2, 8, 8>}, {pipeline_mode = #tpu.pipeline_mode<synchronous>, transform_indices = @transform_4, window_bounds = array<i64: 2, 8, 8>}, {pipeline_mode = #tpu.pipeline_mode<synchronous>, transform_indices = @transform_5, window_bounds = array<i64: 3, 2, 32, 16>}, {pipeline_mode = #tpu.pipeline_mode<synchronous>, transform_indices = @transform_6, window_bounds = array<i64: 3, 2, 1, 16>}, {pipeline_mode = #tpu.pipeline_mode<synchronous>, transform_indices = @transform_7, window_bounds = array<i64: 32, 32>}, {pipeline_mode = #tpu.pipeline_mode<synchronous>, transform_indices = @transform_8, window_bounds = array<i64: 1, 32>}, {pipeline_mode = #tpu.pipeline_mode<synchronous>, transform_indices = @transform_9, window_bounds = array<i64: 1, 32>}, {pipeline_mode = #tpu.pipeline_mode<synchronous>, transform_indices = @transform_10, window_bounds = array<i64: 1, 32>}, {pipeline_mode = #tpu.pipeline_mode<synchronous>, transform_indices = @transform_11, window_bounds = array<i64: 32, 64>}, {pipeline_mode = #tpu.pipeline_mode<synchronous>, transform_indices = @transform_12, window_bounds = array<i64: 1, 64>}, {pipeline_mode = #tpu.pipeline_mode<synchronous>, transform_indices = @transform_13, window_bounds = array<i64: 64, 32>}, {pipeline_mode = #tpu.pipeline_mode<synchronous>, transform_indices = @transform_14, window_bounds = array<i64: 1, 32>}, {pipeline_mode = #tpu.pipeline_mode<synchronous>, transform_indices = @transform_15, window_bounds = array<i64: 1, 32>}, {pipeline_mode = #tpu.pipeline_mode<synchronous>, transform_indices = @transform_16, window_bounds = array<i64: 1, 32>}, {pipeline_mode = #tpu.pipeline_mode<synchronous>, transform_indices = @transform_17, window_bounds = array<i64: 3, 2, 32, 16>}, {pipeline_mode = #tpu.pipeline_mode<synchronous>, transform_indices = @transform_18, window_bounds = array<i64: 3, 2, 1, 16>}, {pipeline_mode = #tpu.pipeline_mode<synchronous>, transform_indices = @transform_19, window_bounds = array<i64: 32, 32>}, {pipeline_mode = #tpu.pipeline_mode<synchronous>, transform_indices = @transform_20, window_bounds = array<i64: 1, 32>}, {pipeline_mode = #tpu.pipeline_mode<synchronous>, transform_indices = @transform_21, window_bounds = array<i64: 3, 2, 32, 16>}, {pipeline_mode = #tpu.pipeline_mode<synchronous>, transform_indices = @transform_22, window_bounds = array<i64: 3, 2, 1, 16>}, {pipeline_mode = #tpu.pipeline_mode<synchronous>, transform_indices = @transform_23, window_bounds = array<i64: 32, 32>}, {pipeline_mode = #tpu.pipeline_mode<synchronous>, transform_indices = @transform_24, window_bounds = array<i64: 1, 32>}, {pipeline_mode = #tpu.pipeline_mode<synchronous>, transform_indices = @transform_25, window_bounds = array<i64: 1, 32>}, {pipeline_mode = #tpu.pipeline_mode<synchronous>, transform_indices = @transform_26, window_bounds = array<i64: 1, 32>}, {pipeline_mode = #tpu.pipeline_mode<synchronous>, transform_indices = @transform_27, window_bounds = array<i64: 1, 32>}, {pipeline_mode = #tpu.pipeline_mode<synchronous>, transform_indices = @transform_28, window_bounds = array<i64: 1, 32>}, {pipeline_mode = #tpu.pipeline_mode<synchronous>, transform_indices = @transform_29, window_bounds = array<i64: 1, 32>}, {pipeline_mode = #tpu.pipeline_mode<synchronous>, transform_indices = @transform_30, window_bounds = array<i64: 1, 32>}, {pipeline_mode = #tpu.pipeline_mode<synchronous>, transform_indices = @transform_31, window_bounds = array<i64: 32, 64>}, {pipeline_mode = #tpu.pipeline_mode<synchronous>, transform_indices = @transform_32, window_bounds = array<i64: 1, 64>}, {pipeline_mode = #tpu.pipeline_mode<synchronous>, transform_indices = @transform_33, window_bounds = array<i64: 64, 32>}, {pipeline_mode = #tpu.pipeline_mode<synchronous>, transform_indices = @transform_34, window_bounds = array<i64: 1, 32>}, {pipeline_mode = #tpu.pipeline_mode<synchronous>, transform_indices = @transform_35, window_bounds = array<i64: 32, 16>}, {pipeline_mode = #tpu.pipeline_mode<synchronous>, transform_indices = @transform_36, window_bounds = array<i64: 1, 16>}, {pipeline_mode = #tpu.pipeline_mode<synchronous>, transform_indices = @transform_37, window_bounds = array<i64: 16, 16>}]} {
    %c0 = arith.constant 0 : index
    %c0_0 = arith.constant 0 : index
    %0 = vector.load %arg1[%c0, %c0_0] : memref<16x32xf32, #tpu.memory_space<vmem>>, vector<16x32xf32>
    %c0_1 = arith.constant 0 : index
    %c0_2 = arith.constant 0 : index
    %c0_3 = arith.constant 0 : index
    %1 = vector.load %arg3[%c0_1, %c0_2, %c0_3] : memref<2x8x8xf32, #tpu.memory_space<vmem>>, vector<2x8x8xf32>
    %c0_4 = arith.constant 0 : index
    %c0_5 = arith.constant 0 : index
    %2 = vector.load %arg8[%c0_4, %c0_5] : memref<32x32xf32, #tpu.memory_space<vmem>>, vector<32x32xf32>
    %c0_6 = arith.constant 0 : index
    %c0_7 = arith.constant 0 : index
    %c0_8 = arith.constant 0 : index
    %c0_9 = arith.constant 0 : index
    %3 = vector.load %arg6[%c0_6, %c0_7, %c0_8, %c0_9] : memref<3x2x32x16xf32, #tpu.memory_space<vmem>>, vector<1x1x32x16xf32>
    %4 = vector.shape_cast %3 : vector<1x1x32x16xf32> to vector<32x16xf32>
    %c0_10 = arith.constant 0 : index
    %c0_11 = arith.constant 0 : index
    %c0_12 = arith.constant 0 : index
    %c0_13 = arith.constant 0 : index
    %5 = vector.load %arg7[%c0_10, %c0_11, %c0_12, %c0_13] : memref<3x2x1x16xf32, #tpu.memory_space<vmem>>, vector<1x1x1x16xf32>
    %6 = vector.shape_cast %5 : vector<1x1x1x16xf32> to vector<1x16xf32>
    %7 = arith.truncf %0 : vector<16x32xf32> to vector<16x32xbf16>
    %8 = arith.truncf %4 : vector<32x16xf32> to vector<32x16xbf16>
    %cst = arith.constant dense<0.000000e+00> : vector<16x16xf32>
    %9 = tpu.matmul %7, %8, %cst {dimension_numbers = #tpu.dot_dimension_numbers<[1], [0], [0], [1], [0, 0, 1, 1], [], []>} : vector<16x32xbf16>, vector<32x16xbf16>, vector<16x16xf32> -> vector<16x16xf32>
    %10 = vector.broadcast %6 : vector<1x16xf32> to vector<16x16xf32>
    %11 = arith.addf %9, %10 : vector<16x16xf32>
    %12 = vector.shape_cast %11 : vector<16x16xf32> to vector<2x8x16xf32>
    %c1 = arith.constant 1 : index
    %c0_14 = arith.constant 0 : index
    %c0_15 = arith.constant 0 : index
    %c0_16 = arith.constant 0 : index
    %13 = vector.load %arg6[%c1, %c0_14, %c0_15, %c0_16] : memref<3x2x32x16xf32, #tpu.memory_space<vmem>>, vector<1x1x32x16xf32>
    %14 = vector.shape_cast %13 : vector<1x1x32x16xf32> to vector<32x16xf32>
    %c1_17 = arith.constant 1 : index
    %c0_18 = arith.constant 0 : index
    %c0_19 = arith.constant 0 : index
    %c0_20 = arith.constant 0 : index
    %15 = vector.load %arg7[%c1_17, %c0_18, %c0_19, %c0_20] : memref<3x2x1x16xf32, #tpu.memory_space<vmem>>, vector<1x1x1x16xf32>
    %16 = vector.shape_cast %15 : vector<1x1x1x16xf32> to vector<1x16xf32>
    %17 = arith.truncf %0 : vector<16x32xf32> to vector<16x32xbf16>
    %18 = arith.truncf %14 : vector<32x16xf32> to vector<32x16xbf16>
    %cst_21 = arith.constant dense<0.000000e+00> : vector<16x16xf32>
    %19 = tpu.matmul %17, %18, %cst_21 {dimension_numbers = #tpu.dot_dimension_numbers<[1], [0], [0], [1], [0, 0, 1, 1], [], []>} : vector<16x32xbf16>, vector<32x16xbf16>, vector<16x16xf32> -> vector<16x16xf32>
    %20 = vector.broadcast %16 : vector<1x16xf32> to vector<16x16xf32>
    %21 = arith.addf %19, %20 : vector<16x16xf32>
    %22 = vector.shape_cast %21 : vector<16x16xf32> to vector<2x8x16xf32>
    %c2 = arith.constant 2 : index
    %c0_22 = arith.constant 0 : index
    %c0_23 = arith.constant 0 : index
    %c0_24 = arith.constant 0 : index
    %23 = vector.load %arg6[%c2, %c0_22, %c0_23, %c0_24] : memref<3x2x32x16xf32, #tpu.memory_space<vmem>>, vector<1x1x32x16xf32>
    %24 = vector.shape_cast %23 : vector<1x1x32x16xf32> to vector<32x16xf32>
    %c2_25 = arith.constant 2 : index
    %c0_26 = arith.constant 0 : index
    %c0_27 = arith.constant 0 : index
    %c0_28 = arith.constant 0 : index
    %25 = vector.load %arg7[%c2_25, %c0_26, %c0_27, %c0_28] : memref<3x2x1x16xf32, #tpu.memory_space<vmem>>, vector<1x1x1x16xf32>
    %26 = vector.shape_cast %25 : vector<1x1x1x16xf32> to vector<1x16xf32>
    %27 = arith.truncf %0 : vector<16x32xf32> to vector<16x32xbf16>
    %28 = arith.truncf %24 : vector<32x16xf32> to vector<32x16xbf16>
    %cst_29 = arith.constant dense<0.000000e+00> : vector<16x16xf32>
    %29 = tpu.matmul %27, %28, %cst_29 {dimension_numbers = #tpu.dot_dimension_numbers<[1], [0], [0], [1], [0, 0, 1, 1], [], []>} : vector<16x32xbf16>, vector<32x16xbf16>, vector<16x16xf32> -> vector<16x16xf32>
    %30 = vector.broadcast %26 : vector<1x16xf32> to vector<16x16xf32>
    %31 = arith.addf %29, %30 : vector<16x16xf32>
    %32 = vector.shape_cast %31 : vector<16x16xf32> to vector<2x8x16xf32>
    %33 = arith.truncf %12 : vector<2x8x16xf32> to vector<2x8x16xbf16>
    %34 = arith.truncf %22 : vector<2x8x16xf32> to vector<2x8x16xbf16>
    "tpu.trace_start"() <{level = 10 : i32, message = "bqd,bkd->bqk"}> : () -> ()
    %cst_30 = arith.constant dense<0.000000e+00> : vector<2x8x8xf32>
    %35 = tpu.matmul %33, %34, %cst_30 {dimension_numbers = #tpu.dot_dimension_numbers<[2], [2], [1], [1], [0, 0, 0, 1, 1, 1], [0], [0]>} : vector<2x8x16xbf16>, vector<2x8x16xbf16>, vector<2x8x8xf32> -> vector<2x8x8xf32>
    "tpu.trace_stop"() : () -> ()
    %36 = arith.addf %35, %1 : vector<2x8x8xf32>
    %cst_31 = arith.constant dense<0xFF800000> : vector<2x8xf32>
    %37 = vector.multi_reduction <maximumf>, %36, %cst_31 [2] : vector<2x8x8xf32> to vector<2x8xf32>
    %38 = vector.shape_cast %37 : vector<2x8xf32> to vector<2x8x1xf32>
    %39 = vector.broadcast %38 : vector<2x8x1xf32> to vector<2x8x8xf32>
    %40 = arith.subf %36, %39 : vector<2x8x8xf32>
    %41 = math.exp %40 : vector<2x8x8xf32>
    %cst_32 = arith.constant dense<0.000000e+00> : vector<2x8xf32>
    %42 = vector.multi_reduction <add>, %41, %cst_32 [2] : vector<2x8x8xf32> to vector<2x8xf32>
    %43 = vector.shape_cast %42 : vector<2x8xf32> to vector<2x8x1xf32>
    %44 = tpu.reciprocal %43 {approx = true} : vector<2x8x1xf32> -> vector<2x8x1xf32>
    %45 = vector.broadcast %44 : vector<2x8x1xf32> to vector<2x8x8xf32>
    %46 = arith.mulf %41, %45 : vector<2x8x8xf32>
    %47 = arith.truncf %46 : vector<2x8x8xf32> to vector<2x8x8xbf16>
    %48 = arith.truncf %32 : vector<2x8x16xf32> to vector<2x8x16xbf16>
    "tpu.trace_start"() <{level = 10 : i32, message = "bqk,bkd->bqd"}> : () -> ()
    %cst_33 = arith.constant dense<0.000000e+00> : vector<2x8x16xf32>
    %49 = tpu.matmul %47, %48, %cst_33 {dimension_numbers = #tpu.dot_dimension_numbers<[2], [1], [1], [2], [0, 0, 0, 1, 1, 2], [0], [0]>} : vector<2x8x8xbf16>, vector<2x8x16xbf16>, vector<2x8x16xf32> -> vector<2x8x16xf32>
    "tpu.trace_stop"() : () -> ()
    %50 = vector.shape_cast %49 : vector<2x8x16xf32> to vector<16x16xf32>
    %51 = vector.extract_strided_slice %2 {offsets = [0, 0], sizes = [16, 32], strides = [1, 1]} : vector<32x32xf32> to vector<16x32xf32>
    %52 = arith.truncf %50 : vector<16x16xf32> to vector<16x16xbf16>
    %53 = arith.truncf %51 : vector<16x32xf32> to vector<16x32xbf16>
    %cst_34 = arith.constant dense<0.000000e+00> : vector<16x32xf32>
    %54 = tpu.matmul %52, %53, %cst_34 {dimension_numbers = #tpu.dot_dimension_numbers<[1], [0], [0], [1], [0, 0, 1, 1], [], []>} : vector<16x16xbf16>, vector<16x32xbf16>, vector<16x32xf32> -> vector<16x32xf32>
    %c0_35 = arith.constant 0 : index
    %c1_36 = arith.constant 1 : index
    %c0_37 = arith.constant 0 : index
    %c0_38 = arith.constant 0 : index
    %55 = vector.load %arg6[%c0_35, %c1_36, %c0_37, %c0_38] : memref<3x2x32x16xf32, #tpu.memory_space<vmem>>, vector<1x1x32x16xf32>
    %56 = vector.shape_cast %55 : vector<1x1x32x16xf32> to vector<32x16xf32>
    %c0_39 = arith.constant 0 : index
    %c1_40 = arith.constant 1 : index
    %c0_41 = arith.constant 0 : index
    %c0_42 = arith.constant 0 : index
    %57 = vector.load %arg7[%c0_39, %c1_40, %c0_41, %c0_42] : memref<3x2x1x16xf32, #tpu.memory_space<vmem>>, vector<1x1x1x16xf32>
    %58 = vector.shape_cast %57 : vector<1x1x1x16xf32> to vector<1x16xf32>
    %59 = arith.truncf %0 : vector<16x32xf32> to vector<16x32xbf16>
    %60 = arith.truncf %56 : vector<32x16xf32> to vector<32x16xbf16>
    %cst_43 = arith.constant dense<0.000000e+00> : vector<16x16xf32>
    %61 = tpu.matmul %59, %60, %cst_43 {dimension_numbers = #tpu.dot_dimension_numbers<[1], [0], [0], [1], [0, 0, 1, 1], [], []>} : vector<16x32xbf16>, vector<32x16xbf16>, vector<16x16xf32> -> vector<16x16xf32>
    %62 = vector.broadcast %58 : vector<1x16xf32> to vector<16x16xf32>
    %63 = arith.addf %61, %62 : vector<16x16xf32>
    %64 = vector.shape_cast %63 : vector<16x16xf32> to vector<2x8x16xf32>
    %c1_44 = arith.constant 1 : index
    %c1_45 = arith.constant 1 : index
    %c0_46 = arith.constant 0 : index
    %c0_47 = arith.constant 0 : index
    %65 = vector.load %arg6[%c1_44, %c1_45, %c0_46, %c0_47] : memref<3x2x32x16xf32, #tpu.memory_space<vmem>>, vector<1x1x32x16xf32>
    %66 = vector.shape_cast %65 : vector<1x1x32x16xf32> to vector<32x16xf32>
    %c1_48 = arith.constant 1 : index
    %c1_49 = arith.constant 1 : index
    %c0_50 = arith.constant 0 : index
    %c0_51 = arith.constant 0 : index
    %67 = vector.load %arg7[%c1_48, %c1_49, %c0_50, %c0_51] : memref<3x2x1x16xf32, #tpu.memory_space<vmem>>, vector<1x1x1x16xf32>
    %68 = vector.shape_cast %67 : vector<1x1x1x16xf32> to vector<1x16xf32>
    %69 = arith.truncf %0 : vector<16x32xf32> to vector<16x32xbf16>
    %70 = arith.truncf %66 : vector<32x16xf32> to vector<32x16xbf16>
    %cst_52 = arith.constant dense<0.000000e+00> : vector<16x16xf32>
    %71 = tpu.matmul %69, %70, %cst_52 {dimension_numbers = #tpu.dot_dimension_numbers<[1], [0], [0], [1], [0, 0, 1, 1], [], []>} : vector<16x32xbf16>, vector<32x16xbf16>, vector<16x16xf32> -> vector<16x16xf32>
    %72 = vector.broadcast %68 : vector<1x16xf32> to vector<16x16xf32>
    %73 = arith.addf %71, %72 : vector<16x16xf32>
    %74 = vector.shape_cast %73 : vector<16x16xf32> to vector<2x8x16xf32>
    %c2_53 = arith.constant 2 : index
    %c1_54 = arith.constant 1 : index
    %c0_55 = arith.constant 0 : index
    %c0_56 = arith.constant 0 : index
    %75 = vector.load %arg6[%c2_53, %c1_54, %c0_55, %c0_56] : memref<3x2x32x16xf32, #tpu.memory_space<vmem>>, vector<1x1x32x16xf32>
    %76 = vector.shape_cast %75 : vector<1x1x32x16xf32> to vector<32x16xf32>
    %c2_57 = arith.constant 2 : index
    %c1_58 = arith.constant 1 : index
    %c0_59 = arith.constant 0 : index
    %c0_60 = arith.constant 0 : index
    %77 = vector.load %arg7[%c2_57, %c1_58, %c0_59, %c0_60] : memref<3x2x1x16xf32, #tpu.memory_space<vmem>>, vector<1x1x1x16xf32>
    %78 = vector.shape_cast %77 : vector<1x1x1x16xf32> to vector<1x16xf32>
    %79 = arith.truncf %0 : vector<16x32xf32> to vector<16x32xbf16>
    %80 = arith.truncf %76 : vector<32x16xf32> to vector<32x16xbf16>
    %cst_61 = arith.constant dense<0.000000e+00> : vector<16x16xf32>
    %81 = tpu.matmul %79, %80, %cst_61 {dimension_numbers = #tpu.dot_dimension_numbers<[1], [0], [0], [1], [0, 0, 1, 1], [], []>} : vector<16x32xbf16>, vector<32x16xbf16>, vector<16x16xf32> -> vector<16x16xf32>
    %82 = vector.broadcast %78 : vector<1x16xf32> to vector<16x16xf32>
    %83 = arith.addf %81, %82 : vector<16x16xf32>
    %84 = vector.shape_cast %83 : vector<16x16xf32> to vector<2x8x16xf32>
    %85 = arith.truncf %64 : vector<2x8x16xf32> to vector<2x8x16xbf16>
    %86 = arith.truncf %74 : vector<2x8x16xf32> to vector<2x8x16xbf16>
    "tpu.trace_start"() <{level = 10 : i32, message = "bqd,bkd->bqk"}> : () -> ()
    %cst_62 = arith.constant dense<0.000000e+00> : vector<2x8x8xf32>
    %87 = tpu.matmul %85, %86, %cst_62 {dimension_numbers = #tpu.dot_dimension_numbers<[2], [2], [1], [1], [0, 0, 0, 1, 1, 1], [0], [0]>} : vector<2x8x16xbf16>, vector<2x8x16xbf16>, vector<2x8x8xf32> -> vector<2x8x8xf32>
    "tpu.trace_stop"() : () -> ()
    %88 = arith.addf %87, %1 : vector<2x8x8xf32>
    %cst_63 = arith.constant dense<0xFF800000> : vector<2x8xf32>
    %89 = vector.multi_reduction <maximumf>, %88, %cst_63 [2] : vector<2x8x8xf32> to vector<2x8xf32>
    %90 = vector.shape_cast %89 : vector<2x8xf32> to vector<2x8x1xf32>
    %91 = vector.broadcast %90 : vector<2x8x1xf32> to vector<2x8x8xf32>
    %92 = arith.subf %88, %91 : vector<2x8x8xf32>
    %93 = math.exp %92 : vector<2x8x8xf32>
    %cst_64 = arith.constant dense<0.000000e+00> : vector<2x8xf32>
    %94 = vector.multi_reduction <add>, %93, %cst_64 [2] : vector<2x8x8xf32> to vector<2x8xf32>
    %95 = vector.shape_cast %94 : vector<2x8xf32> to vector<2x8x1xf32>
    %96 = tpu.reciprocal %95 {approx = true} : vector<2x8x1xf32> -> vector<2x8x1xf32>
    %97 = vector.broadcast %96 : vector<2x8x1xf32> to vector<2x8x8xf32>
    %98 = arith.mulf %93, %97 : vector<2x8x8xf32>
    %99 = arith.truncf %98 : vector<2x8x8xf32> to vector<2x8x8xbf16>
    %100 = arith.truncf %84 : vector<2x8x16xf32> to vector<2x8x16xbf16>
    "tpu.trace_start"() <{level = 10 : i32, message = "bqk,bkd->bqd"}> : () -> ()
    %cst_65 = arith.constant dense<0.000000e+00> : vector<2x8x16xf32>
    %101 = tpu.matmul %99, %100, %cst_65 {dimension_numbers = #tpu.dot_dimension_numbers<[2], [1], [1], [2], [0, 0, 0, 1, 1, 2], [0], [0]>} : vector<2x8x8xbf16>, vector<2x8x16xbf16>, vector<2x8x16xf32> -> vector<2x8x16xf32>
    "tpu.trace_stop"() : () -> ()
    %102 = vector.shape_cast %101 : vector<2x8x16xf32> to vector<16x16xf32>
    %103 = vector.extract_strided_slice %2 {offsets = [16, 0], sizes = [16, 32], strides = [1, 1]} : vector<32x32xf32> to vector<16x32xf32>
    %104 = arith.truncf %102 : vector<16x16xf32> to vector<16x16xbf16>
    %105 = arith.truncf %103 : vector<16x32xf32> to vector<16x32xbf16>
    %cst_66 = arith.constant dense<0.000000e+00> : vector<16x32xf32>
    %106 = tpu.matmul %104, %105, %cst_66 {dimension_numbers = #tpu.dot_dimension_numbers<[1], [0], [0], [1], [0, 0, 1, 1], [], []>} : vector<16x16xbf16>, vector<16x32xbf16>, vector<16x32xf32> -> vector<16x32xf32>
    %107 = arith.addf %54, %106 : vector<16x32xf32>
    %c0_67 = arith.constant 0 : index
    %c0_68 = arith.constant 0 : index
    %108 = vector.load %arg9[%c0_67, %c0_68] : memref<1x32xf32, #tpu.memory_space<vmem>>, vector<1x32xf32>
    %109 = vector.broadcast %108 : vector<1x32xf32> to vector<16x32xf32>
    %110 = arith.addf %107, %109 : vector<16x32xf32>
    %111 = arith.addf %0, %110 : vector<16x32xf32>
    %cst_69 = arith.constant dense<0.000000e+00> : vector<16xf32>
    %112 = vector.multi_reduction <add>, %111, %cst_69 [1] : vector<16x32xf32> to vector<16xf32>
    %113 = vector.shape_cast %112 : vector<16xf32> to vector<16x1xf32>
    %cst_70 = arith.constant 3.200000e+01 : f32
    %114 = vector.broadcast %cst_70 : f32 to vector<16x1xf32>
    %115 = arith.divf %113, %114 : vector<16x1xf32>
    %116 = vector.broadcast %115 : vector<16x1xf32> to vector<16x32xf32>
    %117 = arith.subf %111, %116 : vector<16x32xf32>
    %118 = arith.mulf %117, %117 : vector<16x32xf32>
    %cst_71 = arith.constant dense<0.000000e+00> : vector<16xf32>
    %119 = vector.multi_reduction <add>, %118, %cst_71 [1] : vector<16x32xf32> to vector<16xf32>
    %120 = vector.shape_cast %119 : vector<16xf32> to vector<16x1xf32>
    %cst_72 = arith.constant 3.200000e+01 : f32
    %121 = vector.broadcast %cst_72 : f32 to vector<16x1xf32>
    %122 = arith.divf %120, %121 : vector<16x1xf32>
    %123 = vector.broadcast %115 : vector<16x1xf32> to vector<16x32xf32>
    %124 = arith.subf %111, %123 : vector<16x32xf32>
    %cst_73 = arith.constant 9.99999974E-6 : f32
    %125 = vector.broadcast %cst_73 : f32 to vector<16x1xf32>
    %126 = arith.addf %122, %125 : vector<16x1xf32>
    %127 = math.rsqrt %126 : vector<16x1xf32>
    %128 = vector.broadcast %127 : vector<16x1xf32> to vector<16x32xf32>
    %129 = arith.mulf %124, %128 : vector<16x32xf32>
    %c0_74 = arith.constant 0 : index
    %c0_75 = arith.constant 0 : index
    %130 = vector.load %arg10[%c0_74, %c0_75] : memref<1x32xf32, #tpu.memory_space<vmem>>, vector<1x32xf32>
    %131 = vector.broadcast %130 : vector<1x32xf32> to vector<16x32xf32>
    %132 = arith.mulf %129, %131 : vector<16x32xf32>
    %c0_76 = arith.constant 0 : index
    %c0_77 = arith.constant 0 : index
    %133 = vector.load %arg11[%c0_76, %c0_77] : memref<1x32xf32, #tpu.memory_space<vmem>>, vector<1x32xf32>
    %134 = vector.broadcast %133 : vector<1x32xf32> to vector<16x32xf32>
    %135 = arith.addf %132, %134 : vector<16x32xf32>
    %c0_78 = arith.constant 0 : index
    %c0_79 = arith.constant 0 : index
    %136 = vector.load %arg12[%c0_78, %c0_79] : memref<32x64xf32, #tpu.memory_space<vmem>>, vector<32x64xf32>
    %c0_80 = arith.constant 0 : index
    %c0_81 = arith.constant 0 : index
    %137 = vector.load %arg13[%c0_80, %c0_81] : memref<1x64xf32, #tpu.memory_space<vmem>>, vector<1x64xf32>
    %138 = arith.truncf %135 : vector<16x32xf32> to vector<16x32xbf16>
    %139 = arith.truncf %136 : vector<32x64xf32> to vector<32x64xbf16>
    %cst_82 = arith.constant dense<0.000000e+00> : vector<16x64xf32>
    %140 = tpu.matmul %138, %139, %cst_82 {dimension_numbers = #tpu.dot_dimension_numbers<[1], [0], [0], [1], [0, 0, 1, 1], [], []>} : vector<16x32xbf16>, vector<32x64xbf16>, vector<16x64xf32> -> vector<16x64xf32>
    %141 = vector.broadcast %137 : vector<1x64xf32> to vector<16x64xf32>
    %142 = arith.addf %140, %141 : vector<16x64xf32>
    %cst_83 = arith.constant 0.000000e+00 : f32
    %143 = vector.broadcast %cst_83 : f32 to vector<16x64xf32>
    %144 = arith.maximumf %142, %143 : vector<16x64xf32>
    %c0_84 = arith.constant 0 : index
    %c0_85 = arith.constant 0 : index
    %145 = vector.load %arg14[%c0_84, %c0_85] : memref<64x32xf32, #tpu.memory_space<vmem>>, vector<64x32xf32>
    %c0_86 = arith.constant 0 : index
    %c0_87 = arith.constant 0 : index
    %146 = vector.load %arg15[%c0_86, %c0_87] : memref<1x32xf32, #tpu.memory_space<vmem>>, vector<1x32xf32>
    %147 = arith.truncf %144 : vector<16x64xf32> to vector<16x64xbf16>
    %148 = arith.truncf %145 : vector<64x32xf32> to vector<64x32xbf16>
    %cst_88 = arith.constant dense<0.000000e+00> : vector<16x32xf32>
    %149 = tpu.matmul %147, %148, %cst_88 {dimension_numbers = #tpu.dot_dimension_numbers<[1], [0], [0], [1], [0, 0, 1, 1], [], []>} : vector<16x64xbf16>, vector<64x32xbf16>, vector<16x32xf32> -> vector<16x32xf32>
    %150 = vector.broadcast %146 : vector<1x32xf32> to vector<16x32xf32>
    %151 = arith.addf %149, %150 : vector<16x32xf32>
    %152 = arith.addf %135, %151 : vector<16x32xf32>
    %cst_89 = arith.constant dense<0.000000e+00> : vector<16xf32>
    %153 = vector.multi_reduction <add>, %152, %cst_89 [1] : vector<16x32xf32> to vector<16xf32>
    %154 = vector.shape_cast %153 : vector<16xf32> to vector<16x1xf32>
    %cst_90 = arith.constant 3.200000e+01 : f32
    %155 = vector.broadcast %cst_90 : f32 to vector<16x1xf32>
    %156 = arith.divf %154, %155 : vector<16x1xf32>
    %157 = vector.broadcast %156 : vector<16x1xf32> to vector<16x32xf32>
    %158 = arith.subf %152, %157 : vector<16x32xf32>
    %159 = arith.mulf %158, %158 : vector<16x32xf32>
    %cst_91 = arith.constant dense<0.000000e+00> : vector<16xf32>
    %160 = vector.multi_reduction <add>, %159, %cst_91 [1] : vector<16x32xf32> to vector<16xf32>
    %161 = vector.shape_cast %160 : vector<16xf32> to vector<16x1xf32>
    %cst_92 = arith.constant 3.200000e+01 : f32
    %162 = vector.broadcast %cst_92 : f32 to vector<16x1xf32>
    %163 = arith.divf %161, %162 : vector<16x1xf32>
    %164 = vector.broadcast %156 : vector<16x1xf32> to vector<16x32xf32>
    %165 = arith.subf %152, %164 : vector<16x32xf32>
    %cst_93 = arith.constant 9.99999974E-6 : f32
    %166 = vector.broadcast %cst_93 : f32 to vector<16x1xf32>
    %167 = arith.addf %163, %166 : vector<16x1xf32>
    %168 = math.rsqrt %167 : vector<16x1xf32>
    %169 = vector.broadcast %168 : vector<16x1xf32> to vector<16x32xf32>
    %170 = arith.mulf %165, %169 : vector<16x32xf32>
    %c0_94 = arith.constant 0 : index
    %c0_95 = arith.constant 0 : index
    %171 = vector.load %arg16[%c0_94, %c0_95] : memref<1x32xf32, #tpu.memory_space<vmem>>, vector<1x32xf32>
    %172 = vector.broadcast %171 : vector<1x32xf32> to vector<16x32xf32>
    %173 = arith.mulf %170, %172 : vector<16x32xf32>
    %c0_96 = arith.constant 0 : index
    %c0_97 = arith.constant 0 : index
    %174 = vector.load %arg17[%c0_96, %c0_97] : memref<1x32xf32, #tpu.memory_space<vmem>>, vector<1x32xf32>
    %175 = vector.broadcast %174 : vector<1x32xf32> to vector<16x32xf32>
    %176 = arith.addf %173, %175 : vector<16x32xf32>
    %c0_98 = arith.constant 0 : index
    %c0_99 = arith.constant 0 : index
    %177 = vector.load %arg2[%c0_98, %c0_99] : memref<16x32xf32, #tpu.memory_space<vmem>>, vector<16x32xf32>
    %c0_100 = arith.constant 0 : index
    %c0_101 = arith.constant 0 : index
    %c0_102 = arith.constant 0 : index
    %178 = vector.load %arg4[%c0_100, %c0_101, %c0_102] : memref<2x8x8xf32, #tpu.memory_space<vmem>>, vector<2x8x8xf32>
    %c0_103 = arith.constant 0 : index
    %c0_104 = arith.constant 0 : index
    %179 = vector.load %arg20[%c0_103, %c0_104] : memref<32x32xf32, #tpu.memory_space<vmem>>, vector<32x32xf32>
    %c0_105 = arith.constant 0 : index
    %c0_106 = arith.constant 0 : index
    %c0_107 = arith.constant 0 : index
    %c0_108 = arith.constant 0 : index
    %180 = vector.load %arg18[%c0_105, %c0_106, %c0_107, %c0_108] : memref<3x2x32x16xf32, #tpu.memory_space<vmem>>, vector<1x1x32x16xf32>
    %181 = vector.shape_cast %180 : vector<1x1x32x16xf32> to vector<32x16xf32>
    %c0_109 = arith.constant 0 : index
    %c0_110 = arith.constant 0 : index
    %c0_111 = arith.constant 0 : index
    %c0_112 = arith.constant 0 : index
    %182 = vector.load %arg19[%c0_109, %c0_110, %c0_111, %c0_112] : memref<3x2x1x16xf32, #tpu.memory_space<vmem>>, vector<1x1x1x16xf32>
    %183 = vector.shape_cast %182 : vector<1x1x1x16xf32> to vector<1x16xf32>
    %184 = arith.truncf %177 : vector<16x32xf32> to vector<16x32xbf16>
    %185 = arith.truncf %181 : vector<32x16xf32> to vector<32x16xbf16>
    %cst_113 = arith.constant dense<0.000000e+00> : vector<16x16xf32>
    %186 = tpu.matmul %184, %185, %cst_113 {dimension_numbers = #tpu.dot_dimension_numbers<[1], [0], [0], [1], [0, 0, 1, 1], [], []>} : vector<16x32xbf16>, vector<32x16xbf16>, vector<16x16xf32> -> vector<16x16xf32>
    %187 = vector.broadcast %183 : vector<1x16xf32> to vector<16x16xf32>
    %188 = arith.addf %186, %187 : vector<16x16xf32>
    %189 = vector.shape_cast %188 : vector<16x16xf32> to vector<2x8x16xf32>
    %c1_114 = arith.constant 1 : index
    %c0_115 = arith.constant 0 : index
    %c0_116 = arith.constant 0 : index
    %c0_117 = arith.constant 0 : index
    %190 = vector.load %arg18[%c1_114, %c0_115, %c0_116, %c0_117] : memref<3x2x32x16xf32, #tpu.memory_space<vmem>>, vector<1x1x32x16xf32>
    %191 = vector.shape_cast %190 : vector<1x1x32x16xf32> to vector<32x16xf32>
    %c1_118 = arith.constant 1 : index
    %c0_119 = arith.constant 0 : index
    %c0_120 = arith.constant 0 : index
    %c0_121 = arith.constant 0 : index
    %192 = vector.load %arg19[%c1_118, %c0_119, %c0_120, %c0_121] : memref<3x2x1x16xf32, #tpu.memory_space<vmem>>, vector<1x1x1x16xf32>
    %193 = vector.shape_cast %192 : vector<1x1x1x16xf32> to vector<1x16xf32>
    %194 = arith.truncf %177 : vector<16x32xf32> to vector<16x32xbf16>
    %195 = arith.truncf %191 : vector<32x16xf32> to vector<32x16xbf16>
    %cst_122 = arith.constant dense<0.000000e+00> : vector<16x16xf32>
    %196 = tpu.matmul %194, %195, %cst_122 {dimension_numbers = #tpu.dot_dimension_numbers<[1], [0], [0], [1], [0, 0, 1, 1], [], []>} : vector<16x32xbf16>, vector<32x16xbf16>, vector<16x16xf32> -> vector<16x16xf32>
    %197 = vector.broadcast %193 : vector<1x16xf32> to vector<16x16xf32>
    %198 = arith.addf %196, %197 : vector<16x16xf32>
    %199 = vector.shape_cast %198 : vector<16x16xf32> to vector<2x8x16xf32>
    %c2_123 = arith.constant 2 : index
    %c0_124 = arith.constant 0 : index
    %c0_125 = arith.constant 0 : index
    %c0_126 = arith.constant 0 : index
    %200 = vector.load %arg18[%c2_123, %c0_124, %c0_125, %c0_126] : memref<3x2x32x16xf32, #tpu.memory_space<vmem>>, vector<1x1x32x16xf32>
    %201 = vector.shape_cast %200 : vector<1x1x32x16xf32> to vector<32x16xf32>
    %c2_127 = arith.constant 2 : index
    %c0_128 = arith.constant 0 : index
    %c0_129 = arith.constant 0 : index
    %c0_130 = arith.constant 0 : index
    %202 = vector.load %arg19[%c2_127, %c0_128, %c0_129, %c0_130] : memref<3x2x1x16xf32, #tpu.memory_space<vmem>>, vector<1x1x1x16xf32>
    %203 = vector.shape_cast %202 : vector<1x1x1x16xf32> to vector<1x16xf32>
    %204 = arith.truncf %177 : vector<16x32xf32> to vector<16x32xbf16>
    %205 = arith.truncf %201 : vector<32x16xf32> to vector<32x16xbf16>
    %cst_131 = arith.constant dense<0.000000e+00> : vector<16x16xf32>
    %206 = tpu.matmul %204, %205, %cst_131 {dimension_numbers = #tpu.dot_dimension_numbers<[1], [0], [0], [1], [0, 0, 1, 1], [], []>} : vector<16x32xbf16>, vector<32x16xbf16>, vector<16x16xf32> -> vector<16x16xf32>
    %207 = vector.broadcast %203 : vector<1x16xf32> to vector<16x16xf32>
    %208 = arith.addf %206, %207 : vector<16x16xf32>
    %209 = vector.shape_cast %208 : vector<16x16xf32> to vector<2x8x16xf32>
    %210 = arith.truncf %189 : vector<2x8x16xf32> to vector<2x8x16xbf16>
    %211 = arith.truncf %199 : vector<2x8x16xf32> to vector<2x8x16xbf16>
    "tpu.trace_start"() <{level = 10 : i32, message = "bqd,bkd->bqk"}> : () -> ()
    %cst_132 = arith.constant dense<0.000000e+00> : vector<2x8x8xf32>
    %212 = tpu.matmul %210, %211, %cst_132 {dimension_numbers = #tpu.dot_dimension_numbers<[2], [2], [1], [1], [0, 0, 0, 1, 1, 1], [0], [0]>} : vector<2x8x16xbf16>, vector<2x8x16xbf16>, vector<2x8x8xf32> -> vector<2x8x8xf32>
    "tpu.trace_stop"() : () -> ()
    %213 = arith.addf %212, %178 : vector<2x8x8xf32>
    %cst_133 = arith.constant dense<0xFF800000> : vector<2x8xf32>
    %214 = vector.multi_reduction <maximumf>, %213, %cst_133 [2] : vector<2x8x8xf32> to vector<2x8xf32>
    %215 = vector.shape_cast %214 : vector<2x8xf32> to vector<2x8x1xf32>
    %216 = vector.broadcast %215 : vector<2x8x1xf32> to vector<2x8x8xf32>
    %217 = arith.subf %213, %216 : vector<2x8x8xf32>
    %218 = math.exp %217 : vector<2x8x8xf32>
    %cst_134 = arith.constant dense<0.000000e+00> : vector<2x8xf32>
    %219 = vector.multi_reduction <add>, %218, %cst_134 [2] : vector<2x8x8xf32> to vector<2x8xf32>
    %220 = vector.shape_cast %219 : vector<2x8xf32> to vector<2x8x1xf32>
    %221 = tpu.reciprocal %220 {approx = true} : vector<2x8x1xf32> -> vector<2x8x1xf32>
    %222 = vector.broadcast %221 : vector<2x8x1xf32> to vector<2x8x8xf32>
    %223 = arith.mulf %218, %222 : vector<2x8x8xf32>
    %224 = arith.truncf %223 : vector<2x8x8xf32> to vector<2x8x8xbf16>
    %225 = arith.truncf %209 : vector<2x8x16xf32> to vector<2x8x16xbf16>
    "tpu.trace_start"() <{level = 10 : i32, message = "bqk,bkd->bqd"}> : () -> ()
    %cst_135 = arith.constant dense<0.000000e+00> : vector<2x8x16xf32>
    %226 = tpu.matmul %224, %225, %cst_135 {dimension_numbers = #tpu.dot_dimension_numbers<[2], [1], [1], [2], [0, 0, 0, 1, 1, 2], [0], [0]>} : vector<2x8x8xbf16>, vector<2x8x16xbf16>, vector<2x8x16xf32> -> vector<2x8x16xf32>
    "tpu.trace_stop"() : () -> ()
    %227 = vector.shape_cast %226 : vector<2x8x16xf32> to vector<16x16xf32>
    %228 = vector.extract_strided_slice %179 {offsets = [0, 0], sizes = [16, 32], strides = [1, 1]} : vector<32x32xf32> to vector<16x32xf32>
    %229 = arith.truncf %227 : vector<16x16xf32> to vector<16x16xbf16>
    %230 = arith.truncf %228 : vector<16x32xf32> to vector<16x32xbf16>
    %cst_136 = arith.constant dense<0.000000e+00> : vector<16x32xf32>
    %231 = tpu.matmul %229, %230, %cst_136 {dimension_numbers = #tpu.dot_dimension_numbers<[1], [0], [0], [1], [0, 0, 1, 1], [], []>} : vector<16x16xbf16>, vector<16x32xbf16>, vector<16x32xf32> -> vector<16x32xf32>
    %c0_137 = arith.constant 0 : index
    %c1_138 = arith.constant 1 : index
    %c0_139 = arith.constant 0 : index
    %c0_140 = arith.constant 0 : index
    %232 = vector.load %arg18[%c0_137, %c1_138, %c0_139, %c0_140] : memref<3x2x32x16xf32, #tpu.memory_space<vmem>>, vector<1x1x32x16xf32>
    %233 = vector.shape_cast %232 : vector<1x1x32x16xf32> to vector<32x16xf32>
    %c0_141 = arith.constant 0 : index
    %c1_142 = arith.constant 1 : index
    %c0_143 = arith.constant 0 : index
    %c0_144 = arith.constant 0 : index
    %234 = vector.load %arg19[%c0_141, %c1_142, %c0_143, %c0_144] : memref<3x2x1x16xf32, #tpu.memory_space<vmem>>, vector<1x1x1x16xf32>
    %235 = vector.shape_cast %234 : vector<1x1x1x16xf32> to vector<1x16xf32>
    %236 = arith.truncf %177 : vector<16x32xf32> to vector<16x32xbf16>
    %237 = arith.truncf %233 : vector<32x16xf32> to vector<32x16xbf16>
    %cst_145 = arith.constant dense<0.000000e+00> : vector<16x16xf32>
    %238 = tpu.matmul %236, %237, %cst_145 {dimension_numbers = #tpu.dot_dimension_numbers<[1], [0], [0], [1], [0, 0, 1, 1], [], []>} : vector<16x32xbf16>, vector<32x16xbf16>, vector<16x16xf32> -> vector<16x16xf32>
    %239 = vector.broadcast %235 : vector<1x16xf32> to vector<16x16xf32>
    %240 = arith.addf %238, %239 : vector<16x16xf32>
    %241 = vector.shape_cast %240 : vector<16x16xf32> to vector<2x8x16xf32>
    %c1_146 = arith.constant 1 : index
    %c1_147 = arith.constant 1 : index
    %c0_148 = arith.constant 0 : index
    %c0_149 = arith.constant 0 : index
    %242 = vector.load %arg18[%c1_146, %c1_147, %c0_148, %c0_149] : memref<3x2x32x16xf32, #tpu.memory_space<vmem>>, vector<1x1x32x16xf32>
    %243 = vector.shape_cast %242 : vector<1x1x32x16xf32> to vector<32x16xf32>
    %c1_150 = arith.constant 1 : index
    %c1_151 = arith.constant 1 : index
    %c0_152 = arith.constant 0 : index
    %c0_153 = arith.constant 0 : index
    %244 = vector.load %arg19[%c1_150, %c1_151, %c0_152, %c0_153] : memref<3x2x1x16xf32, #tpu.memory_space<vmem>>, vector<1x1x1x16xf32>
    %245 = vector.shape_cast %244 : vector<1x1x1x16xf32> to vector<1x16xf32>
    %246 = arith.truncf %177 : vector<16x32xf32> to vector<16x32xbf16>
    %247 = arith.truncf %243 : vector<32x16xf32> to vector<32x16xbf16>
    %cst_154 = arith.constant dense<0.000000e+00> : vector<16x16xf32>
    %248 = tpu.matmul %246, %247, %cst_154 {dimension_numbers = #tpu.dot_dimension_numbers<[1], [0], [0], [1], [0, 0, 1, 1], [], []>} : vector<16x32xbf16>, vector<32x16xbf16>, vector<16x16xf32> -> vector<16x16xf32>
    %249 = vector.broadcast %245 : vector<1x16xf32> to vector<16x16xf32>
    %250 = arith.addf %248, %249 : vector<16x16xf32>
    %251 = vector.shape_cast %250 : vector<16x16xf32> to vector<2x8x16xf32>
    %c2_155 = arith.constant 2 : index
    %c1_156 = arith.constant 1 : index
    %c0_157 = arith.constant 0 : index
    %c0_158 = arith.constant 0 : index
    %252 = vector.load %arg18[%c2_155, %c1_156, %c0_157, %c0_158] : memref<3x2x32x16xf32, #tpu.memory_space<vmem>>, vector<1x1x32x16xf32>
    %253 = vector.shape_cast %252 : vector<1x1x32x16xf32> to vector<32x16xf32>
    %c2_159 = arith.constant 2 : index
    %c1_160 = arith.constant 1 : index
    %c0_161 = arith.constant 0 : index
    %c0_162 = arith.constant 0 : index
    %254 = vector.load %arg19[%c2_159, %c1_160, %c0_161, %c0_162] : memref<3x2x1x16xf32, #tpu.memory_space<vmem>>, vector<1x1x1x16xf32>
    %255 = vector.shape_cast %254 : vector<1x1x1x16xf32> to vector<1x16xf32>
    %256 = arith.truncf %177 : vector<16x32xf32> to vector<16x32xbf16>
    %257 = arith.truncf %253 : vector<32x16xf32> to vector<32x16xbf16>
    %cst_163 = arith.constant dense<0.000000e+00> : vector<16x16xf32>
    %258 = tpu.matmul %256, %257, %cst_163 {dimension_numbers = #tpu.dot_dimension_numbers<[1], [0], [0], [1], [0, 0, 1, 1], [], []>} : vector<16x32xbf16>, vector<32x16xbf16>, vector<16x16xf32> -> vector<16x16xf32>
    %259 = vector.broadcast %255 : vector<1x16xf32> to vector<16x16xf32>
    %260 = arith.addf %258, %259 : vector<16x16xf32>
    %261 = vector.shape_cast %260 : vector<16x16xf32> to vector<2x8x16xf32>
    %262 = arith.truncf %241 : vector<2x8x16xf32> to vector<2x8x16xbf16>
    %263 = arith.truncf %251 : vector<2x8x16xf32> to vector<2x8x16xbf16>
    "tpu.trace_start"() <{level = 10 : i32, message = "bqd,bkd->bqk"}> : () -> ()
    %cst_164 = arith.constant dense<0.000000e+00> : vector<2x8x8xf32>
    %264 = tpu.matmul %262, %263, %cst_164 {dimension_numbers = #tpu.dot_dimension_numbers<[2], [2], [1], [1], [0, 0, 0, 1, 1, 1], [0], [0]>} : vector<2x8x16xbf16>, vector<2x8x16xbf16>, vector<2x8x8xf32> -> vector<2x8x8xf32>
    "tpu.trace_stop"() : () -> ()
    %265 = arith.addf %264, %178 : vector<2x8x8xf32>
    %cst_165 = arith.constant dense<0xFF800000> : vector<2x8xf32>
    %266 = vector.multi_reduction <maximumf>, %265, %cst_165 [2] : vector<2x8x8xf32> to vector<2x8xf32>
    %267 = vector.shape_cast %266 : vector<2x8xf32> to vector<2x8x1xf32>
    %268 = vector.broadcast %267 : vector<2x8x1xf32> to vector<2x8x8xf32>
    %269 = arith.subf %265, %268 : vector<2x8x8xf32>
    %270 = math.exp %269 : vector<2x8x8xf32>
    %cst_166 = arith.constant dense<0.000000e+00> : vector<2x8xf32>
    %271 = vector.multi_reduction <add>, %270, %cst_166 [2] : vector<2x8x8xf32> to vector<2x8xf32>
    %272 = vector.shape_cast %271 : vector<2x8xf32> to vector<2x8x1xf32>
    %273 = tpu.reciprocal %272 {approx = true} : vector<2x8x1xf32> -> vector<2x8x1xf32>
    %274 = vector.broadcast %273 : vector<2x8x1xf32> to vector<2x8x8xf32>
    %275 = arith.mulf %270, %274 : vector<2x8x8xf32>
    %276 = arith.truncf %275 : vector<2x8x8xf32> to vector<2x8x8xbf16>
    %277 = arith.truncf %261 : vector<2x8x16xf32> to vector<2x8x16xbf16>
    "tpu.trace_start"() <{level = 10 : i32, message = "bqk,bkd->bqd"}> : () -> ()
    %cst_167 = arith.constant dense<0.000000e+00> : vector<2x8x16xf32>
    %278 = tpu.matmul %276, %277, %cst_167 {dimension_numbers = #tpu.dot_dimension_numbers<[2], [1], [1], [2], [0, 0, 0, 1, 1, 2], [0], [0]>} : vector<2x8x8xbf16>, vector<2x8x16xbf16>, vector<2x8x16xf32> -> vector<2x8x16xf32>
    "tpu.trace_stop"() : () -> ()
    %279 = vector.shape_cast %278 : vector<2x8x16xf32> to vector<16x16xf32>
    %280 = vector.extract_strided_slice %179 {offsets = [16, 0], sizes = [16, 32], strides = [1, 1]} : vector<32x32xf32> to vector<16x32xf32>
    %281 = arith.truncf %279 : vector<16x16xf32> to vector<16x16xbf16>
    %282 = arith.truncf %280 : vector<16x32xf32> to vector<16x32xbf16>
    %cst_168 = arith.constant dense<0.000000e+00> : vector<16x32xf32>
    %283 = tpu.matmul %281, %282, %cst_168 {dimension_numbers = #tpu.dot_dimension_numbers<[1], [0], [0], [1], [0, 0, 1, 1], [], []>} : vector<16x16xbf16>, vector<16x32xbf16>, vector<16x32xf32> -> vector<16x32xf32>
    %284 = arith.addf %231, %283 : vector<16x32xf32>
    %c0_169 = arith.constant 0 : index
    %c0_170 = arith.constant 0 : index
    %285 = vector.load %arg21[%c0_169, %c0_170] : memref<1x32xf32, #tpu.memory_space<vmem>>, vector<1x32xf32>
    %286 = vector.broadcast %285 : vector<1x32xf32> to vector<16x32xf32>
    %287 = arith.addf %284, %286 : vector<16x32xf32>
    %288 = arith.addf %177, %287 : vector<16x32xf32>
    %cst_171 = arith.constant dense<0.000000e+00> : vector<16xf32>
    %289 = vector.multi_reduction <add>, %288, %cst_171 [1] : vector<16x32xf32> to vector<16xf32>
    %290 = vector.shape_cast %289 : vector<16xf32> to vector<16x1xf32>
    %cst_172 = arith.constant 3.200000e+01 : f32
    %291 = vector.broadcast %cst_172 : f32 to vector<16x1xf32>
    %292 = arith.divf %290, %291 : vector<16x1xf32>
    %293 = vector.broadcast %292 : vector<16x1xf32> to vector<16x32xf32>
    %294 = arith.subf %288, %293 : vector<16x32xf32>
    %295 = arith.mulf %294, %294 : vector<16x32xf32>
    %cst_173 = arith.constant dense<0.000000e+00> : vector<16xf32>
    %296 = vector.multi_reduction <add>, %295, %cst_173 [1] : vector<16x32xf32> to vector<16xf32>
    %297 = vector.shape_cast %296 : vector<16xf32> to vector<16x1xf32>
    %cst_174 = arith.constant 3.200000e+01 : f32
    %298 = vector.broadcast %cst_174 : f32 to vector<16x1xf32>
    %299 = arith.divf %297, %298 : vector<16x1xf32>
    %300 = vector.broadcast %292 : vector<16x1xf32> to vector<16x32xf32>
    %301 = arith.subf %288, %300 : vector<16x32xf32>
    %cst_175 = arith.constant 9.99999974E-6 : f32
    %302 = vector.broadcast %cst_175 : f32 to vector<16x1xf32>
    %303 = arith.addf %299, %302 : vector<16x1xf32>
    %304 = math.rsqrt %303 : vector<16x1xf32>
    %305 = vector.broadcast %304 : vector<16x1xf32> to vector<16x32xf32>
    %306 = arith.mulf %301, %305 : vector<16x32xf32>
    %c0_176 = arith.constant 0 : index
    %c0_177 = arith.constant 0 : index
    %307 = vector.load %arg26[%c0_176, %c0_177] : memref<1x32xf32, #tpu.memory_space<vmem>>, vector<1x32xf32>
    %308 = vector.broadcast %307 : vector<1x32xf32> to vector<16x32xf32>
    %309 = arith.mulf %306, %308 : vector<16x32xf32>
    %c0_178 = arith.constant 0 : index
    %c0_179 = arith.constant 0 : index
    %310 = vector.load %arg27[%c0_178, %c0_179] : memref<1x32xf32, #tpu.memory_space<vmem>>, vector<1x32xf32>
    %311 = vector.broadcast %310 : vector<1x32xf32> to vector<16x32xf32>
    %312 = arith.addf %309, %311 : vector<16x32xf32>
    %c0_180 = arith.constant 0 : index
    %c0_181 = arith.constant 0 : index
    %c0_182 = arith.constant 0 : index
    %313 = vector.load %arg5[%c0_180, %c0_181, %c0_182] : memref<2x8x8xf32, #tpu.memory_space<vmem>>, vector<2x8x8xf32>
    %c0_183 = arith.constant 0 : index
    %c0_184 = arith.constant 0 : index
    %314 = vector.load %arg24[%c0_183, %c0_184] : memref<32x32xf32, #tpu.memory_space<vmem>>, vector<32x32xf32>
    %c0_185 = arith.constant 0 : index
    %c0_186 = arith.constant 0 : index
    %c0_187 = arith.constant 0 : index
    %c0_188 = arith.constant 0 : index
    %315 = vector.load %arg22[%c0_185, %c0_186, %c0_187, %c0_188] : memref<3x2x32x16xf32, #tpu.memory_space<vmem>>, vector<1x1x32x16xf32>
    %316 = vector.shape_cast %315 : vector<1x1x32x16xf32> to vector<32x16xf32>
    %c0_189 = arith.constant 0 : index
    %c0_190 = arith.constant 0 : index
    %c0_191 = arith.constant 0 : index
    %c0_192 = arith.constant 0 : index
    %317 = vector.load %arg23[%c0_189, %c0_190, %c0_191, %c0_192] : memref<3x2x1x16xf32, #tpu.memory_space<vmem>>, vector<1x1x1x16xf32>
    %318 = vector.shape_cast %317 : vector<1x1x1x16xf32> to vector<1x16xf32>
    %319 = arith.truncf %312 : vector<16x32xf32> to vector<16x32xbf16>
    %320 = arith.truncf %316 : vector<32x16xf32> to vector<32x16xbf16>
    %cst_193 = arith.constant dense<0.000000e+00> : vector<16x16xf32>
    %321 = tpu.matmul %319, %320, %cst_193 {dimension_numbers = #tpu.dot_dimension_numbers<[1], [0], [0], [1], [0, 0, 1, 1], [], []>} : vector<16x32xbf16>, vector<32x16xbf16>, vector<16x16xf32> -> vector<16x16xf32>
    %322 = vector.broadcast %318 : vector<1x16xf32> to vector<16x16xf32>
    %323 = arith.addf %321, %322 : vector<16x16xf32>
    %324 = vector.shape_cast %323 : vector<16x16xf32> to vector<2x8x16xf32>
    %c1_194 = arith.constant 1 : index
    %c0_195 = arith.constant 0 : index
    %c0_196 = arith.constant 0 : index
    %c0_197 = arith.constant 0 : index
    %325 = vector.load %arg22[%c1_194, %c0_195, %c0_196, %c0_197] : memref<3x2x32x16xf32, #tpu.memory_space<vmem>>, vector<1x1x32x16xf32>
    %326 = vector.shape_cast %325 : vector<1x1x32x16xf32> to vector<32x16xf32>
    %c1_198 = arith.constant 1 : index
    %c0_199 = arith.constant 0 : index
    %c0_200 = arith.constant 0 : index
    %c0_201 = arith.constant 0 : index
    %327 = vector.load %arg23[%c1_198, %c0_199, %c0_200, %c0_201] : memref<3x2x1x16xf32, #tpu.memory_space<vmem>>, vector<1x1x1x16xf32>
    %328 = vector.shape_cast %327 : vector<1x1x1x16xf32> to vector<1x16xf32>
    %329 = arith.truncf %176 : vector<16x32xf32> to vector<16x32xbf16>
    %330 = arith.truncf %326 : vector<32x16xf32> to vector<32x16xbf16>
    %cst_202 = arith.constant dense<0.000000e+00> : vector<16x16xf32>
    %331 = tpu.matmul %329, %330, %cst_202 {dimension_numbers = #tpu.dot_dimension_numbers<[1], [0], [0], [1], [0, 0, 1, 1], [], []>} : vector<16x32xbf16>, vector<32x16xbf16>, vector<16x16xf32> -> vector<16x16xf32>
    %332 = vector.broadcast %328 : vector<1x16xf32> to vector<16x16xf32>
    %333 = arith.addf %331, %332 : vector<16x16xf32>
    %334 = vector.shape_cast %333 : vector<16x16xf32> to vector<2x8x16xf32>
    %c2_203 = arith.constant 2 : index
    %c0_204 = arith.constant 0 : index
    %c0_205 = arith.constant 0 : index
    %c0_206 = arith.constant 0 : index
    %335 = vector.load %arg22[%c2_203, %c0_204, %c0_205, %c0_206] : memref<3x2x32x16xf32, #tpu.memory_space<vmem>>, vector<1x1x32x16xf32>
    %336 = vector.shape_cast %335 : vector<1x1x32x16xf32> to vector<32x16xf32>
    %c2_207 = arith.constant 2 : index
    %c0_208 = arith.constant 0 : index
    %c0_209 = arith.constant 0 : index
    %c0_210 = arith.constant 0 : index
    %337 = vector.load %arg23[%c2_207, %c0_208, %c0_209, %c0_210] : memref<3x2x1x16xf32, #tpu.memory_space<vmem>>, vector<1x1x1x16xf32>
    %338 = vector.shape_cast %337 : vector<1x1x1x16xf32> to vector<1x16xf32>
    %339 = arith.truncf %176 : vector<16x32xf32> to vector<16x32xbf16>
    %340 = arith.truncf %336 : vector<32x16xf32> to vector<32x16xbf16>
    %cst_211 = arith.constant dense<0.000000e+00> : vector<16x16xf32>
    %341 = tpu.matmul %339, %340, %cst_211 {dimension_numbers = #tpu.dot_dimension_numbers<[1], [0], [0], [1], [0, 0, 1, 1], [], []>} : vector<16x32xbf16>, vector<32x16xbf16>, vector<16x16xf32> -> vector<16x16xf32>
    %342 = vector.broadcast %338 : vector<1x16xf32> to vector<16x16xf32>
    %343 = arith.addf %341, %342 : vector<16x16xf32>
    %344 = vector.shape_cast %343 : vector<16x16xf32> to vector<2x8x16xf32>
    %345 = arith.truncf %324 : vector<2x8x16xf32> to vector<2x8x16xbf16>
    %346 = arith.truncf %334 : vector<2x8x16xf32> to vector<2x8x16xbf16>
    "tpu.trace_start"() <{level = 10 : i32, message = "bqd,bkd->bqk"}> : () -> ()
    %cst_212 = arith.constant dense<0.000000e+00> : vector<2x8x8xf32>
    %347 = tpu.matmul %345, %346, %cst_212 {dimension_numbers = #tpu.dot_dimension_numbers<[2], [2], [1], [1], [0, 0, 0, 1, 1, 1], [0], [0]>} : vector<2x8x16xbf16>, vector<2x8x16xbf16>, vector<2x8x8xf32> -> vector<2x8x8xf32>
    "tpu.trace_stop"() : () -> ()
    %348 = arith.addf %347, %313 : vector<2x8x8xf32>
    %cst_213 = arith.constant dense<0xFF800000> : vector<2x8xf32>
    %349 = vector.multi_reduction <maximumf>, %348, %cst_213 [2] : vector<2x8x8xf32> to vector<2x8xf32>
    %350 = vector.shape_cast %349 : vector<2x8xf32> to vector<2x8x1xf32>
    %351 = vector.broadcast %350 : vector<2x8x1xf32> to vector<2x8x8xf32>
    %352 = arith.subf %348, %351 : vector<2x8x8xf32>
    %353 = math.exp %352 : vector<2x8x8xf32>
    %cst_214 = arith.constant dense<0.000000e+00> : vector<2x8xf32>
    %354 = vector.multi_reduction <add>, %353, %cst_214 [2] : vector<2x8x8xf32> to vector<2x8xf32>
    %355 = vector.shape_cast %354 : vector<2x8xf32> to vector<2x8x1xf32>
    %356 = tpu.reciprocal %355 {approx = true} : vector<2x8x1xf32> -> vector<2x8x1xf32>
    %357 = vector.broadcast %356 : vector<2x8x1xf32> to vector<2x8x8xf32>
    %358 = arith.mulf %353, %357 : vector<2x8x8xf32>
    %359 = arith.truncf %358 : vector<2x8x8xf32> to vector<2x8x8xbf16>
    %360 = arith.truncf %344 : vector<2x8x16xf32> to vector<2x8x16xbf16>
    "tpu.trace_start"() <{level = 10 : i32, message = "bqk,bkd->bqd"}> : () -> ()
    %cst_215 = arith.constant dense<0.000000e+00> : vector<2x8x16xf32>
    %361 = tpu.matmul %359, %360, %cst_215 {dimension_numbers = #tpu.dot_dimension_numbers<[2], [1], [1], [2], [0, 0, 0, 1, 1, 2], [0], [0]>} : vector<2x8x8xbf16>, vector<2x8x16xbf16>, vector<2x8x16xf32> -> vector<2x8x16xf32>
    "tpu.trace_stop"() : () -> ()
    %362 = vector.shape_cast %361 : vector<2x8x16xf32> to vector<16x16xf32>
    %363 = vector.extract_strided_slice %314 {offsets = [0, 0], sizes = [16, 32], strides = [1, 1]} : vector<32x32xf32> to vector<16x32xf32>
    %364 = arith.truncf %362 : vector<16x16xf32> to vector<16x16xbf16>
    %365 = arith.truncf %363 : vector<16x32xf32> to vector<16x32xbf16>
    %cst_216 = arith.constant dense<0.000000e+00> : vector<16x32xf32>
    %366 = tpu.matmul %364, %365, %cst_216 {dimension_numbers = #tpu.dot_dimension_numbers<[1], [0], [0], [1], [0, 0, 1, 1], [], []>} : vector<16x16xbf16>, vector<16x32xbf16>, vector<16x32xf32> -> vector<16x32xf32>
    %c0_217 = arith.constant 0 : index
    %c1_218 = arith.constant 1 : index
    %c0_219 = arith.constant 0 : index
    %c0_220 = arith.constant 0 : index
    %367 = vector.load %arg22[%c0_217, %c1_218, %c0_219, %c0_220] : memref<3x2x32x16xf32, #tpu.memory_space<vmem>>, vector<1x1x32x16xf32>
    %368 = vector.shape_cast %367 : vector<1x1x32x16xf32> to vector<32x16xf32>
    %c0_221 = arith.constant 0 : index
    %c1_222 = arith.constant 1 : index
    %c0_223 = arith.constant 0 : index
    %c0_224 = arith.constant 0 : index
    %369 = vector.load %arg23[%c0_221, %c1_222, %c0_223, %c0_224] : memref<3x2x1x16xf32, #tpu.memory_space<vmem>>, vector<1x1x1x16xf32>
    %370 = vector.shape_cast %369 : vector<1x1x1x16xf32> to vector<1x16xf32>
    %371 = arith.truncf %312 : vector<16x32xf32> to vector<16x32xbf16>
    %372 = arith.truncf %368 : vector<32x16xf32> to vector<32x16xbf16>
    %cst_225 = arith.constant dense<0.000000e+00> : vector<16x16xf32>
    %373 = tpu.matmul %371, %372, %cst_225 {dimension_numbers = #tpu.dot_dimension_numbers<[1], [0], [0], [1], [0, 0, 1, 1], [], []>} : vector<16x32xbf16>, vector<32x16xbf16>, vector<16x16xf32> -> vector<16x16xf32>
    %374 = vector.broadcast %370 : vector<1x16xf32> to vector<16x16xf32>
    %375 = arith.addf %373, %374 : vector<16x16xf32>
    %376 = vector.shape_cast %375 : vector<16x16xf32> to vector<2x8x16xf32>
    %c1_226 = arith.constant 1 : index
    %c1_227 = arith.constant 1 : index
    %c0_228 = arith.constant 0 : index
    %c0_229 = arith.constant 0 : index
    %377 = vector.load %arg22[%c1_226, %c1_227, %c0_228, %c0_229] : memref<3x2x32x16xf32, #tpu.memory_space<vmem>>, vector<1x1x32x16xf32>
    %378 = vector.shape_cast %377 : vector<1x1x32x16xf32> to vector<32x16xf32>
    %c1_230 = arith.constant 1 : index
    %c1_231 = arith.constant 1 : index
    %c0_232 = arith.constant 0 : index
    %c0_233 = arith.constant 0 : index
    %379 = vector.load %arg23[%c1_230, %c1_231, %c0_232, %c0_233] : memref<3x2x1x16xf32, #tpu.memory_space<vmem>>, vector<1x1x1x16xf32>
    %380 = vector.shape_cast %379 : vector<1x1x1x16xf32> to vector<1x16xf32>
    %381 = arith.truncf %176 : vector<16x32xf32> to vector<16x32xbf16>
    %382 = arith.truncf %378 : vector<32x16xf32> to vector<32x16xbf16>
    %cst_234 = arith.constant dense<0.000000e+00> : vector<16x16xf32>
    %383 = tpu.matmul %381, %382, %cst_234 {dimension_numbers = #tpu.dot_dimension_numbers<[1], [0], [0], [1], [0, 0, 1, 1], [], []>} : vector<16x32xbf16>, vector<32x16xbf16>, vector<16x16xf32> -> vector<16x16xf32>
    %384 = vector.broadcast %380 : vector<1x16xf32> to vector<16x16xf32>
    %385 = arith.addf %383, %384 : vector<16x16xf32>
    %386 = vector.shape_cast %385 : vector<16x16xf32> to vector<2x8x16xf32>
    %c2_235 = arith.constant 2 : index
    %c1_236 = arith.constant 1 : index
    %c0_237 = arith.constant 0 : index
    %c0_238 = arith.constant 0 : index
    %387 = vector.load %arg22[%c2_235, %c1_236, %c0_237, %c0_238] : memref<3x2x32x16xf32, #tpu.memory_space<vmem>>, vector<1x1x32x16xf32>
    %388 = vector.shape_cast %387 : vector<1x1x32x16xf32> to vector<32x16xf32>
    %c2_239 = arith.constant 2 : index
    %c1_240 = arith.constant 1 : index
    %c0_241 = arith.constant 0 : index
    %c0_242 = arith.constant 0 : index
    %389 = vector.load %arg23[%c2_239, %c1_240, %c0_241, %c0_242] : memref<3x2x1x16xf32, #tpu.memory_space<vmem>>, vector<1x1x1x16xf32>
    %390 = vector.shape_cast %389 : vector<1x1x1x16xf32> to vector<1x16xf32>
    %391 = arith.truncf %176 : vector<16x32xf32> to vector<16x32xbf16>
    %392 = arith.truncf %388 : vector<32x16xf32> to vector<32x16xbf16>
    %cst_243 = arith.constant dense<0.000000e+00> : vector<16x16xf32>
    %393 = tpu.matmul %391, %392, %cst_243 {dimension_numbers = #tpu.dot_dimension_numbers<[1], [0], [0], [1], [0, 0, 1, 1], [], []>} : vector<16x32xbf16>, vector<32x16xbf16>, vector<16x16xf32> -> vector<16x16xf32>
    %394 = vector.broadcast %390 : vector<1x16xf32> to vector<16x16xf32>
    %395 = arith.addf %393, %394 : vector<16x16xf32>
    %396 = vector.shape_cast %395 : vector<16x16xf32> to vector<2x8x16xf32>
    %397 = arith.truncf %376 : vector<2x8x16xf32> to vector<2x8x16xbf16>
    %398 = arith.truncf %386 : vector<2x8x16xf32> to vector<2x8x16xbf16>
    "tpu.trace_start"() <{level = 10 : i32, message = "bqd,bkd->bqk"}> : () -> ()
    %cst_244 = arith.constant dense<0.000000e+00> : vector<2x8x8xf32>
    %399 = tpu.matmul %397, %398, %cst_244 {dimension_numbers = #tpu.dot_dimension_numbers<[2], [2], [1], [1], [0, 0, 0, 1, 1, 1], [0], [0]>} : vector<2x8x16xbf16>, vector<2x8x16xbf16>, vector<2x8x8xf32> -> vector<2x8x8xf32>
    "tpu.trace_stop"() : () -> ()
    %400 = arith.addf %399, %313 : vector<2x8x8xf32>
    %cst_245 = arith.constant dense<0xFF800000> : vector<2x8xf32>
    %401 = vector.multi_reduction <maximumf>, %400, %cst_245 [2] : vector<2x8x8xf32> to vector<2x8xf32>
    %402 = vector.shape_cast %401 : vector<2x8xf32> to vector<2x8x1xf32>
    %403 = vector.broadcast %402 : vector<2x8x1xf32> to vector<2x8x8xf32>
    %404 = arith.subf %400, %403 : vector<2x8x8xf32>
    %405 = math.exp %404 : vector<2x8x8xf32>
    %cst_246 = arith.constant dense<0.000000e+00> : vector<2x8xf32>
    %406 = vector.multi_reduction <add>, %405, %cst_246 [2] : vector<2x8x8xf32> to vector<2x8xf32>
    %407 = vector.shape_cast %406 : vector<2x8xf32> to vector<2x8x1xf32>
    %408 = tpu.reciprocal %407 {approx = true} : vector<2x8x1xf32> -> vector<2x8x1xf32>
    %409 = vector.broadcast %408 : vector<2x8x1xf32> to vector<2x8x8xf32>
    %410 = arith.mulf %405, %409 : vector<2x8x8xf32>
    %411 = arith.truncf %410 : vector<2x8x8xf32> to vector<2x8x8xbf16>
    %412 = arith.truncf %396 : vector<2x8x16xf32> to vector<2x8x16xbf16>
    "tpu.trace_start"() <{level = 10 : i32, message = "bqk,bkd->bqd"}> : () -> ()
    %cst_247 = arith.constant dense<0.000000e+00> : vector<2x8x16xf32>
    %413 = tpu.matmul %411, %412, %cst_247 {dimension_numbers = #tpu.dot_dimension_numbers<[2], [1], [1], [2], [0, 0, 0, 1, 1, 2], [0], [0]>} : vector<2x8x8xbf16>, vector<2x8x16xbf16>, vector<2x8x16xf32> -> vector<2x8x16xf32>
    "tpu.trace_stop"() : () -> ()
    %414 = vector.shape_cast %413 : vector<2x8x16xf32> to vector<16x16xf32>
    %415 = vector.extract_strided_slice %314 {offsets = [16, 0], sizes = [16, 32], strides = [1, 1]} : vector<32x32xf32> to vector<16x32xf32>
    %416 = arith.truncf %414 : vector<16x16xf32> to vector<16x16xbf16>
    %417 = arith.truncf %415 : vector<16x32xf32> to vector<16x32xbf16>
    %cst_248 = arith.constant dense<0.000000e+00> : vector<16x32xf32>
    %418 = tpu.matmul %416, %417, %cst_248 {dimension_numbers = #tpu.dot_dimension_numbers<[1], [0], [0], [1], [0, 0, 1, 1], [], []>} : vector<16x16xbf16>, vector<16x32xbf16>, vector<16x32xf32> -> vector<16x32xf32>
    %419 = arith.addf %366, %418 : vector<16x32xf32>
    %c0_249 = arith.constant 0 : index
    %c0_250 = arith.constant 0 : index
    %420 = vector.load %arg25[%c0_249, %c0_250] : memref<1x32xf32, #tpu.memory_space<vmem>>, vector<1x32xf32>
    %421 = vector.broadcast %420 : vector<1x32xf32> to vector<16x32xf32>
    %422 = arith.addf %419, %421 : vector<16x32xf32>
    %423 = arith.addf %312, %422 : vector<16x32xf32>
    %cst_251 = arith.constant dense<0.000000e+00> : vector<16xf32>
    %424 = vector.multi_reduction <add>, %423, %cst_251 [1] : vector<16x32xf32> to vector<16xf32>
    %425 = vector.shape_cast %424 : vector<16xf32> to vector<16x1xf32>
    %cst_252 = arith.constant 3.200000e+01 : f32
    %426 = vector.broadcast %cst_252 : f32 to vector<16x1xf32>
    %427 = arith.divf %425, %426 : vector<16x1xf32>
    %428 = vector.broadcast %427 : vector<16x1xf32> to vector<16x32xf32>
    %429 = arith.subf %423, %428 : vector<16x32xf32>
    %430 = arith.mulf %429, %429 : vector<16x32xf32>
    %cst_253 = arith.constant dense<0.000000e+00> : vector<16xf32>
    %431 = vector.multi_reduction <add>, %430, %cst_253 [1] : vector<16x32xf32> to vector<16xf32>
    %432 = vector.shape_cast %431 : vector<16xf32> to vector<16x1xf32>
    %cst_254 = arith.constant 3.200000e+01 : f32
    %433 = vector.broadcast %cst_254 : f32 to vector<16x1xf32>
    %434 = arith.divf %432, %433 : vector<16x1xf32>
    %435 = vector.broadcast %427 : vector<16x1xf32> to vector<16x32xf32>
    %436 = arith.subf %423, %435 : vector<16x32xf32>
    %cst_255 = arith.constant 9.99999974E-6 : f32
    %437 = vector.broadcast %cst_255 : f32 to vector<16x1xf32>
    %438 = arith.addf %434, %437 : vector<16x1xf32>
    %439 = math.rsqrt %438 : vector<16x1xf32>
    %440 = vector.broadcast %439 : vector<16x1xf32> to vector<16x32xf32>
    %441 = arith.mulf %436, %440 : vector<16x32xf32>
    %c0_256 = arith.constant 0 : index
    %c0_257 = arith.constant 0 : index
    %442 = vector.load %arg28[%c0_256, %c0_257] : memref<1x32xf32, #tpu.memory_space<vmem>>, vector<1x32xf32>
    %443 = vector.broadcast %442 : vector<1x32xf32> to vector<16x32xf32>
    %444 = arith.mulf %441, %443 : vector<16x32xf32>
    %c0_258 = arith.constant 0 : index
    %c0_259 = arith.constant 0 : index
    %445 = vector.load %arg29[%c0_258, %c0_259] : memref<1x32xf32, #tpu.memory_space<vmem>>, vector<1x32xf32>
    %446 = vector.broadcast %445 : vector<1x32xf32> to vector<16x32xf32>
    %447 = arith.addf %444, %446 : vector<16x32xf32>
    %c0_260 = arith.constant 0 : index
    %c0_261 = arith.constant 0 : index
    %448 = vector.load %arg32[%c0_260, %c0_261] : memref<32x64xf32, #tpu.memory_space<vmem>>, vector<32x64xf32>
    %c0_262 = arith.constant 0 : index
    %c0_263 = arith.constant 0 : index
    %449 = vector.load %arg33[%c0_262, %c0_263] : memref<1x64xf32, #tpu.memory_space<vmem>>, vector<1x64xf32>
    %450 = arith.truncf %447 : vector<16x32xf32> to vector<16x32xbf16>
    %451 = arith.truncf %448 : vector<32x64xf32> to vector<32x64xbf16>
    %cst_264 = arith.constant dense<0.000000e+00> : vector<16x64xf32>
    %452 = tpu.matmul %450, %451, %cst_264 {dimension_numbers = #tpu.dot_dimension_numbers<[1], [0], [0], [1], [0, 0, 1, 1], [], []>} : vector<16x32xbf16>, vector<32x64xbf16>, vector<16x64xf32> -> vector<16x64xf32>
    %453 = vector.broadcast %449 : vector<1x64xf32> to vector<16x64xf32>
    %454 = arith.addf %452, %453 : vector<16x64xf32>
    %cst_265 = arith.constant 0.000000e+00 : f32
    %455 = vector.broadcast %cst_265 : f32 to vector<16x64xf32>
    %456 = arith.maximumf %454, %455 : vector<16x64xf32>
    %c0_266 = arith.constant 0 : index
    %c0_267 = arith.constant 0 : index
    %457 = vector.load %arg34[%c0_266, %c0_267] : memref<64x32xf32, #tpu.memory_space<vmem>>, vector<64x32xf32>
    %c0_268 = arith.constant 0 : index
    %c0_269 = arith.constant 0 : index
    %458 = vector.load %arg35[%c0_268, %c0_269] : memref<1x32xf32, #tpu.memory_space<vmem>>, vector<1x32xf32>
    %459 = arith.truncf %456 : vector<16x64xf32> to vector<16x64xbf16>
    %460 = arith.truncf %457 : vector<64x32xf32> to vector<64x32xbf16>
    %cst_270 = arith.constant dense<0.000000e+00> : vector<16x32xf32>
    %461 = tpu.matmul %459, %460, %cst_270 {dimension_numbers = #tpu.dot_dimension_numbers<[1], [0], [0], [1], [0, 0, 1, 1], [], []>} : vector<16x64xbf16>, vector<64x32xbf16>, vector<16x32xf32> -> vector<16x32xf32>
    %462 = vector.broadcast %458 : vector<1x32xf32> to vector<16x32xf32>
    %463 = arith.addf %461, %462 : vector<16x32xf32>
    %464 = arith.addf %447, %463 : vector<16x32xf32>
    %cst_271 = arith.constant dense<0.000000e+00> : vector<16xf32>
    %465 = vector.multi_reduction <add>, %464, %cst_271 [1] : vector<16x32xf32> to vector<16xf32>
    %466 = vector.shape_cast %465 : vector<16xf32> to vector<16x1xf32>
    %cst_272 = arith.constant 3.200000e+01 : f32
    %467 = vector.broadcast %cst_272 : f32 to vector<16x1xf32>
    %468 = arith.divf %466, %467 : vector<16x1xf32>
    %469 = vector.broadcast %468 : vector<16x1xf32> to vector<16x32xf32>
    %470 = arith.subf %464, %469 : vector<16x32xf32>
    %471 = arith.mulf %470, %470 : vector<16x32xf32>
    %cst_273 = arith.constant dense<0.000000e+00> : vector<16xf32>
    %472 = vector.multi_reduction <add>, %471, %cst_273 [1] : vector<16x32xf32> to vector<16xf32>
    %473 = vector.shape_cast %472 : vector<16xf32> to vector<16x1xf32>
    %cst_274 = arith.constant 3.200000e+01 : f32
    %474 = vector.broadcast %cst_274 : f32 to vector<16x1xf32>
    %475 = arith.divf %473, %474 : vector<16x1xf32>
    %476 = vector.broadcast %468 : vector<16x1xf32> to vector<16x32xf32>
    %477 = arith.subf %464, %476 : vector<16x32xf32>
    %cst_275 = arith.constant 9.99999974E-6 : f32
    %478 = vector.broadcast %cst_275 : f32 to vector<16x1xf32>
    %479 = arith.addf %475, %478 : vector<16x1xf32>
    %480 = math.rsqrt %479 : vector<16x1xf32>
    %481 = vector.broadcast %480 : vector<16x1xf32> to vector<16x32xf32>
    %482 = arith.mulf %477, %481 : vector<16x32xf32>
    %c0_276 = arith.constant 0 : index
    %c0_277 = arith.constant 0 : index
    %483 = vector.load %arg30[%c0_276, %c0_277] : memref<1x32xf32, #tpu.memory_space<vmem>>, vector<1x32xf32>
    %484 = vector.broadcast %483 : vector<1x32xf32> to vector<16x32xf32>
    %485 = arith.mulf %482, %484 : vector<16x32xf32>
    %c0_278 = arith.constant 0 : index
    %c0_279 = arith.constant 0 : index
    %486 = vector.load %arg31[%c0_278, %c0_279] : memref<1x32xf32, #tpu.memory_space<vmem>>, vector<1x32xf32>
    %487 = vector.broadcast %486 : vector<1x32xf32> to vector<16x32xf32>
    %488 = arith.addf %485, %487 : vector<16x32xf32>
    %c0_280 = arith.constant 0 : index
    %c0_281 = arith.constant 0 : index
    %489 = vector.load %arg36[%c0_280, %c0_281] : memref<32x16xf32, #tpu.memory_space<vmem>>, vector<32x16xf32>
    %c0_282 = arith.constant 0 : index
    %c0_283 = arith.constant 0 : index
    %490 = vector.load %arg37[%c0_282, %c0_283] : memref<1x16xf32, #tpu.memory_space<vmem>>, vector<1x16xf32>
    %491 = arith.truncf %488 : vector<16x32xf32> to vector<16x32xbf16>
    %492 = arith.truncf %489 : vector<32x16xf32> to vector<32x16xbf16>
    %cst_284 = arith.constant dense<0.000000e+00> : vector<16x16xf32>
    %493 = tpu.matmul %491, %492, %cst_284 {dimension_numbers = #tpu.dot_dimension_numbers<[1], [0], [0], [1], [0, 0, 1, 1], [], []>} : vector<16x32xbf16>, vector<32x16xbf16>, vector<16x16xf32> -> vector<16x16xf32>
    %494 = vector.broadcast %490 : vector<1x16xf32> to vector<16x16xf32>
    %495 = arith.addf %493, %494 : vector<16x16xf32>
    %c0_285 = arith.constant 0 : index
    %c0_286 = arith.constant 0 : index
    %496 = vector.load %arg38[%c0_285, %c0_286] : memref<16x16xf32, #tpu.memory_space<vmem>>, vector<16x16xf32>
    tpu.vector_store %arg38[%c0_285, %c0_286], %495 {strides = array<i32>} : memref<16x16xf32, #tpu.memory_space<vmem>>, vector<16x16xf32>,
    return
  }
  func.func @transform_0(%arg0: i32) -> (i32, i32) {
    %c0_i32 = arith.constant 0 : i32
    %c0_i32_0 = arith.constant 0 : i32
    %c0_i32_1 = arith.constant 0 : i32
    return %c0_i32, %c0_i32_0 : i32, i32
  }
  func.func @transform_1(%arg0: i32) -> (i32, i32) {
    %c0_i32 = arith.constant 0 : i32
    %c0_i32_0 = arith.constant 0 : i32
    %c0_i32_1 = arith.constant 0 : i32
    return %c0_i32, %c0_i32_0 : i32, i32
  }
  func.func @transform_2(%arg0: i32) -> (i32, i32, i32) {
    %c0_i32 = arith.constant 0 : i32
    %c0_i32_0 = arith.constant 0 : i32
    %c0_i32_1 = arith.constant 0 : i32
    %c0_i32_2 = arith.constant 0 : i32
    return %c0_i32, %c0_i32_0, %c0_i32_1 : i32, i32, i32
  }
  func.func @transform_3(%arg0: i32) -> (i32, i32, i32) {
    %c0_i32 = arith.constant 0 : i32
    %c0_i32_0 = arith.constant 0 : i32
    %c0_i32_1 = arith.constant 0 : i32
    %c0_i32_2 = arith.constant 0 : i32
    return %c0_i32, %c0_i32_0, %c0_i32_1 : i32, i32, i32
  }
  func.func @transform_4(%arg0: i32) -> (i32, i32, i32) {
    %c0_i32 = arith.constant 0 : i32
    %c0_i32_0 = arith.constant 0 : i32
    %c0_i32_1 = arith.constant 0 : i32
    %c0_i32_2 = arith.constant 0 : i32
    return %c0_i32, %c0_i32_0, %c0_i32_1 : i32, i32, i32
  }
  func.func @transform_5(%arg0: i32) -> (i32, i32, i32, i32) {
    %c0_i32 = arith.constant 0 : i32
    %c0_i32_0 = arith.constant 0 : i32
    %c0_i32_1 = arith.constant 0 : i32
    %c0_i32_2 = arith.constant 0 : i32
    %c0_i32_3 = arith.constant 0 : i32
    return %c0_i32, %c0_i32_0, %c0_i32_1, %c0_i32_2 : i32, i32, i32, i32
  }
  func.func @transform_6(%arg0: i32) -> (i32, i32, i32, i32) {
    %c0_i32 = arith.constant 0 : i32
    %c0_i32_0 = arith.constant 0 : i32
    %c0_i32_1 = arith.constant 0 : i32
    %c0_i32_2 = arith.constant 0 : i32
    %c0_i32_3 = arith.constant 0 : i32
    return %c0_i32, %c0_i32_0, %c0_i32_1, %c0_i32_2 : i32, i32, i32, i32
  }
  func.func @transform_7(%arg0: i32) -> (i32, i32) {
    %c0_i32 = arith.constant 0 : i32
    %c0_i32_0 = arith.constant 0 : i32
    %c0_i32_1 = arith.constant 0 : i32
    return %c0_i32, %c0_i32_0 : i32, i32
  }
  func.func @transform_8(%arg0: i32) -> (i32, i32) {
    %c0_i32 = arith.constant 0 : i32
    %c0_i32_0 = arith.constant 0 : i32
    %c0_i32_1 = arith.constant 0 : i32
    return %c0_i32, %c0_i32_0 : i32, i32
  }
  func.func @transform_9(%arg0: i32) -> (i32, i32) {
    %c0_i32 = arith.constant 0 : i32
    %c0_i32_0 = arith.constant 0 : i32
    %c0_i32_1 = arith.constant 0 : i32
    return %c0_i32, %c0_i32_0 : i32, i32
  }
  func.func @transform_10(%arg0: i32) -> (i32, i32) {
    %c0_i32 = arith.constant 0 : i32
    %c0_i32_0 = arith.constant 0 : i32
    %c0_i32_1 = arith.constant 0 : i32
    return %c0_i32, %c0_i32_0 : i32, i32
  }
  func.func @transform_11(%arg0: i32) -> (i32, i32) {
    %c0_i32 = arith.constant 0 : i32
    %c0_i32_0 = arith.constant 0 : i32
    %c0_i32_1 = arith.constant 0 : i32
    return %c0_i32, %c0_i32_0 : i32, i32
  }
  func.func @transform_12(%arg0: i32) -> (i32, i32) {
    %c0_i32 = arith.constant 0 : i32
    %c0_i32_0 = arith.constant 0 : i32
    %c0_i32_1 = arith.constant 0 : i32
    return %c0_i32, %c0_i32_0 : i32, i32
  }
  func.func @transform_13(%arg0: i32) -> (i32, i32) {
    %c0_i32 = arith.constant 0 : i32
    %c0_i32_0 = arith.constant 0 : i32
    %c0_i32_1 = arith.constant 0 : i32
    return %c0_i32, %c0_i32_0 : i32, i32
  }
  func.func @transform_14(%arg0: i32) -> (i32, i32) {
    %c0_i32 = arith.constant 0 : i32
    %c0_i32_0 = arith.constant 0 : i32
    %c0_i32_1 = arith.constant 0 : i32
    return %c0_i32, %c0_i32_0 : i32, i32
  }
  func.func @transform_15(%arg0: i32) -> (i32, i32) {
    %c0_i32 = arith.constant 0 : i32
    %c0_i32_0 = arith.constant 0 : i32
    %c0_i32_1 = arith.constant 0 : i32
    return %c0_i32, %c0_i32_0 : i32, i32
  }
  func.func @transform_16(%arg0: i32) -> (i32, i32) {
    %c0_i32 = arith.constant 0 : i32
    %c0_i32_0 = arith.constant 0 : i32
    %c0_i32_1 = arith.constant 0 : i32
    return %c0_i32, %c0_i32_0 : i32, i32
  }
  func.func @transform_17(%arg0: i32) -> (i32, i32, i32, i32) {
    %c0_i32 = arith.constant 0 : i32
    %c0_i32_0 = arith.constant 0 : i32
    %c0_i32_1 = arith.constant 0 : i32
    %c0_i32_2 = arith.constant 0 : i32
    %c0_i32_3 = arith.constant 0 : i32
    return %c0_i32, %c0_i32_0, %c0_i32_1, %c0_i32_2 : i32, i32, i32, i32
  }
  func.func @transform_18(%arg0: i32) -> (i32, i32, i32, i32) {
    %c0_i32 = arith.constant 0 : i32
    %c0_i32_0 = arith.constant 0 : i32
    %c0_i32_1 = arith.constant 0 : i32
    %c0_i32_2 = arith.constant 0 : i32
    %c0_i32_3 = arith.constant 0 : i32
    return %c0_i32, %c0_i32_0, %c0_i32_1, %c0_i32_2 : i32, i32, i32, i32
  }
  func.func @transform_19(%arg0: i32) -> (i32, i32) {
    %c0_i32 = arith.constant 0 : i32
    %c0_i32_0 = arith.constant 0 : i32
    %c0_i32_1 = arith.constant 0 : i32
    return %c0_i32, %c0_i32_0 : i32, i32
  }
  func.func @transform_20(%arg0: i32) -> (i32, i32) {
    %c0_i32 = arith.constant 0 : i32
    %c0_i32_0 = arith.constant 0 : i32
    %c0_i32_1 = arith.constant 0 : i32
    return %c0_i32, %c0_i32_0 : i32, i32
  }
  func.func @transform_21(%arg0: i32) -> (i32, i32, i32, i32) {
    %c0_i32 = arith.constant 0 : i32
    %c0_i32_0 = arith.constant 0 : i32
    %c0_i32_1 = arith.constant 0 : i32
    %c0_i32_2 = arith.constant 0 : i32
    %c0_i32_3 = arith.constant 0 : i32
    return %c0_i32, %c0_i32_0, %c0_i32_1, %c0_i32_2 : i32, i32, i32, i32
  }
  func.func @transform_22(%arg0: i32) -> (i32, i32, i32, i32) {
    %c0_i32 = arith.constant 0 : i32
    %c0_i32_0 = arith.constant 0 : i32
    %c0_i32_1 = arith.constant 0 : i32
    %c0_i32_2 = arith.constant 0 : i32
    %c0_i32_3 = arith.constant 0 : i32
    return %c0_i32, %c0_i32_0, %c0_i32_1, %c0_i32_2 : i32, i32, i32, i32
  }
  func.func @transform_23(%arg0: i32) -> (i32, i32) {
    %c0_i32 = arith.constant 0 : i32
    %c0_i32_0 = arith.constant 0 : i32
    %c0_i32_1 = arith.constant 0 : i32
    return %c0_i32, %c0_i32_0 : i32, i32
  }
  func.func @transform_24(%arg0: i32) -> (i32, i32) {
    %c0_i32 = arith.constant 0 : i32
    %c0_i32_0 = arith.constant 0 : i32
    %c0_i32_1 = arith.constant 0 : i32
    return %c0_i32, %c0_i32_0 : i32, i32
  }
  func.func @transform_25(%arg0: i32) -> (i32, i32) {
    %c0_i32 = arith.constant 0 : i32
    %c0_i32_0 = arith.constant 0 : i32
    %c0_i32_1 = arith.constant 0 : i32
    return %c0_i32, %c0_i32_0 : i32, i32
  }
  func.func @transform_26(%arg0: i32) -> (i32, i32) {
    %c0_i32 = arith.constant 0 : i32
    %c0_i32_0 = arith.constant 0 : i32
    %c0_i32_1 = arith.constant 0 : i32
    return %c0_i32, %c0_i32_0 : i32, i32
  }
  func.func @transform_27(%arg0: i32) -> (i32, i32) {
    %c0_i32 = arith.constant 0 : i32
    %c0_i32_0 = arith.constant 0 : i32
    %c0_i32_1 = arith.constant 0 : i32
    return %c0_i32, %c0_i32_0 : i32, i32
  }
  func.func @transform_28(%arg0: i32) -> (i32, i32) {
    %c0_i32 = arith.constant 0 : i32
    %c0_i32_0 = arith.constant 0 : i32
    %c0_i32_1 = arith.constant 0 : i32
    return %c0_i32, %c0_i32_0 : i32, i32
  }
  func.func @transform_29(%arg0: i32) -> (i32, i32) {
    %c0_i32 = arith.constant 0 : i32
    %c0_i32_0 = arith.constant 0 : i32
    %c0_i32_1 = arith.constant 0 : i32
    return %c0_i32, %c0_i32_0 : i32, i32
  }
  func.func @transform_30(%arg0: i32) -> (i32, i32) {
    %c0_i32 = arith.constant 0 : i32
    %c0_i32_0 = arith.constant 0 : i32
    %c0_i32_1 = arith.constant 0 : i32
    return %c0_i32, %c0_i32_0 : i32, i32
  }
  func.func @transform_31(%arg0: i32) -> (i32, i32) {
    %c0_i32 = arith.constant 0 : i32
    %c0_i32_0 = arith.constant 0 : i32
    %c0_i32_1 = arith.constant 0 : i32
    return %c0_i32, %c0_i32_0 : i32, i32
  }
  func.func @transform_32(%arg0: i32) -> (i32, i32) {
    %c0_i32 = arith.constant 0 : i32
    %c0_i32_0 = arith.constant 0 : i32
    %c0_i32_1 = arith.constant 0 : i32
    return %c0_i32, %c0_i32_0 : i32, i32
  }
  func.func @transform_33(%arg0: i32) -> (i32, i32) {
    %c0_i32 = arith.constant 0 : i32
    %c0_i32_0 = arith.constant 0 : i32
    %c0_i32_1 = arith.constant 0 : i32
    return %c0_i32, %c0_i32_0 : i32, i32
  }
  func.func @transform_34(%arg0: i32) -> (i32, i32) {
    %c0_i32 = arith.constant 0 : i32
    %c0_i32_0 = arith.constant 0 : i32
    %c0_i32_1 = arith.constant 0 : i32
    return %c0_i32, %c0_i32_0 : i32, i32
  }
  func.func @transform_35(%arg0: i32) -> (i32, i32) {
    %c0_i32 = arith.constant 0 : i32
    %c0_i32_0 = arith.constant 0 : i32
    %c0_i32_1 = arith.constant 0 : i32
    return %c0_i32, %c0_i32_0 : i32, i32
  }
  func.func @transform_36(%arg0: i32) -> (i32, i32) {
    %c0_i32 = arith.constant 0 : i32
    %c0_i32_0 = arith.constant 0 : i32
    %c0_i32_1 = arith.constant 0 : i32
    return %c0_i32, %c0_i32_0 : i32, i32
  }
  func.func @transform_37(%arg0: i32) -> (i32, i32) {
    %c0_i32 = arith.constant 0 : i32
    %c0_i32_0 = arith.constant 0 : i32
    %c0_i32_1 = arith.constant 0 : i32
    return %c0_i32, %c0_i32_0 : i32, i32
  }
}

</mosaic_0001>

<llo_original>
// kernel: seq2seq_forward.1
$region0: #{seq2seq_forward.1}
  #allocation0 [shape = 'u32[]', space=smem, size = 0x4, offset = 0x4, fixed_abs, tag = 'smem constant byte address 0x4 - core index']
  #allocation1 [shape = 'u32[144,128]{1,0:T(1,128)}', space=vmem, size = 0x12000, scoped, tag = 'internal scratch']
  %s0 = inlined_call_operand.smem [shape: u32[38], index: -1, kind: input, shape index: {}]
  %s1 = sld [smem:[%s0]]
  %s2 = scalar_lea.smem %s0, 1
  %s3 = sld [smem:[%s2]]
  %s4 = scalar_lea.smem %s0, 2
  %s5 = sld [smem:[%s4]]
  %s6 = scalar_lea.smem %s0, 3
  %s7 = sld [smem:[%s6]]
  %s8 = scalar_lea.smem %s0, 4
  %s9 = sld [smem:[%s8]]
  %s10 = scalar_lea.smem %s0, 5
  %s11 = sld [smem:[%s10]]
  %s12 = scalar_lea.smem %s0, 6
  %s13 = sld [smem:[%s12]]
  %s14 = scalar_lea.smem %s0, 7
  %s15 = sld [smem:[%s14]]
  %s16 = scalar_lea.smem %s0, 8
  %s17 = sld [smem:[%s16]]
  %s18 = scalar_lea.smem %s0, 9
  %s19 = sld [smem:[%s18]]
  %s20 = scalar_lea.smem %s0, 10
  %s21 = sld [smem:[%s20]]
  %s22 = scalar_lea.smem %s0, 11
  %s23 = sld [smem:[%s22]]
  %s24 = scalar_lea.smem %s0, 12
  %s25 = sld [smem:[%s24]]
  %s26 = scalar_lea.smem %s0, 13
  %s27 = sld [smem:[%s26]]
  %s28 = scalar_lea.smem %s0, 14
  %s29 = sld [smem:[%s28]]
  %s30 = scalar_lea.smem %s0, 15
  %s31 = sld [smem:[%s30]]
  %s32 = scalar_lea.smem %s0, 16
  %s33 = sld [smem:[%s32]]
  %s34 = scalar_lea.smem %s0, 17
  %s35 = sld [smem:[%s34]]
  %s36 = scalar_lea.smem %s0, 18
  %s37 = sld [smem:[%s36]]
  %s38 = scalar_lea.smem %s0, 19
  %s39 = sld [smem:[%s38]]
  %s40 = scalar_lea.smem %s0, 20
  %s41 = sld [smem:[%s40]]
  %s42 = scalar_lea.smem %s0, 21
  %s43 = sld [smem:[%s42]]
  %s44 = scalar_lea.smem %s0, 22
  %s45 = sld [smem:[%s44]]
  %s46 = scalar_lea.smem %s0, 23
  %s47 = sld [smem:[%s46]]
  %s48 = scalar_lea.smem %s0, 24
  %s49 = sld [smem:[%s48]]
  %s50 = scalar_lea.smem %s0, 25
  %s51 = sld [smem:[%s50]]
  %s52 = scalar_lea.smem %s0, 26
  %s53 = sld [smem:[%s52]]
  %s54 = scalar_lea.smem %s0, 27
  %s55 = sld [smem:[%s54]]
  %s56 = scalar_lea.smem %s0, 28
  %s57 = sld [smem:[%s56]]
  %s58 = scalar_lea.smem %s0, 29
  %s59 = sld [smem:[%s58]]
  %s60 = scalar_lea.smem %s0, 30
  %s61 = sld [smem:[%s60]]
  %s62 = scalar_lea.smem %s0, 31
  %s63 = sld [smem:[%s62]]
  %s64 = scalar_lea.smem %s0, 32
  %s65 = sld [smem:[%s64]]
  %s66 = scalar_lea.smem %s0, 33
  %s67 = sld [smem:[%s66]]
  %s68 = scalar_lea.smem %s0, 34
  %s69 = sld [smem:[%s68]]
  %s70 = scalar_lea.smem %s0, 35
  %s71 = sld [smem:[%s70]]
  %s72 = scalar_lea.smem %s0, 36
  %s73 = sld [smem:[%s72]]
  %s74 = scalar_lea.smem %s0, 37
  %s75 = sld [smem:[%s74]]
  %s76 = sld [smem:[#allocation0]]
  $region158: #{seq2seq_forward.1} parent=0
    _
  %s78 = ssub.s32 1, %s76
  %s79 = scalar_select 0, %s78, %s76
  // Predicated region
  $region2: #{seq2seq_forward.1} parent=0 // pred_check
    _
  $region3: #{seq2seq_forward.1} parent=0 // pred_check_branch
    %81 = sbr.rel (0) target = $region5
  $region4: #{seq2seq_forward.1} parent=0 // pred_region
    _
  $region5: #{seq2seq_forward.1} parent=0 // pred_fallthru
    _
  // Predicated region
  $region6: #{seq2seq_forward.1} parent=0 // pred_check
    _
  $region7: #{seq2seq_forward.1} parent=0 // pred_check_branch
    %83 = sbr.rel (0) target = $region9
  $region8: #{seq2seq_forward.1} parent=0 // pred_region
    _
  $region9: #{seq2seq_forward.1} parent=0 // pred_fallthru
    _
  // Predicated region
  $region10: #{seq2seq_forward.1} parent=0 // pred_check
    _
  $region11: #{seq2seq_forward.1} parent=0 // pred_check_branch
    %85 = sbr.rel (0) target = $region13
  $region12: #{seq2seq_forward.1} parent=0 // pred_region
    _
  $region13: #{seq2seq_forward.1} parent=0 // pred_fallthru
    _
  // Predicated region
  $region14: #{seq2seq_forward.1} parent=0 // pred_check
    _
  $region15: #{seq2seq_forward.1} parent=0 // pred_check_branch
    %87 = sbr.rel (0) target = $region17
  $region16: #{seq2seq_forward.1} parent=0 // pred_region
    _
  $region17: #{seq2seq_forward.1} parent=0 // pred_fallthru
    _
  // Predicated region
  $region18: #{seq2seq_forward.1} parent=0 // pred_check
    _
  $region19: #{seq2seq_forward.1} parent=0 // pred_check_branch
    %89 = sbr.rel (0) target = $region21
  $region20: #{seq2seq_forward.1} parent=0 // pred_region
    _
  $region21: #{seq2seq_forward.1} parent=0 // pred_fallthru
    _
  // Predicated region
  $region22: #{seq2seq_forward.1} parent=0 // pred_check
    _
  $region23: #{seq2seq_forward.1} parent=0 // pred_check_branch
    %91 = sbr.rel (0) target = $region25
  $region24: #{seq2seq_forward.1} parent=0 // pred_region
    _
  $region25: #{seq2seq_forward.1} parent=0 // pred_fallthru
    _
  // Predicated region
  $region26: #{seq2seq_forward.1} parent=0 // pred_check
    _
  $region27: #{seq2seq_forward.1} parent=0 // pred_check_branch
    %93 = sbr.rel (0) target = $region29
  $region28: #{seq2seq_forward.1} parent=0 // pred_region
    _
  $region29: #{seq2seq_forward.1} parent=0 // pred_fallthru
    _
  // Predicated region
  $region30: #{seq2seq_forward.1} parent=0 // pred_check
    _
  $region31: #{seq2seq_forward.1} parent=0 // pred_check_branch
    %95 = sbr.rel (0) target = $region33
  $region32: #{seq2seq_forward.1} parent=0 // pred_region
    _
  $region33: #{seq2seq_forward.1} parent=0 // pred_fallthru
    _
  // Predicated region
  $region34: #{seq2seq_forward.1} parent=0 // pred_check
    _
  $region35: #{seq2seq_forward.1} parent=0 // pred_check_branch
    %97 = sbr.rel (0) target = $region37
  $region36: #{seq2seq_forward.1} parent=0 // pred_region
    _
  $region37: #{seq2seq_forward.1} parent=0 // pred_fallthru
    _
  // Predicated region
  $region38: #{seq2seq_forward.1} parent=0 // pred_check
    _
  $region39: #{seq2seq_forward.1} parent=0 // pred_check_branch
    %99 = sbr.rel (0) target = $region41
  $region40: #{seq2seq_forward.1} parent=0 // pred_region
    _
  $region41: #{seq2seq_forward.1} parent=0 // pred_fallthru
    _
  // Predicated region
  $region42: #{seq2seq_forward.1} parent=0 // pred_check
    _
  $region43: #{seq2seq_forward.1} parent=0 // pred_check_branch
    %101 = sbr.rel (0) target = $region45
  $region44: #{seq2seq_forward.1} parent=0 // pred_region
    _
  $region45: #{seq2seq_forward.1} parent=0 // pred_fallthru
    _
  // Predicated region
  $region46: #{seq2seq_forward.1} parent=0 // pred_check
    _
  $region47: #{seq2seq_forward.1} parent=0 // pred_check_branch
    %103 = sbr.rel (0) target = $region49
  $region48: #{seq2seq_forward.1} parent=0 // pred_region
    _
  $region49: #{seq2seq_forward.1} parent=0 // pred_fallthru
    _
  // Predicated region
  $region50: #{seq2seq_forward.1} parent=0 // pred_check
    _
  $region51: #{seq2seq_forward.1} parent=0 // pred_check_branch
    %105 = sbr.rel (0) target = $region53
  $region52: #{seq2seq_forward.1} parent=0 // pred_region
    _
  $region53: #{seq2seq_forward.1} parent=0 // pred_fallthru
    _
  // Predicated region
  $region54: #{seq2seq_forward.1} parent=0 // pred_check
    _
  $region55: #{seq2seq_forward.1} parent=0 // pred_check_branch
    %107 = sbr.rel (0) target = $region57
  $region56: #{seq2seq_forward.1} parent=0 // pred_region
    _
  $region57: #{seq2seq_forward.1} parent=0 // pred_fallthru
    _
  // Predicated region
  $region58: #{seq2seq_forward.1} parent=0 // pred_check
    _
  $region59: #{seq2seq_forward.1} parent=0 // pred_check_branch
    %109 = sbr.rel (0) target = $region61
  $region60: #{seq2seq_forward.1} parent=0 // pred_region
    _
  $region61: #{seq2seq_forward.1} parent=0 // pred_fallthru
    _
  // Predicated region
  $region62: #{seq2seq_forward.1} parent=0 // pred_check
    _
  $region63: #{seq2seq_forward.1} parent=0 // pred_check_branch
    %111 = sbr.rel (0) target = $region65
  $region64: #{seq2seq_forward.1} parent=0 // pred_region
    _
  $region65: #{seq2seq_forward.1} parent=0 // pred_fallthru
    _
  // Predicated region
  $region66: #{seq2seq_forward.1} parent=0 // pred_check
    _
  $region67: #{seq2seq_forward.1} parent=0 // pred_check_branch
    %113 = sbr.rel (0) target = $region69
  $region68: #{seq2seq_forward.1} parent=0 // pred_region
    _
  $region69: #{seq2seq_forward.1} parent=0 // pred_fallthru
    _
  // Predicated region
  $region70: #{seq2seq_forward.1} parent=0 // pred_check
    _
  $region71: #{seq2seq_forward.1} parent=0 // pred_check_branch
    %115 = sbr.rel (0) target = $region73
  $region72: #{seq2seq_forward.1} parent=0 // pred_region
    _
  $region73: #{seq2seq_forward.1} parent=0 // pred_fallthru
    _
  // Predicated region
  $region74: #{seq2seq_forward.1} parent=0 // pred_check
    _
  $region75: #{seq2seq_forward.1} parent=0 // pred_check_branch
    %117 = sbr.rel (0) target = $region77
  $region76: #{seq2seq_forward.1} parent=0 // pred_region
    _
  $region77: #{seq2seq_forward.1} parent=0 // pred_fallthru
    _
  // Predicated region
  $region78: #{seq2seq_forward.1} parent=0 // pred_check
    _
  $region79: #{seq2seq_forward.1} parent=0 // pred_check_branch
    %119 = sbr.rel (0) target = $region81
  $region80: #{seq2seq_forward.1} parent=0 // pred_region
    _
  $region81: #{seq2seq_forward.1} parent=0 // pred_fallthru
    _
  // Predicated region
  $region82: #{seq2seq_forward.1} parent=0 // pred_check
    _
  $region83: #{seq2seq_forward.1} parent=0 // pred_check_branch
    %121 = sbr.rel (0) target = $region85
  $region84: #{seq2seq_forward.1} parent=0 // pred_region
    _
  $region85: #{seq2seq_forward.1} parent=0 // pred_fallthru
    _
  // Predicated region
  $region86: #{seq2seq_forward.1} parent=0 // pred_check
    _
  $region87: #{seq2seq_forward.1} parent=0 // pred_check_branch
    %123 = sbr.rel (0) target = $region89
  $region88: #{seq2seq_forward.1} parent=0 // pred_region
    _
  $region89: #{seq2seq_forward.1} parent=0 // pred_fallthru
    _
  // Predicated region
  $region90: #{seq2seq_forward.1} parent=0 // pred_check
    _
  $region91: #{seq2seq_forward.1} parent=0 // pred_check_branch
    %125 = sbr.rel (0) target = $region93
  $region92: #{seq2seq_forward.1} parent=0 // pred_region
    _
  $region93: #{seq2seq_forward.1} parent=0 // pred_fallthru
    _
  // Predicated region
  $region94: #{seq2seq_forward.1} parent=0 // pred_check
    _
  $region95: #{seq2seq_forward.1} parent=0 // pred_check_branch
    %127 = sbr.rel (0) target = $region97
  $region96: #{seq2seq_forward.1} parent=0 // pred_region
    _
  $region97: #{seq2seq_forward.1} parent=0 // pred_fallthru
    _
  // Predicated region
  $region98: #{seq2seq_forward.1} parent=0 // pred_check
    _
  $region99: #{seq2seq_forward.1} parent=0 // pred_check_branch
    %129 = sbr.rel (0) target = $region101
  $region100: #{seq2seq_forward.1} parent=0 // pred_region
    _
  $region101: #{seq2seq_forward.1} parent=0 // pred_fallthru
    _
  // Predicated region
  $region102: #{seq2seq_forward.1} parent=0 // pred_check
    _
  $region103: #{seq2seq_forward.1} parent=0 // pred_check_branch
    %131 = sbr.rel (0) target = $region105
  $region104: #{seq2seq_forward.1} parent=0 // pred_region
    _
  $region105: #{seq2seq_forward.1} parent=0 // pred_fallthru
    _
  // Predicated region
  $region106: #{seq2seq_forward.1} parent=0 // pred_check
    _
  $region107: #{seq2seq_forward.1} parent=0 // pred_check_branch
    %133 = sbr.rel (0) target = $region109
  $region108: #{seq2seq_forward.1} parent=0 // pred_region
    _
  $region109: #{seq2seq_forward.1} parent=0 // pred_fallthru
    _
  // Predicated region
  $region110: #{seq2seq_forward.1} parent=0 // pred_check
    _
  $region111: #{seq2seq_forward.1} parent=0 // pred_check_branch
    %135 = sbr.rel (0) target = $region113
  $region112: #{seq2seq_forward.1} parent=0 // pred_region
    _
  $region113: #{seq2seq_forward.1} parent=0 // pred_fallthru
    _
  // Predicated region
  $region114: #{seq2seq_forward.1} parent=0 // pred_check
    _
  $region115: #{seq2seq_forward.1} parent=0 // pred_check_branch
    %137 = sbr.rel (0) target = $region117
  $region116: #{seq2seq_forward.1} parent=0 // pred_region
    _
  $region117: #{seq2seq_forward.1} parent=0 // pred_fallthru
    _
  // Predicated region
  $region118: #{seq2seq_forward.1} parent=0 // pred_check
    _
  $region119: #{seq2seq_forward.1} parent=0 // pred_check_branch
    %139 = sbr.rel (0) target = $region121
  $region120: #{seq2seq_forward.1} parent=0 // pred_region
    _
  $region121: #{seq2seq_forward.1} parent=0 // pred_fallthru
    _
  // Predicated region
  $region122: #{seq2seq_forward.1} parent=0 // pred_check
    _
  $region123: #{seq2seq_forward.1} parent=0 // pred_check_branch
    %141 = sbr.rel (0) target = $region125
  $region124: #{seq2seq_forward.1} parent=0 // pred_region
    _
  $region125: #{seq2seq_forward.1} parent=0 // pred_fallthru
    _
  // Predicated region
  $region126: #{seq2seq_forward.1} parent=0 // pred_check
    _
  $region127: #{seq2seq_forward.1} parent=0 // pred_check_branch
    %143 = sbr.rel (0) target = $region129
  $region128: #{seq2seq_forward.1} parent=0 // pred_region
    _
  $region129: #{seq2seq_forward.1} parent=0 // pred_fallthru
    _
  // Predicated region
  $region130: #{seq2seq_forward.1} parent=0 // pred_check
    _
  $region131: #{seq2seq_forward.1} parent=0 // pred_check_branch
    %145 = sbr.rel (0) target = $region133
  $region132: #{seq2seq_forward.1} parent=0 // pred_region
    _
  $region133: #{seq2seq_forward.1} parent=0 // pred_fallthru
    _
  // Predicated region
  $region134: #{seq2seq_forward.1} parent=0 // pred_check
    _
  $region135: #{seq2seq_forward.1} parent=0 // pred_check_branch
    %147 = sbr.rel (0) target = $region137
  $region136: #{seq2seq_forward.1} parent=0 // pred_region
    _
  $region137: #{seq2seq_forward.1} parent=0 // pred_fallthru
    _
  // Predicated region
  $region138: #{seq2seq_forward.1} parent=0 // pred_check
    _
  $region139: #{seq2seq_forward.1} parent=0 // pred_check_branch
    %149 = sbr.rel (0) target = $region141
  $region140: #{seq2seq_forward.1} parent=0 // pred_region
    _
  $region141: #{seq2seq_forward.1} parent=0 // pred_fallthru
    _
  // Predicated region
  $region142: #{seq2seq_forward.1} parent=0 // pred_check
    _
  $region143: #{seq2seq_forward.1} parent=0 // pred_check_branch
    %151 = sbr.rel (0) target = $region145
  $region144: #{seq2seq_forward.1} parent=0 // pred_region
    _
  $region145: #{seq2seq_forward.1} parent=0 // pred_fallthru
    _
  // Predicated region
  $region146: #{seq2seq_forward.1} parent=0 // pred_check
    _
  $region147: #{seq2seq_forward.1} parent=0 // pred_check_branch
    %153 = sbr.rel (0) target = $region149
  $region148: #{seq2seq_forward.1} parent=0 // pred_region
    _
  $region149: #{seq2seq_forward.1} parent=0 // pred_fallthru
    _
  %v155 = vld [vmem:[%s1] sm:$0xff]
  %v156 = vld [vmem:[%s1 + $0x8] sm:$0xff]
  %v157 = vld [vmem:[%s5] sm:$0xff]
  %v158 = vld [vmem:[%s5 + $0x8] sm:$0xff]
  %v159 = vld [vmem:[%s15] sm:$0xff]
  %v160 = vld [vmem:[%s15 + $0x8] sm:$0xff]
  %v161 = vld [vmem:[%s15 + $0x10] sm:$0xff]
  %v162 = vld [vmem:[%s15 + $0x18] sm:$0xff]
  %v163 = vld [vmem:[%s11] sm:$0xff]
  %v164 = vld [vmem:[%s11 + $0x8] sm:$0xff]
  %v165 = vld [vmem:[%s11 + $0x10] sm:$0xff]
  %v166 = vld [vmem:[%s11 + $0x18] sm:$0xff]
  %v167 = vld [vmem:[%s13] sm:$0x1]
  %v168 = vpack.c.bf16 %v156, %v155
  %v169 = vpack.c.bf16 %v164, %v163
  %v170 = vpack.c.bf16 %v166, %v165
  %v172 = vlaneseq
  %v173 = vshrl.u32 %v172, 7
  %v174 = vsub.s32 0, %v173
  %v175 = vrot.slane %v167, %v174
  %vm177 = vcmask 261120
  %v179 = vsel %vm177, %v168, 0
  %181 = vmatprep.subr.bf16.mxu0 0
  %182 = vmatpush1.bf16.msra.mxu0 %v169
  %183 = vmatprep.subr.bf16.mxu0 0
  %184 = vmatpush1.bf16.msra.mxu0 %v170
  %185 = vmatprep.subr.bf16.mxu0 0
  %186 = vmatpush1.bf16.msra.mxu0 0
  %187 = vmatprep.subr.bf16.mxu0 0
  %188 = vmatpush1.bf16.msra.mxu0 0
  %189 = vmatprep.subr.bf16.mxu0 0
  %190 = vmatpush1.bf16.msra.mxu0 0
  %191 = vmatprep.subr.bf16.mxu0 0
  %192 = vmatpush1.bf16.msra.mxu0 0
  %193 = vmatprep.subr.bf16.mxu0 0
  %194 = vmatpush1.bf16.msra.mxu0 0
  %195 = vmatprep.subr.bf16.mxu0 0
  %196 = vmatpush1.bf16.msra.mxu0 0
  %197 = vmatprep.subr.bf16.mxu0 0
  %198 = vmatpush1.bf16.msra.mxu0 0
  %199 = vmatprep.subr.bf16.mxu0 0
  %200 = vmatpush1.bf16.msra.mxu0 0
  %201 = vmatprep.subr.bf16.mxu0 0
  %202 = vmatpush1.bf16.msra.mxu0 0
  %203 = vmatprep.subr.bf16.mxu0 0
  %204 = vmatpush1.bf16.msra.mxu0 0
  %205 = vmatprep.subr.bf16.mxu0 0
  %206 = vmatpush1.bf16.msra.mxu0 0
  %207 = vmatprep.subr.bf16.mxu0 0
  %208 = vmatpush1.bf16.msra.mxu0 0
  %209 = vmatprep.subr.bf16.mxu0 0
  %210 = vmatpush1.bf16.msra.mxu0 0
  %211 = vmatprep.subr.bf16.mxu0 0
  %212 = vmatpush1.bf16.msra.mxu0 0
  %213 = vmatprep.mubr.bf16.mxu0 0
  %214 = vmatmul.mubr.bf16.gmra.mrb[0].mxu0 %v179
  %v215 = vpop.f32.mrb[0].mxu0
  %v216 = vadd.f32 %v175, %v215
  %v217 = vpop.f32.mrb[0].mxu0
  %v218 = vpop.f32.mrb[0].mxu0
  %v219 = vadd.f32 %v175, %v218
  %v220 = vpop.f32.mrb[0].mxu0
  %221 = vdwg.mxu0
  %s222 = scalar_lea.vmem %s11, 64
  %v223 = vld [vmem:[%s222] sm:$0xff]
  %v224 = vld [vmem:[%s222 + $0x8] sm:$0xff]
  %v225 = vld [vmem:[%s222 + $0x10] sm:$0xff]
  %v226 = vld [vmem:[%s222 + $0x18] sm:$0xff]
  %s227 = scalar_lea.vmem %s13, 2
  %v228 = vld [vmem:[%s227] sm:$0x1]
  %v229 = vpack.c.bf16 %v224, %v223
  %v230 = vpack.c.bf16 %v226, %v225
  %v232 = vlaneseq
  %v233 = vshrl.u32 %v232, 7
  %v234 = vsub.s32 0, %v233
  %v235 = vrot.slane %v228, %v234
  %237 = vmatprep.subr.bf16.mxu0 0
  %238 = vmatpush1.bf16.msra.mxu0 %v229
  %239 = vmatprep.subr.bf16.mxu0 0
  %240 = vmatpush1.bf16.msra.mxu0 %v230
  %241 = vmatprep.subr.bf16.mxu0 0
  %242 = vmatpush1.bf16.msra.mxu0 0
  %243 = vmatprep.subr.bf16.mxu0 0
  %244 = vmatpush1.bf16.msra.mxu0 0
  %245 = vmatprep.subr.bf16.mxu0 0
  %246 = vmatpush1.bf16.msra.mxu0 0
  %247 = vmatprep.subr.bf16.mxu0 0
  %248 = vmatpush1.bf16.msra.mxu0 0
  %249 = vmatprep.subr.bf16.mxu0 0
  %250 = vmatpush1.bf16.msra.mxu0 0
  %251 = vmatprep.subr.bf16.mxu0 0
  %252 = vmatpush1.bf16.msra.mxu0 0
  %253 = vmatprep.subr.bf16.mxu0 0
  %254 = vmatpush1.bf16.msra.mxu0 0
  %255 = vmatprep.subr.bf16.mxu0 0
  %256 = vmatpush1.bf16.msra.mxu0 0
  %257 = vmatprep.subr.bf16.mxu0 0
  %258 = vmatpush1.bf16.msra.mxu0 0
  %259 = vmatprep.subr.bf16.mxu0 0
  %260 = vmatpush1.bf16.msra.mxu0 0
  %261 = vmatprep.subr.bf16.mxu0 0
  %262 = vmatpush1.bf16.msra.mxu0 0
  %263 = vmatprep.subr.bf16.mxu0 0
  %264 = vmatpush1.bf16.msra.mxu0 0
  %265 = vmatprep.subr.bf16.mxu0 0
  %266 = vmatpush1.bf16.msra.mxu0 0
  %267 = vmatprep.subr.bf16.mxu0 0
  %268 = vmatpush1.bf16.msra.mxu0 0
  %269 = vmatprep.mubr.bf16.mxu0 0
  %270 = vmatmul.mubr.bf16.gmra.mrb[0].mxu0 %v179
  %v271 = vpop.f32.mrb[0].mxu0
  %v272 = vadd.f32 %v235, %v271
  %v273 = vpop.f32.mrb[0].mxu0
  %v274 = vpop.f32.mrb[0].mxu0
  %v275 = vadd.f32 %v235, %v274
  %v276 = vpop.f32.mrb[0].mxu0
  %277 = vdwg.mxu0
  %s278 = scalar_lea.vmem %s11, 128
  %v279 = vld [vmem:[%s278] sm:$0xff]
  %v280 = vld [vmem:[%s278 + $0x8] sm:$0xff]
  %v281 = vld [vmem:[%s278 + $0x10] sm:$0xff]
  %v282 = vld [vmem:[%s278 + $0x18] sm:$0xff]
  %s283 = scalar_lea.vmem %s13, 4
  %v284 = vld [vmem:[%s283] sm:$0x1]
  %v285 = vpack.c.bf16 %v280, %v279
  %v286 = vpack.c.bf16 %v282, %v281
  %v288 = vlaneseq
  %v289 = vshrl.u32 %v288, 7
  %v290 = vsub.s32 0, %v289
  %v291 = vrot.slane %v284, %v290
  %293 = vmatprep.subr.bf16.mxu0 0
  %294 = vmatpush1.bf16.msra.mxu0 %v285
  %295 = vmatprep.subr.bf16.mxu0 0
  %296 = vmatpush1.bf16.msra.mxu0 %v286
  %297 = vmatprep.subr.bf16.mxu0 0
  %298 = vmatpush1.bf16.msra.mxu0 0
  %299 = vmatprep.subr.bf16.mxu0 0
  %300 = vmatpush1.bf16.msra.mxu0 0
  %301 = vmatprep.subr.bf16.mxu0 0
  %302 = vmatpush1.bf16.msra.mxu0 0
  %303 = vmatprep.subr.bf16.mxu0 0
  %304 = vmatpush1.bf16.msra.mxu0 0
  %305 = vmatprep.subr.bf16.mxu0 0
  %306 = vmatpush1.bf16.msra.mxu0 0
  %307 = vmatprep.subr.bf16.mxu0 0
  %308 = vmatpush1.bf16.msra.mxu0 0
  %309 = vmatprep.subr.bf16.mxu0 0
  %310 = vmatpush1.bf16.msra.mxu0 0
  %311 = vmatprep.subr.bf16.mxu0 0
  %312 = vmatpush1.bf16.msra.mxu0 0
  %313 = vmatprep.subr.bf16.mxu0 0
  %314 = vmatpush1.bf16.msra.mxu0 0
  %315 = vmatprep.subr.bf16.mxu0 0
  %316 = vmatpush1.bf16.msra.mxu0 0
  %317 = vmatprep.subr.bf16.mxu0 0
  %318 = vmatpush1.bf16.msra.mxu0 0
  %319 = vmatprep.subr.bf16.mxu0 0
  %320 = vmatpush1.bf16.msra.mxu0 0
  %321 = vmatprep.subr.bf16.mxu0 0
  %322 = vmatpush1.bf16.msra.mxu0 0
  %323 = vmatprep.subr.bf16.mxu0 0
  %324 = vmatpush1.bf16.msra.mxu0 0
  %325 = vmatprep.mubr.bf16.mxu0 0
  %326 = vmatmul.mubr.bf16.gmra.mrb[0].mxu0 %v179
  %v327 = vpop.f32.mrb[0].mxu0
  %v328 = vadd.f32 %v291, %v327
  %v329 = vpop.f32.mrb[0].mxu0
  %v330 = vpop.f32.mrb[0].mxu0
  %v331 = vadd.f32 %v291, %v330
  %v332 = vpop.f32.mrb[0].mxu0
  %333 = vdwg.mxu0
  %v334 = vpack.c.bf16 %v216, %v216
  %v335 = vpack.c.bf16 %v219, %v219
  %v336 = vpack.c.bf16 %v272, %v272
  %v337 = vpack.c.bf16 %v275, %v275
  %vm338 = vcmask 130048
  %v340 = vsel %vm338, %v334, 0
  %v343 = vsel %vm338, %v336, 0
  %345 = vmatprep.subr.bf16.mxu0 0
  %346 = vmatpush1.bf16.xpose.msra.mxu0 %v343
  %347 = vmatprep.subr.bf16.mxu0 0
  %348 = vmatpush1.bf16.xpose.msra.mxu0 0
  %349 = vmatprep.subr.bf16.mxu0 0
  %350 = vmatpush1.bf16.xpose.msra.mxu0 0
  %351 = vmatprep.subr.bf16.mxu0 0
  %352 = vmatpush1.bf16.xpose.msra.mxu0 0
  %353 = vmatprep.subr.bf16.mxu0 0
  %354 = vmatpush1.bf16.xpose.msra.mxu0 0
  %355 = vmatprep.subr.bf16.mxu0 0
  %356 = vmatpush1.bf16.xpose.msra.mxu0 0
  %357 = vmatprep.subr.bf16.mxu0 0
  %358 = vmatpush1.bf16.xpose.msra.mxu0 0
  %359 = vmatprep.subr.bf16.mxu0 0
  %360 = vmatpush1.bf16.xpose.msra.mxu0 0
  %361 = vmatprep.subr.bf16.mxu0 0
  %362 = vmatpush1.bf16.xpose.msra.mxu0 0
  %363 = vmatprep.subr.bf16.mxu0 0
  %364 = vmatpush1.bf16.xpose.msra.mxu0 0
  %365 = vmatprep.subr.bf16.mxu0 0
  %366 = vmatpush1.bf16.xpose.msra.mxu0 0
  %367 = vmatprep.subr.bf16.mxu0 0
  %368 = vmatpush1.bf16.xpose.msra.mxu0 0
  %369 = vmatprep.subr.bf16.mxu0 0
  %370 = vmatpush1.bf16.xpose.msra.mxu0 0
  %371 = vmatprep.subr.bf16.mxu0 0
  %372 = vmatpush1.bf16.xpose.msra.mxu0 0
  %373 = vmatprep.subr.bf16.mxu0 0
  %374 = vmatpush1.bf16.xpose.msra.mxu0 0
  %375 = vmatprep.subr.bf16.mxu0 0
  %376 = vmatpush1.bf16.xpose.msra.mxu0 0
  %377 = vmatprep.mubr.bf16.mxu0 0
  %378 = vmatmul.mubr.bf16.gmra.mrb[0].mxu0 %v340
  %v379 = vpop.f32.mrb[0].mxu0
  %v380 = vadd.f32 %v157, %v379
  %v381 = vpop.f32.mrb[0].mxu0
  %v382 = vpop.f32.mrb[0].mxu0
  %v383 = vpop.f32.mrb[0].mxu0
  %384 = vdwg.mxu0
  %v386 = vsel %vm338, %v335, 0
  %v389 = vsel %vm338, %v337, 0
  %391 = vmatprep.subr.bf16.mxu0 0
  %392 = vmatpush1.bf16.xpose.msra.mxu0 %v389
  %393 = vmatprep.subr.bf16.mxu0 0
  %394 = vmatpush1.bf16.xpose.msra.mxu0 0
  %395 = vmatprep.subr.bf16.mxu0 0
  %396 = vmatpush1.bf16.xpose.msra.mxu0 0
  %397 = vmatprep.subr.bf16.mxu0 0
  %398 = vmatpush1.bf16.xpose.msra.mxu0 0
  %399 = vmatprep.subr.bf16.mxu0 0
  %400 = vmatpush1.bf16.xpose.msra.mxu0 0
  %401 = vmatprep.subr.bf16.mxu0 0
  %402 = vmatpush1.bf16.xpose.msra.mxu0 0
  %403 = vmatprep.subr.bf16.mxu0 0
  %404 = vmatpush1.bf16.xpose.msra.mxu0 0
  %405 = vmatprep.subr.bf16.mxu0 0
  %406 = vmatpush1.bf16.xpose.msra.mxu0 0
  %407 = vmatprep.subr.bf16.mxu0 0
  %408 = vmatpush1.bf16.xpose.msra.mxu0 0
  %409 = vmatprep.subr.bf16.mxu0 0
  %410 = vmatpush1.bf16.xpose.msra.mxu0 0
  %411 = vmatprep.subr.bf16.mxu0 0
  %412 = vmatpush1.bf16.xpose.msra.mxu0 0
  %413 = vmatprep.subr.bf16.mxu0 0
  %414 = vmatpush1.bf16.xpose.msra.mxu0 0
  %415 = vmatprep.subr.bf16.mxu0 0
  %416 = vmatpush1.bf16.xpose.msra.mxu0 0
  %417 = vmatprep.subr.bf16.mxu0 0
  %418 = vmatpush1.bf16.xpose.msra.mxu0 0
  %419 = vmatprep.subr.bf16.mxu0 0
  %420 = vmatpush1.bf16.xpose.msra.mxu0 0
  %421 = vmatprep.subr.bf16.mxu0 0
  %422 = vmatpush1.bf16.xpose.msra.mxu0 0
  %423 = vmatprep.mubr.bf16.mxu0 0
  %424 = vmatmul.mubr.bf16.gmra.mrb[0].mxu0 %v386
  %v425 = vpop.f32.mrb[0].mxu0
  %v426 = vadd.f32 %v158, %v425
  %v427 = vpop.f32.mrb[0].mxu0
  %v428 = vpop.f32.mrb[0].mxu0
  %v429 = vpop.f32.mrb[0].mxu0
  %430 = vdwg.mxu0
  %vm431 = vcmask 64512
  %v432 = vsel %vm431, %v380, -inf
  %433 = vmax.xlane.f32.xlu0 %v432
  %v434 = vpop.xlane.xlu0 %433
  %v435 = vsel %vm431, %v426, -inf
  %436 = vmax.xlane.f32.xlu0 %v435
  %v437 = vpop.xlane.xlu0 %436
  %v438 = vsub.f32 %v380, %v434
  %v439 = vsub.f32 %v426, %v437
  %v440 = vmul.f32 %v438, 1.442695
  %v441 = vpow.pop %v440
  %v442 = vmul.f32 %v439, 1.442695
  %v443 = vpow.pop %v442
  %v444 = vsel %vm431, %v441, 0.0
  %445 = vadd.xlane.f32.xlu0 %v444
  %v446 = vpop.xlane.xlu0 %445
  %v447 = vsel %vm431, %v443, 0.0
  %448 = vadd.xlane.f32.xlu0 %v447
  %v449 = vpop.xlane.xlu0 %448
  %v450 = vrcp.pop %v446
  %v451 = vrcp.pop %v449
  %v452 = vmul.f32 %v441, %v450
  %v453 = vmul.f32 %v443, %v451
  %v454 = vpack.c.bf16 %v452, %v452
  %v455 = vpack.c.bf16 %v453, %v453
  %v456 = vpack.c.bf16 %v328, %v328
  %v457 = vpack.c.bf16 %v331, %v331
  %v459 = vsel %vm431, %v454, 0
  %vm461 = vcmask 1043456
  %v463 = vsel %vm461, %v456, 0
  %465 = vmatprep.subr.bf16.mxu0 0
  %466 = vmatpush1.bf16.msra.mxu0 %v463
  %467 = vmatprep.subr.bf16.mxu0 0
  %468 = vmatpush1.bf16.msra.mxu0 0
  %469 = vmatprep.subr.bf16.mxu0 0
  %470 = vmatpush1.bf16.msra.mxu0 0
  %471 = vmatprep.subr.bf16.mxu0 0
  %472 = vmatpush1.bf16.msra.mxu0 0
  %473 = vmatprep.subr.bf16.mxu0 0
  %474 = vmatpush1.bf16.msra.mxu0 0
  %475 = vmatprep.subr.bf16.mxu0 0
  %476 = vmatpush1.bf16.msra.mxu0 0
  %477 = vmatprep.subr.bf16.mxu0 0
  %478 = vmatpush1.bf16.msra.mxu0 0
  %479 = vmatprep.subr.bf16.mxu0 0
  %480 = vmatpush1.bf16.msra.mxu0 0
  %481 = vmatprep.subr.bf16.mxu0 0
  %482 = vmatpush1.bf16.msra.mxu0 0
  %483 = vmatprep.subr.bf16.mxu0 0
  %484 = vmatpush1.bf16.msra.mxu0 0
  %485 = vmatprep.subr.bf16.mxu0 0
  %486 = vmatpush1.bf16.msra.mxu0 0
  %487 = vmatprep.subr.bf16.mxu0 0
  %488 = vmatpush1.bf16.msra.mxu0 0
  %489 = vmatprep.subr.bf16.mxu0 0
  %490 = vmatpush1.bf16.msra.mxu0 0
  %491 = vmatprep.subr.bf16.mxu0 0
  %492 = vmatpush1.bf16.msra.mxu0 0
  %493 = vmatprep.subr.bf16.mxu0 0
  %494 = vmatpush1.bf16.msra.mxu0 0
  %495 = vmatprep.subr.bf16.mxu0 0
  %496 = vmatpush1.bf16.msra.mxu0 0
  %497 = vmatprep.mubr.bf16.mxu0 0
  %498 = vmatmul.mubr.bf16.gmra.mrb[0].mxu0 %v459
  %v499 = vpop.f32.mrb[0].mxu0
  %v500 = vadd.f32 0.0, %v499
  %v501 = vpop.f32.mrb[0].mxu0
  %v502 = vpop.f32.mrb[0].mxu0
  %v503 = vpop.f32.mrb[0].mxu0
  %504 = vdwg.mxu0
  %v506 = vsel %vm431, %v455, 0
  %v509 = vsel %vm461, %v457, 0
  %511 = vmatprep.subr.bf16.mxu0 0
  %512 = vmatpush1.bf16.msra.mxu0 %v509
  %513 = vmatprep.subr.bf16.mxu0 0
  %514 = vmatpush1.bf16.msra.mxu0 0
  %515 = vmatprep.subr.bf16.mxu0 0
  %516 = vmatpush1.bf16.msra.mxu0 0
  %517 = vmatprep.subr.bf16.mxu0 0
  %518 = vmatpush1.bf16.msra.mxu0 0
  %519 = vmatprep.subr.bf16.mxu0 0
  %520 = vmatpush1.bf16.msra.mxu0 0
  %521 = vmatprep.subr.bf16.mxu0 0
  %522 = vmatpush1.bf16.msra.mxu0 0
  %523 = vmatprep.subr.bf16.mxu0 0
  %524 = vmatpush1.bf16.msra.mxu0 0
  %525 = vmatprep.subr.bf16.mxu0 0
  %526 = vmatpush1.bf16.msra.mxu0 0
  %527 = vmatprep.subr.bf16.mxu0 0
  %528 = vmatpush1.bf16.msra.mxu0 0
  %529 = vmatprep.subr.bf16.mxu0 0
  %530 = vmatpush1.bf16.msra.mxu0 0
  %531 = vmatprep.subr.bf16.mxu0 0
  %532 = vmatpush1.bf16.msra.mxu0 0
  %533 = vmatprep.subr.bf16.mxu0 0
  %534 = vmatpush1.bf16.msra.mxu0 0
  %535 = vmatprep.subr.bf16.mxu0 0
  %536 = vmatpush1.bf16.msra.mxu0 0
  %537 = vmatprep.subr.bf16.mxu0 0
  %538 = vmatpush1.bf16.msra.mxu0 0
  %539 = vmatprep.subr.bf16.mxu0 0
  %540 = vmatpush1.bf16.msra.mxu0 0
  %541 = vmatprep.subr.bf16.mxu0 0
  %542 = vmatpush1.bf16.msra.mxu0 0
  %543 = vmatprep.mubr.bf16.mxu0 0
  %544 = vmatmul.mubr.bf16.gmra.mrb[0].mxu0 %v506
  %v545 = vpop.f32.mrb[0].mxu0
  %v546 = vadd.f32 0.0, %v545
  %v547 = vpop.f32.mrb[0].mxu0
  %v548 = vpop.f32.mrb[0].mxu0
  %v549 = vpop.f32.mrb[0].mxu0
  %550 = vdwg.mxu0
  %v551 = vpack.c.bf16 %v546, %v500
  %v552 = vpack.c.bf16 %v160, %v159
  %s553 = scalar_lea.vmem %s11, 32
  %v554 = vld [vmem:[%s553] sm:$0xff]
  %v555 = vld [vmem:[%s553 + $0x8] sm:$0xff]
  %v556 = vld [vmem:[%s553 + $0x10] sm:$0xff]
  %v557 = vld [vmem:[%s553 + $0x18] sm:$0xff]
  %s558 = scalar_lea.vmem %s13, 1
  %v559 = vld [vmem:[%s558] sm:$0x1]
  %v560 = vpack.c.bf16 %v555, %v554
  %v561 = vpack.c.bf16 %v557, %v556
  %v563 = vlaneseq
  %v564 = vshrl.u32 %v563, 7
  %v565 = vsub.s32 0, %v564
  %v566 = vrot.slane %v559, %v565
  %568 = vmatprep.subr.bf16.mxu0 0
  %569 = vmatpush1.bf16.msra.mxu0 %v560
  %570 = vmatprep.subr.bf16.mxu0 0
  %571 = vmatpush1.bf16.msra.mxu0 %v561
  %572 = vmatprep.subr.bf16.mxu0 0
  %573 = vmatpush1.bf16.msra.mxu0 0
  %574 = vmatprep.subr.bf16.mxu0 0
  %575 = vmatpush1.bf16.msra.mxu0 0
  %576 = vmatprep.subr.bf16.mxu0 0
  %577 = vmatpush1.bf16.msra.mxu0 0
  %578 = vmatprep.subr.bf16.mxu0 0
  %579 = vmatpush1.bf16.msra.mxu0 0
  %580 = vmatprep.subr.bf16.mxu0 0
  %581 = vmatpush1.bf16.msra.mxu0 0
  %582 = vmatprep.subr.bf16.mxu0 0
  %583 = vmatpush1.bf16.msra.mxu0 0
  %584 = vmatprep.subr.bf16.mxu0 0
  %585 = vmatpush1.bf16.msra.mxu0 0
  %586 = vmatprep.subr.bf16.mxu0 0
  %587 = vmatpush1.bf16.msra.mxu0 0
  %588 = vmatprep.subr.bf16.mxu0 0
  %589 = vmatpush1.bf16.msra.mxu0 0
  %590 = vmatprep.subr.bf16.mxu0 0
  %591 = vmatpush1.bf16.msra.mxu0 0
  %592 = vmatprep.subr.bf16.mxu0 0
  %593 = vmatpush1.bf16.msra.mxu0 0
  %594 = vmatprep.subr.bf16.mxu0 0
  %595 = vmatpush1.bf16.msra.mxu0 0
  %596 = vmatprep.subr.bf16.mxu0 0
  %597 = vmatpush1.bf16.msra.mxu0 0
  %598 = vmatprep.subr.bf16.mxu0 0
  %599 = vmatpush1.bf16.msra.mxu0 0
  %600 = vmatprep.mubr.bf16.mxu0 0
  %601 = vmatmul.mubr.bf16.gmra.mrb[0].mxu0 %v179
  %v602 = vpop.f32.mrb[0].mxu0
  %v603 = vadd.f32 %v566, %v602
  %v604 = vpop.f32.mrb[0].mxu0
  %v605 = vpop.f32.mrb[0].mxu0
  %v606 = vadd.f32 %v566, %v605
  %v607 = vpop.f32.mrb[0].mxu0
  %608 = vdwg.mxu0
  %s609 = scalar_lea.vmem %s11, 96
  %v610 = vld [vmem:[%s609] sm:$0xff]
  %v611 = vld [vmem:[%s609 + $0x8] sm:$0xff]
  %v612 = vld [vmem:[%s609 + $0x10] sm:$0xff]
  %v613 = vld [vmem:[%s609 + $0x18] sm:$0xff]
  %s614 = scalar_lea.vmem %s13, 3
  %v615 = vld [vmem:[%s614] sm:$0x1]
  %v616 = vpack.c.bf16 %v611, %v610
  %v617 = vpack.c.bf16 %v613, %v612
  %v619 = vlaneseq
  %v620 = vshrl.u32 %v619, 7
  %v621 = vsub.s32 0, %v620
  %v622 = vrot.slane %v615, %v621
  %624 = vmatprep.subr.bf16.mxu0 0
  %625 = vmatpush1.bf16.msra.mxu0 %v616
  %626 = vmatprep.subr.bf16.mxu0 0
  %627 = vmatpush1.bf16.msra.mxu0 %v617
  %628 = vmatprep.subr.bf16.mxu0 0
  %629 = vmatpush1.bf16.msra.mxu0 0
  %630 = vmatprep.subr.bf16.mxu0 0
  %631 = vmatpush1.bf16.msra.mxu0 0
  %632 = vmatprep.subr.bf16.mxu0 0
  %633 = vmatpush1.bf16.msra.mxu0 0
  %634 = vmatprep.subr.bf16.mxu0 0
  %635 = vmatpush1.bf16.msra.mxu0 0
  %636 = vmatprep.subr.bf16.mxu0 0
  %637 = vmatpush1.bf16.msra.mxu0 0
  %638 = vmatprep.subr.bf16.mxu0 0
  %639 = vmatpush1.bf16.msra.mxu0 0
  %640 = vmatprep.subr.bf16.mxu0 0
  %641 = vmatpush1.bf16.msra.mxu0 0
  %642 = vmatprep.subr.bf16.mxu0 0
  %643 = vmatpush1.bf16.msra.mxu0 0
  %644 = vmatprep.subr.bf16.mxu0 0
  %645 = vmatpush1.bf16.msra.mxu0 0
  %646 = vmatprep.subr.bf16.mxu0 0
  %647 = vmatpush1.bf16.msra.mxu0 0
  %648 = vmatprep.subr.bf16.mxu0 0
  %649 = vmatpush1.bf16.msra.mxu0 0
  %650 = vmatprep.subr.bf16.mxu0 0
  %651 = vmatpush1.bf16.msra.mxu0 0
  %652 = vmatprep.subr.bf16.mxu0 0
  %653 = vmatpush1.bf16.msra.mxu0 0
  %654 = vmatprep.subr.bf16.mxu0 0
  %655 = vmatpush1.bf16.msra.mxu0 0
  %656 = vmatprep.mubr.bf16.mxu0 0
  %657 = vmatmul.mubr.bf16.gmra.mrb[0].mxu0 %v179
  %v658 = vpop.f32.mrb[0].mxu0
  %v659 = vadd.f32 %v622, %v658
  %v660 = vpop.f32.mrb[0].mxu0
  %v661 = vpop.f32.mrb[0].mxu0
  %v662 = vadd.f32 %v622, %v661
  %v663 = vpop.f32.mrb[0].mxu0
  %664 = vdwg.mxu0
  %s665 = scalar_lea.vmem %s11, 160
  %v666 = vld [vmem:[%s665] sm:$0xff]
  %v667 = vld [vmem:[%s665 + $0x8] sm:$0xff]
  %v668 = vld [vmem:[%s665 + $0x10] sm:$0xff]
  %v669 = vld [vmem:[%s665 + $0x18] sm:$0xff]
  %s670 = scalar_lea.vmem %s13, 5
  %v671 = vld [vmem:[%s670] sm:$0x1]
  %v672 = vpack.c.bf16 %v667, %v666
  %v673 = vpack.c.bf16 %v669, %v668
  %v675 = vlaneseq
  %v676 = vshrl.u32 %v675, 7
  %v677 = vsub.s32 0, %v676
  %v678 = vrot.slane %v671, %v677
  %680 = vmatprep.subr.bf16.mxu0 0
  %681 = vmatpush1.bf16.msra.mxu0 %v672
  %682 = vmatprep.subr.bf16.mxu0 0
  %683 = vmatpush1.bf16.msra.mxu0 %v673
  %684 = vmatprep.subr.bf16.mxu0 0
  %685 = vmatpush1.bf16.msra.mxu0 0
  %686 = vmatprep.subr.bf16.mxu0 0
  %687 = vmatpush1.bf16.msra.mxu0 0
  %688 = vmatprep.subr.bf16.mxu0 0
  %689 = vmatpush1.bf16.msra.mxu0 0
  %690 = vmatprep.subr.bf16.mxu0 0
  %691 = vmatpush1.bf16.msra.mxu0 0
  %692 = vmatprep.subr.bf16.mxu0 0
  %693 = vmatpush1.bf16.msra.mxu0 0
  %694 = vmatprep.subr.bf16.mxu0 0
  %695 = vmatpush1.bf16.msra.mxu0 0
  %696 = vmatprep.subr.bf16.mxu0 0
  %697 = vmatpush1.bf16.msra.mxu0 0
  %698 = vmatprep.subr.bf16.mxu0 0
  %699 = vmatpush1.bf16.msra.mxu0 0
  %700 = vmatprep.subr.bf16.mxu0 0
  %701 = vmatpush1.bf16.msra.mxu0 0
  %702 = vmatprep.subr.bf16.mxu0 0
  %703 = vmatpush1.bf16.msra.mxu0 0
  %704 = vmatprep.subr.bf16.mxu0 0
  %705 = vmatpush1.bf16.msra.mxu0 0
  %706 = vmatprep.subr.bf16.mxu0 0
  %707 = vmatpush1.bf16.msra.mxu0 0
  %708 = vmatprep.subr.bf16.mxu0 0
  %709 = vmatpush1.bf16.msra.mxu0 0
  %710 = vmatprep.subr.bf16.mxu0 0
  %711 = vmatpush1.bf16.msra.mxu0 0
  %712 = vmatprep.mubr.bf16.mxu0 0
  %713 = vmatmul.mubr.bf16.gmra.mrb[0].mxu0 %v179
  %v714 = vpop.f32.mrb[0].mxu0
  %v715 = vadd.f32 %v678, %v714
  %v716 = vpop.f32.mrb[0].mxu0
  %v717 = vpop.f32.mrb[0].mxu0
  %v718 = vadd.f32 %v678, %v717
  %v719 = vpop.f32.mrb[0].mxu0
  %720 = vdwg.mxu0
  %v721 = vpack.c.bf16 %v603, %v603
  %v722 = vpack.c.bf16 %v606, %v606
  %v723 = vpack.c.bf16 %v659, %v659
  %v724 = vpack.c.bf16 %v662, %v662
  %v726 = vsel %vm338, %v721, 0
  %v729 = vsel %vm338, %v723, 0
  %731 = vmatprep.subr.bf16.mxu0 0
  %732 = vmatpush1.bf16.xpose.msra.mxu0 %v729
  %733 = vmatprep.subr.bf16.mxu0 0
  %734 = vmatpush1.bf16.xpose.msra.mxu0 0
  %735 = vmatprep.subr.bf16.mxu0 0
  %736 = vmatpush1.bf16.xpose.msra.mxu0 0
  %737 = vmatprep.subr.bf16.mxu0 0
  %738 = vmatpush1.bf16.xpose.msra.mxu0 0
  %739 = vmatprep.subr.bf16.mxu0 0
  %740 = vmatpush1.bf16.xpose.msra.mxu0 0
  %741 = vmatprep.subr.bf16.mxu0 0
  %742 = vmatpush1.bf16.xpose.msra.mxu0 0
  %743 = vmatprep.subr.bf16.mxu0 0
  %744 = vmatpush1.bf16.xpose.msra.mxu0 0
  %745 = vmatprep.subr.bf16.mxu0 0
  %746 = vmatpush1.bf16.xpose.msra.mxu0 0
  %747 = vmatprep.subr.bf16.mxu0 0
  %748 = vmatpush1.bf16.xpose.msra.mxu0 0
  %749 = vmatprep.subr.bf16.mxu0 0
  %750 = vmatpush1.bf16.xpose.msra.mxu0 0
  %751 = vmatprep.subr.bf16.mxu0 0
  %752 = vmatpush1.bf16.xpose.msra.mxu0 0
  %753 = vmatprep.subr.bf16.mxu0 0
  %754 = vmatpush1.bf16.xpose.msra.mxu0 0
  %755 = vmatprep.subr.bf16.mxu0 0
  %756 = vmatpush1.bf16.xpose.msra.mxu0 0
  %757 = vmatprep.subr.bf16.mxu0 0
  %758 = vmatpush1.bf16.xpose.msra.mxu0 0
  %759 = vmatprep.subr.bf16.mxu0 0
  %760 = vmatpush1.bf16.xpose.msra.mxu0 0
  %761 = vmatprep.subr.bf16.mxu0 0
  %762 = vmatpush1.bf16.xpose.msra.mxu0 0
  %763 = vmatprep.mubr.bf16.mxu0 0
  %764 = vmatmul.mubr.bf16.gmra.mrb[0].mxu0 %v726
  %v765 = vpop.f32.mrb[0].mxu0
  %v766 = vadd.f32 %v157, %v765
  %v767 = vpop.f32.mrb[0].mxu0
  %v768 = vpop.f32.mrb[0].mxu0
  %v769 = vpop.f32.mrb[0].mxu0
  %770 = vdwg.mxu0
  %v772 = vsel %vm338, %v722, 0
  %v775 = vsel %vm338, %v724, 0
  %777 = vmatprep.subr.bf16.mxu0 0
  %778 = vmatpush1.bf16.xpose.msra.mxu0 %v775
  %779 = vmatprep.subr.bf16.mxu0 0
  %780 = vmatpush1.bf16.xpose.msra.mxu0 0
  %781 = vmatprep.subr.bf16.mxu0 0
  %782 = vmatpush1.bf16.xpose.msra.mxu0 0
  %783 = vmatprep.subr.bf16.mxu0 0
  %784 = vmatpush1.bf16.xpose.msra.mxu0 0
  %785 = vmatprep.subr.bf16.mxu0 0
  %786 = vmatpush1.bf16.xpose.msra.mxu0 0
  %787 = vmatprep.subr.bf16.mxu0 0
  %788 = vmatpush1.bf16.xpose.msra.mxu0 0
  %789 = vmatprep.subr.bf16.mxu0 0
  %790 = vmatpush1.bf16.xpose.msra.mxu0 0
  %791 = vmatprep.subr.bf16.mxu0 0
  %792 = vmatpush1.bf16.xpose.msra.mxu0 0
  %793 = vmatprep.subr.bf16.mxu0 0
  %794 = vmatpush1.bf16.xpose.msra.mxu0 0
  %795 = vmatprep.subr.bf16.mxu0 0
  %796 = vmatpush1.bf16.xpose.msra.mxu0 0
  %797 = vmatprep.subr.bf16.mxu0 0
  %798 = vmatpush1.bf16.xpose.msra.mxu0 0
  %799 = vmatprep.subr.bf16.mxu0 0
  %800 = vmatpush1.bf16.xpose.msra.mxu0 0
  %801 = vmatprep.subr.bf16.mxu0 0
  %802 = vmatpush1.bf16.xpose.msra.mxu0 0
  %803 = vmatprep.subr.bf16.mxu0 0
  %804 = vmatpush1.bf16.xpose.msra.mxu0 0
  %805 = vmatprep.subr.bf16.mxu0 0
  %806 = vmatpush1.bf16.xpose.msra.mxu0 0
  %807 = vmatprep.subr.bf16.mxu0 0
  %808 = vmatpush1.bf16.xpose.msra.mxu0 0
  %809 = vmatprep.mubr.bf16.mxu0 0
  %810 = vmatmul.mubr.bf16.gmra.mrb[0].mxu0 %v772
  %v811 = vpop.f32.mrb[0].mxu0
  %v812 = vadd.f32 %v158, %v811
  %v813 = vpop.f32.mrb[0].mxu0
  %v814 = vpop.f32.mrb[0].mxu0
  %v815 = vpop.f32.mrb[0].mxu0
  %816 = vdwg.mxu0
  %v817 = vsel %vm431, %v766, -inf
  %818 = vmax.xlane.f32.xlu0 %v817
  %v819 = vpop.xlane.xlu0 %818
  %v820 = vsel %vm431, %v812, -inf
  %821 = vmax.xlane.f32.xlu0 %v820
  %v822 = vpop.xlane.xlu0 %821
  %v823 = vsub.f32 %v766, %v819
  %v824 = vsub.f32 %v812, %v822
  %v825 = vmul.f32 %v823, 1.442695
  %v826 = vpow.pop %v825
  %v827 = vmul.f32 %v824, 1.442695
  %v828 = vpow.pop %v827
  %v829 = vsel %vm431, %v826, 0.0
  %830 = vadd.xlane.f32.xlu0 %v829
  %v831 = vpop.xlane.xlu0 %830
  %v832 = vsel %vm431, %v828, 0.0
  %833 = vadd.xlane.f32.xlu0 %v832
  %v834 = vpop.xlane.xlu0 %833
  %v835 = vrcp.pop %v831
  %v836 = vrcp.pop %v834
  %v837 = vmul.f32 %v826, %v835
  %v838 = vmul.f32 %v828, %v836
  %v839 = vpack.c.bf16 %v837, %v837
  %v840 = vpack.c.bf16 %v838, %v838
  %v841 = vpack.c.bf16 %v715, %v715
  %v842 = vpack.c.bf16 %v718, %v718
  %v844 = vsel %vm431, %v839, 0
  %v847 = vsel %vm461, %v841, 0
  %849 = vmatprep.subr.bf16.mxu0 0
  %850 = vmatpush1.bf16.msra.mxu0 %v847
  %851 = vmatprep.subr.bf16.mxu0 0
  %852 = vmatpush1.bf16.msra.mxu0 0
  %853 = vmatprep.subr.bf16.mxu0 0
  %854 = vmatpush1.bf16.msra.mxu0 0
  %855 = vmatprep.subr.bf16.mxu0 0
  %856 = vmatpush1.bf16.msra.mxu0 0
  %857 = vmatprep.subr.bf16.mxu0 0
  %858 = vmatpush1.bf16.msra.mxu0 0
  %859 = vmatprep.subr.bf16.mxu0 0
  %860 = vmatpush1.bf16.msra.mxu0 0
  %861 = vmatprep.subr.bf16.mxu0 0
  %862 = vmatpush1.bf16.msra.mxu0 0
  %863 = vmatprep.subr.bf16.mxu0 0
  %864 = vmatpush1.bf16.msra.mxu0 0
  %865 = vmatprep.subr.bf16.mxu0 0
  %866 = vmatpush1.bf16.msra.mxu0 0
  %867 = vmatprep.subr.bf16.mxu0 0
  %868 = vmatpush1.bf16.msra.mxu0 0
  %869 = vmatprep.subr.bf16.mxu0 0
  %870 = vmatpush1.bf16.msra.mxu0 0
  %871 = vmatprep.subr.bf16.mxu0 0
  %872 = vmatpush1.bf16.msra.mxu0 0
  %873 = vmatprep.subr.bf16.mxu0 0
  %874 = vmatpush1.bf16.msra.mxu0 0
  %875 = vmatprep.subr.bf16.mxu0 0
  %876 = vmatpush1.bf16.msra.mxu0 0
  %877 = vmatprep.subr.bf16.mxu0 0
  %878 = vmatpush1.bf16.msra.mxu0 0
  %879 = vmatprep.subr.bf16.mxu0 0
  %880 = vmatpush1.bf16.msra.mxu0 0
  %881 = vmatprep.mubr.bf16.mxu0 0
  %882 = vmatmul.mubr.bf16.gmra.mrb[0].mxu0 %v844
  %v883 = vpop.f32.mrb[0].mxu0
  %v884 = vadd.f32 0.0, %v883
  %v885 = vpop.f32.mrb[0].mxu0
  %v886 = vpop.f32.mrb[0].mxu0
  %v887 = vpop.f32.mrb[0].mxu0
  %888 = vdwg.mxu0
  %v890 = vsel %vm431, %v840, 0
  %v893 = vsel %vm461, %v842, 0
  %895 = vmatprep.subr.bf16.mxu0 0
  %896 = vmatpush1.bf16.msra.mxu0 %v893
  %897 = vmatprep.subr.bf16.mxu0 0
  %898 = vmatpush1.bf16.msra.mxu0 0
  %899 = vmatprep.subr.bf16.mxu0 0
  %900 = vmatpush1.bf16.msra.mxu0 0
  %901 = vmatprep.subr.bf16.mxu0 0
  %902 = vmatpush1.bf16.msra.mxu0 0
  %903 = vmatprep.subr.bf16.mxu0 0
  %904 = vmatpush1.bf16.msra.mxu0 0
  %905 = vmatprep.subr.bf16.mxu0 0
  %906 = vmatpush1.bf16.msra.mxu0 0
  %907 = vmatprep.subr.bf16.mxu0 0
  %908 = vmatpush1.bf16.msra.mxu0 0
  %909 = vmatprep.subr.bf16.mxu0 0
  %910 = vmatpush1.bf16.msra.mxu0 0
  %911 = vmatprep.subr.bf16.mxu0 0
  %912 = vmatpush1.bf16.msra.mxu0 0
  %913 = vmatprep.subr.bf16.mxu0 0
  %914 = vmatpush1.bf16.msra.mxu0 0
  %915 = vmatprep.subr.bf16.mxu0 0
  %916 = vmatpush1.bf16.msra.mxu0 0
  %917 = vmatprep.subr.bf16.mxu0 0
  %918 = vmatpush1.bf16.msra.mxu0 0
  %919 = vmatprep.subr.bf16.mxu0 0
  %920 = vmatpush1.bf16.msra.mxu0 0
  %921 = vmatprep.subr.bf16.mxu0 0
  %922 = vmatpush1.bf16.msra.mxu0 0
  %923 = vmatprep.subr.bf16.mxu0 0
  %924 = vmatpush1.bf16.msra.mxu0 0
  %925 = vmatprep.subr.bf16.mxu0 0
  %926 = vmatpush1.bf16.msra.mxu0 0
  %927 = vmatprep.mubr.bf16.mxu0 0
  %928 = vmatmul.mubr.bf16.gmra.mrb[0].mxu0 %v890
  %v929 = vpop.f32.mrb[0].mxu0
  %v930 = vadd.f32 0.0, %v929
  %v931 = vpop.f32.mrb[0].mxu0
  %v932 = vpop.f32.mrb[0].mxu0
  %v933 = vpop.f32.mrb[0].mxu0
  %934 = vdwg.mxu0
  %v935 = vpack.c.bf16 %v930, %v884
  %v936 = vpack.c.bf16 %v162, %v161
  %v938 = vsel %vm338, %v935, 0
  %940 = vmatprep.subr.bf16.mxu0 0
  %941 = vmatpush1.bf16.msra.mxu0 %v936
  %942 = vmatprep.subr.bf16.mxu0 0
  %943 = vmatpush1.bf16.msra.mxu0 0
  %944 = vmatprep.subr.bf16.mxu0 0
  %945 = vmatpush1.bf16.msra.mxu0 0
  %946 = vmatprep.subr.bf16.mxu0 0
  %947 = vmatpush1.bf16.msra.mxu0 0
  %948 = vmatprep.subr.bf16.mxu0 0
  %949 = vmatpush1.bf16.msra.mxu0 0
  %950 = vmatprep.subr.bf16.mxu0 0
  %951 = vmatpush1.bf16.msra.mxu0 0
  %952 = vmatprep.subr.bf16.mxu0 0
  %953 = vmatpush1.bf16.msra.mxu0 0
  %954 = vmatprep.subr.bf16.mxu0 0
  %955 = vmatpush1.bf16.msra.mxu0 0
  %956 = vmatprep.subr.bf16.mxu0 0
  %957 = vmatpush1.bf16.msra.mxu0 0
  %958 = vmatprep.subr.bf16.mxu0 0
  %959 = vmatpush1.bf16.msra.mxu0 0
  %960 = vmatprep.subr.bf16.mxu0 0
  %961 = vmatpush1.bf16.msra.mxu0 0
  %962 = vmatprep.subr.bf16.mxu0 0
  %963 = vmatpush1.bf16.msra.mxu0 0
  %964 = vmatprep.subr.bf16.mxu0 0
  %965 = vmatpush1.bf16.msra.mxu0 0
  %966 = vmatprep.subr.bf16.mxu0 0
  %967 = vmatpush1.bf16.msra.mxu0 0
  %968 = vmatprep.subr.bf16.mxu0 0
  %969 = vmatpush1.bf16.msra.mxu0 0
  %970 = vmatprep.subr.bf16.mxu0 0
  %971 = vmatpush1.bf16.msra.mxu0 0
  %972 = vmatprep.mubr.bf16.mxu0 0
  %973 = vmatmul.mubr.bf16.gmra.mrb[0].mxu0 %v938
  %v974 = vpop.f32.mrb[0].mxu0
  %v975 = vadd.f32 0.0, %v974
  %v976 = vpop.f32.mrb[0].mxu0
  %v977 = vpop.f32.mrb[0].mxu0
  %v978 = vadd.f32 0.0, %v977
  %v979 = vpop.f32.mrb[0].mxu0
  %980 = vdwg.mxu0
  %v982 = vsel %vm338, %v551, 0
  %984 = vmatprep.subr.bf16.mxu0 0
  %985 = vmatpush1.bf16.msra.mxu0 %v552
  %986 = vmatprep.subr.bf16.mxu0 0
  %987 = vmatpush1.bf16.msra.mxu0 0
  %988 = vmatprep.subr.bf16.mxu0 0
  %989 = vmatpush1.bf16.msra.mxu0 0
  %990 = vmatprep.subr.bf16.mxu0 0
  %991 = vmatpush1.bf16.msra.mxu0 0
  %992 = vmatprep.subr.bf16.mxu0 0
  %993 = vmatpush1.bf16.msra.mxu0 0
  %994 = vmatprep.subr.bf16.mxu0 0
  %995 = vmatpush1.bf16.msra.mxu0 0
  %996 = vmatprep.subr.bf16.mxu0 0
  %997 = vmatpush1.bf16.msra.mxu0 0
  %998 = vmatprep.subr.bf16.mxu0 0
  %999 = vmatpush1.bf16.msra.mxu0 0
  %1000 = vmatprep.subr.bf16.mxu0 0
  %1001 = vmatpush1.bf16.msra.mxu0 0
  %1002 = vmatprep.subr.bf16.mxu0 0
  %1003 = vmatpush1.bf16.msra.mxu0 0
  %1004 = vmatprep.subr.bf16.mxu0 0
  %1005 = vmatpush1.bf16.msra.mxu0 0
  %1006 = vmatprep.subr.bf16.mxu0 0
  %1007 = vmatpush1.bf16.msra.mxu0 0
  %1008 = vmatprep.subr.bf16.mxu0 0
  %1009 = vmatpush1.bf16.msra.mxu0 0
  %1010 = vmatprep.subr.bf16.mxu0 0
  %1011 = vmatpush1.bf16.msra.mxu0 0
  %1012 = vmatprep.subr.bf16.mxu0 0
  %1013 = vmatpush1.bf16.msra.mxu0 0
  %1014 = vmatprep.subr.bf16.mxu0 0
  %1015 = vmatpush1.bf16.msra.mxu0 0
  %1016 = vmatprep.mubr.bf16.mxu0 0
  %1017 = vmatmul.mubr.bf16.gmra.mrb[0].mxu0 %v982
  %v1018 = vpop.f32.mrb[0].mxu0
  %v1019 = vadd.f32 %v975, %v1018
  %v1020 = vpop.f32.mrb[0].mxu0
  %v1021 = vpop.f32.mrb[0].mxu0
  %v1022 = vadd.f32 %v978, %v1021
  %v1023 = vpop.f32.mrb[0].mxu0
  %1024 = vdwg.mxu0
  %v1025 = vld [vmem:[%s17] sm:$0x1]
  %v1027 = vlaneseq
  %v1028 = vshrl.u32 %v1027, 7
  %v1029 = vsub.s32 0, %v1028
  %v1030 = vrot.slane %v1025, %v1029
  %v1032 = vadd.f32 %v1019, %v1030
  %v1033 = vadd.f32 %v1022, %v1030
  %v1034 = vadd.f32 %v155, %v1032
  %v1035 = vadd.f32 %v156, %v1033
  %v1036 = vsel %vm177, %v1034, 0.0
  %1037 = vadd.xlane.f32.xlu0 %v1036
  %v1038 = vpop.xlane.xlu0 %1037
  %v1039 = vsel %vm177, %v1035, 0.0
  %1040 = vadd.xlane.f32.xlu0 %v1039
  %v1041 = vpop.xlane.xlu0 %1040
  %v1042 = vrcp.pop 32.0
  %v1043 = vmul.f32 %v1038, %v1042
  %v1044 = vmul.f32 %v1041, %v1042
  %v1045 = vsub.f32 %v1034, %v1043
  %v1046 = vsub.f32 %v1035, %v1044
  %v1047 = vmul.f32 %v1045, %v1045
  %v1048 = vmul.f32 %v1046, %v1046
  %v1049 = vsel %vm177, %v1047, 0.0
  %1050 = vadd.xlane.f32.xlu0 %v1049
  %v1051 = vpop.xlane.xlu0 %1050
  %v1052 = vsel %vm177, %v1048, 0.0
  %1053 = vadd.xlane.f32.xlu0 %v1052
  %v1054 = vpop.xlane.xlu0 %1053
  %v1055 = vmul.f32 %v1051, %v1042
  %v1056 = vmul.f32 %v1054, %v1042
  %v1057 = vadd.f32 %v1055, 1e-05
  %v1058 = vadd.f32 %v1056, 1e-05
  %v1059 = vrsqrt.pop %v1057
  %v1060 = vrsqrt.pop %v1058
  %v1061 = vmul.f32 %v1045, %v1059
  %v1062 = vmul.f32 %v1046, %v1060
  %v1063 = vld [vmem:[%s19] sm:$0x1]
  %v1065 = vlaneseq
  %v1066 = vshrl.u32 %v1065, 7
  %v1067 = vsub.s32 0, %v1066
  %v1068 = vrot.slane %v1063, %v1067
  %v1070 = vmul.f32 %v1061, %v1068
  %v1071 = vmul.f32 %v1062, %v1068
  %v1072 = vld [vmem:[%s21] sm:$0x1]
  %v1074 = vlaneseq
  %v1075 = vshrl.u32 %v1074, 7
  %v1076 = vsub.s32 0, %v1075
  %v1077 = vrot.slane %v1072, %v1076
  %v1079 = vadd.f32 %v1070, %v1077
  %v1080 = vadd.f32 %v1071, %v1077
  %v1081 = vld [vmem:[%s23] sm:$0xff]
  %v1082 = vld [vmem:[%s23 + $0x8] sm:$0xff]
  %v1083 = vld [vmem:[%s23 + $0x10] sm:$0xff]
  %v1084 = vld [vmem:[%s23 + $0x18] sm:$0xff]
  %v1085 = vld [vmem:[%s25] sm:$0x1]
  %v1086 = vpack.c.bf16 %v1080, %v1079
  %v1087 = vpack.c.bf16 %v1082, %v1081
  %v1088 = vpack.c.bf16 %v1084, %v1083
  %v1090 = vlaneseq
  %v1091 = vshrl.u32 %v1090, 7
  %v1092 = vsub.s32 0, %v1091
  %v1093 = vrot.slane %v1085, %v1092
  %v1096 = vsel %vm177, %v1086, 0
  %1098 = vmatprep.subr.bf16.mxu0 0
  %1099 = vmatpush1.bf16.msra.mxu0 %v1087
  %1100 = vmatprep.subr.bf16.mxu0 0
  %1101 = vmatpush1.bf16.msra.mxu0 %v1088
  %1102 = vmatprep.subr.bf16.mxu0 0
  %1103 = vmatpush1.bf16.msra.mxu0 0
  %1104 = vmatprep.subr.bf16.mxu0 0
  %1105 = vmatpush1.bf16.msra.mxu0 0
  %1106 = vmatprep.subr.bf16.mxu0 0
  %1107 = vmatpush1.bf16.msra.mxu0 0
  %1108 = vmatprep.subr.bf16.mxu0 0
  %1109 = vmatpush1.bf16.msra.mxu0 0
  %1110 = vmatprep.subr.bf16.mxu0 0
  %1111 = vmatpush1.bf16.msra.mxu0 0
  %1112 = vmatprep.subr.bf16.mxu0 0
  %1113 = vmatpush1.bf16.msra.mxu0 0
  %1114 = vmatprep.subr.bf16.mxu0 0
  %1115 = vmatpush1.bf16.msra.mxu0 0
  %1116 = vmatprep.subr.bf16.mxu0 0
  %1117 = vmatpush1.bf16.msra.mxu0 0
  %1118 = vmatprep.subr.bf16.mxu0 0
  %1119 = vmatpush1.bf16.msra.mxu0 0
  %1120 = vmatprep.subr.bf16.mxu0 0
  %1121 = vmatpush1.bf16.msra.mxu0 0
  %1122 = vmatprep.subr.bf16.mxu0 0
  %1123 = vmatpush1.bf16.msra.mxu0 0
  %1124 = vmatprep.subr.bf16.mxu0 0
  %1125 = vmatpush1.bf16.msra.mxu0 0
  %1126 = vmatprep.subr.bf16.mxu0 0
  %1127 = vmatpush1.bf16.msra.mxu0 0
  %1128 = vmatprep.subr.bf16.mxu0 0
  %1129 = vmatpush1.bf16.msra.mxu0 0
  %1130 = vmatprep.mubr.bf16.mxu0 0
  %1131 = vmatmul.mubr.bf16.gmra.mrb[0].mxu0 %v1096
  %v1132 = vpop.f32.mrb[0].mxu0
  %v1133 = vadd.f32 %v1093, %v1132
  %v1134 = vpop.f32.mrb[0].mxu0
  %v1135 = vpop.f32.mrb[0].mxu0
  %v1136 = vadd.f32 %v1093, %v1135
  %v1137 = vpop.f32.mrb[0].mxu0
  %1138 = vdwg.mxu0
  %v1139 = vmax.f32 %v1133, 0.0
  %v1140 = vmax.f32 %v1136, 0.0
  %v1141 = vld [vmem:[%s27] sm:$0xff]
  %v1142 = vld [vmem:[%s27 + $0x8] sm:$0xff]
  %v1143 = vld [vmem:[%s27 + $0x10] sm:$0xff]
  %v1144 = vld [vmem:[%s27 + $0x18] sm:$0xff]
  %v1145 = vld [vmem:[%s27 + $0x20] sm:$0xff]
  %v1146 = vld [vmem:[%s27 + $0x28] sm:$0xff]
  %v1147 = vld [vmem:[%s27 + $0x30] sm:$0xff]
  %v1148 = vld [vmem:[%s27 + $0x38] sm:$0xff]
  %v1149 = vld [vmem:[%s29] sm:$0x1]
  %v1150 = vpack.c.bf16 %v1140, %v1139
  %v1151 = vpack.c.bf16 %v1142, %v1141
  %v1152 = vpack.c.bf16 %v1144, %v1143
  %v1153 = vpack.c.bf16 %v1146, %v1145
  %v1154 = vpack.c.bf16 %v1148, %v1147
  %v1156 = vlaneseq
  %v1157 = vshrl.u32 %v1156, 7
  %v1158 = vsub.s32 0, %v1157
  %v1159 = vrot.slane %v1149, %v1158
  %vm1161 = vcmask 523264
  %v1163 = vsel %vm1161, %v1150, 0
  %1165 = vmatprep.subr.bf16.mxu0 0
  %1166 = vmatpush1.bf16.msra.mxu0 %v1151
  %1167 = vmatprep.subr.bf16.mxu0 0
  %1168 = vmatpush1.bf16.msra.mxu0 %v1152
  %1169 = vmatprep.subr.bf16.mxu0 0
  %1170 = vmatpush1.bf16.msra.mxu0 %v1153
  %1171 = vmatprep.subr.bf16.mxu0 0
  %1172 = vmatpush1.bf16.msra.mxu0 %v1154
  %1173 = vmatprep.subr.bf16.mxu0 0
  %1174 = vmatpush1.bf16.msra.mxu0 0
  %1175 = vmatprep.subr.bf16.mxu0 0
  %1176 = vmatpush1.bf16.msra.mxu0 0
  %1177 = vmatprep.subr.bf16.mxu0 0
  %1178 = vmatpush1.bf16.msra.mxu0 0
  %1179 = vmatprep.subr.bf16.mxu0 0
  %1180 = vmatpush1.bf16.msra.mxu0 0
  %1181 = vmatprep.subr.bf16.mxu0 0
  %1182 = vmatpush1.bf16.msra.mxu0 0
  %1183 = vmatprep.subr.bf16.mxu0 0
  %1184 = vmatpush1.bf16.msra.mxu0 0
  %1185 = vmatprep.subr.bf16.mxu0 0
  %1186 = vmatpush1.bf16.msra.mxu0 0
  %1187 = vmatprep.subr.bf16.mxu0 0
  %1188 = vmatpush1.bf16.msra.mxu0 0
  %1189 = vmatprep.subr.bf16.mxu0 0
  %1190 = vmatpush1.bf16.msra.mxu0 0
  %1191 = vmatprep.subr.bf16.mxu0 0
  %1192 = vmatpush1.bf16.msra.mxu0 0
  %1193 = vmatprep.subr.bf16.mxu0 0
  %1194 = vmatpush1.bf16.msra.mxu0 0
  %1195 = vmatprep.subr.bf16.mxu0 0
  %1196 = vmatpush1.bf16.msra.mxu0 0
  %1197 = vmatprep.mubr.bf16.mxu0 0
  %1198 = vmatmul.mubr.bf16.gmra.mrb[0].mxu0 %v1163
  %v1199 = vpop.f32.mrb[0].mxu0
  %v1200 = vadd.f32 %v1159, %v1199
  %v1201 = vpop.f32.mrb[0].mxu0
  %v1202 = vpop.f32.mrb[0].mxu0
  %v1203 = vadd.f32 %v1159, %v1202
  %v1204 = vpop.f32.mrb[0].mxu0
  %1205 = vdwg.mxu0
  %v1206 = vadd.f32 %v1079, %v1200
  %v1207 = vadd.f32 %v1080, %v1203
  %v1208 = vsel %vm177, %v1206, 0.0
  %1209 = vadd.xlane.f32.xlu0 %v1208
  %v1210 = vpop.xlane.xlu0 %1209
  %v1211 = vsel %vm177, %v1207, 0.0
  %1212 = vadd.xlane.f32.xlu0 %v1211
  %v1213 = vpop.xlane.xlu0 %1212
  %v1214 = vmul.f32 %v1210, %v1042
  %v1215 = vmul.f32 %v1213, %v1042
  %v1216 = vsub.f32 %v1206, %v1214
  %v1217 = vsub.f32 %v1207, %v1215
  %v1218 = vmul.f32 %v1216, %v1216
  %v1219 = vmul.f32 %v1217, %v1217
  %v1220 = vsel %vm177, %v1218, 0.0
  %1221 = vadd.xlane.f32.xlu0 %v1220
  %v1222 = vpop.xlane.xlu0 %1221
  %v1223 = vsel %vm177, %v1219, 0.0
  %1224 = vadd.xlane.f32.xlu0 %v1223
  %v1225 = vpop.xlane.xlu0 %1224
  %v1226 = vmul.f32 %v1222, %v1042
  %v1227 = vmul.f32 %v1225, %v1042
  %v1228 = vadd.f32 %v1226, 1e-05
  %v1229 = vadd.f32 %v1227, 1e-05
  %v1230 = vrsqrt.pop %v1228
  %v1231 = vrsqrt.pop %v1229
  %v1232 = vmul.f32 %v1216, %v1230
  %v1233 = vmul.f32 %v1217, %v1231
  %v1234 = vld [vmem:[%s31] sm:$0x1]
  %v1236 = vlaneseq
  %v1237 = vshrl.u32 %v1236, 7
  %v1238 = vsub.s32 0, %v1237
  %v1239 = vrot.slane %v1234, %v1238
  %v1241 = vmul.f32 %v1232, %v1239
  %v1242 = vmul.f32 %v1233, %v1239
  %v1243 = vld [vmem:[%s33] sm:$0x1]
  %v1245 = vlaneseq
  %v1246 = vshrl.u32 %v1245, 7
  %v1247 = vsub.s32 0, %v1246
  %v1248 = vrot.slane %v1243, %v1247
  %v1250 = vadd.f32 %v1241, %v1248
  %v1251 = vadd.f32 %v1242, %v1248
  %v1252 = vld [vmem:[%s3] sm:$0xff]
  %v1253 = vld [vmem:[%s3 + $0x8] sm:$0xff]
  %v1254 = vld [vmem:[%s7] sm:$0xff]
  %v1255 = vld [vmem:[%s7 + $0x8] sm:$0xff]
  %v1256 = vld [vmem:[%s39] sm:$0xff]
  %v1257 = vld [vmem:[%s39 + $0x8] sm:$0xff]
  %v1258 = vld [vmem:[%s39 + $0x10] sm:$0xff]
  %v1259 = vld [vmem:[%s39 + $0x18] sm:$0xff]
  %v1260 = vld [vmem:[%s35] sm:$0xff]
  %v1261 = vld [vmem:[%s35 + $0x8] sm:$0xff]
  %v1262 = vld [vmem:[%s35 + $0x10] sm:$0xff]
  %v1263 = vld [vmem:[%s35 + $0x18] sm:$0xff]
  %v1264 = vld [vmem:[%s37] sm:$0x1]
  %v1265 = vpack.c.bf16 %v1253, %v1252
  %v1266 = vpack.c.bf16 %v1261, %v1260
  %v1267 = vpack.c.bf16 %v1263, %v1262
  %v1269 = vlaneseq
  %v1270 = vshrl.u32 %v1269, 7
  %v1271 = vsub.s32 0, %v1270
  %v1272 = vrot.slane %v1264, %v1271
  %v1275 = vsel %vm177, %v1265, 0
  %1277 = vmatprep.subr.bf16.mxu0 0
  %1278 = vmatpush1.bf16.msra.mxu0 %v1266
  %1279 = vmatprep.subr.bf16.mxu0 0
  %1280 = vmatpush1.bf16.msra.mxu0 %v1267
  %1281 = vmatprep.subr.bf16.mxu0 0
  %1282 = vmatpush1.bf16.msra.mxu0 0
  %1283 = vmatprep.subr.bf16.mxu0 0
  %1284 = vmatpush1.bf16.msra.mxu0 0
  %1285 = vmatprep.subr.bf16.mxu0 0
  %1286 = vmatpush1.bf16.msra.mxu0 0
  %1287 = vmatprep.subr.bf16.mxu0 0
  %1288 = vmatpush1.bf16.msra.mxu0 0
  %1289 = vmatprep.subr.bf16.mxu0 0
  %1290 = vmatpush1.bf16.msra.mxu0 0
  %1291 = vmatprep.subr.bf16.mxu0 0
  %1292 = vmatpush1.bf16.msra.mxu0 0
  %1293 = vmatprep.subr.bf16.mxu0 0
  %1294 = vmatpush1.bf16.msra.mxu0 0
  %1295 = vmatprep.subr.bf16.mxu0 0
  %1296 = vmatpush1.bf16.msra.mxu0 0
  %1297 = vmatprep.subr.bf16.mxu0 0
  %1298 = vmatpush1.bf16.msra.mxu0 0
  %1299 = vmatprep.subr.bf16.mxu0 0
  %1300 = vmatpush1.bf16.msra.mxu0 0
  %1301 = vmatprep.subr.bf16.mxu0 0
  %1302 = vmatpush1.bf16.msra.mxu0 0
  %1303 = vmatprep.subr.bf16.mxu0 0
  %1304 = vmatpush1.bf16.msra.mxu0 0
  %1305 = vmatprep.subr.bf16.mxu0 0
  %1306 = vmatpush1.bf16.msra.mxu0 0
  %1307 = vmatprep.subr.bf16.mxu0 0
  %1308 = vmatpush1.bf16.msra.mxu0 0
  %1309 = vmatprep.mubr.bf16.mxu0 0
  %1310 = vmatmul.mubr.bf16.gmra.mrb[0].mxu0 %v1275
  %v1311 = vpop.f32.mrb[0].mxu0
  %v1312 = vadd.f32 %v1272, %v1311
  %v1313 = vpop.f32.mrb[0].mxu0
  %v1314 = vpop.f32.mrb[0].mxu0
  %v1315 = vadd.f32 %v1272, %v1314
  %v1316 = vpop.f32.mrb[0].mxu0
  %1317 = vdwg.mxu0
  %s1318 = scalar_lea.vmem %s35, 64
  %v1319 = vld [vmem:[%s1318] sm:$0xff]
  %v1320 = vld [vmem:[%s1318 + $0x8] sm:$0xff]
  %v1321 = vld [vmem:[%s1318 + $0x10] sm:$0xff]
  %v1322 = vld [vmem:[%s1318 + $0x18] sm:$0xff]
  %s1323 = scalar_lea.vmem %s37, 2
  %v1324 = vld [vmem:[%s1323] sm:$0x1]
  %v1325 = vpack.c.bf16 %v1320, %v1319
  %v1326 = vpack.c.bf16 %v1322, %v1321
  %v1328 = vlaneseq
  %v1329 = vshrl.u32 %v1328, 7
  %v1330 = vsub.s32 0, %v1329
  %v1331 = vrot.slane %v1324, %v1330
  %1333 = vmatprep.subr.bf16.mxu0 0
  %1334 = vmatpush1.bf16.msra.mxu0 %v1325
  %1335 = vmatprep.subr.bf16.mxu0 0
  %1336 = vmatpush1.bf16.msra.mxu0 %v1326
  %1337 = vmatprep.subr.bf16.mxu0 0
  %1338 = vmatpush1.bf16.msra.mxu0 0
  %1339 = vmatprep.subr.bf16.mxu0 0
  %1340 = vmatpush1.bf16.msra.mxu0 0
  %1341 = vmatprep.subr.bf16.mxu0 0
  %1342 = vmatpush1.bf16.msra.mxu0 0
  %1343 = vmatprep.subr.bf16.mxu0 0
  %1344 = vmatpush1.bf16.msra.mxu0 0
  %1345 = vmatprep.subr.bf16.mxu0 0
  %1346 = vmatpush1.bf16.msra.mxu0 0
  %1347 = vmatprep.subr.bf16.mxu0 0
  %1348 = vmatpush1.bf16.msra.mxu0 0
  %1349 = vmatprep.subr.bf16.mxu0 0
  %1350 = vmatpush1.bf16.msra.mxu0 0
  %1351 = vmatprep.subr.bf16.mxu0 0
  %1352 = vmatpush1.bf16.msra.mxu0 0
  %1353 = vmatprep.subr.bf16.mxu0 0
  %1354 = vmatpush1.bf16.msra.mxu0 0
  %1355 = vmatprep.subr.bf16.mxu0 0
  %1356 = vmatpush1.bf16.msra.mxu0 0
  %1357 = vmatprep.subr.bf16.mxu0 0
  %1358 = vmatpush1.bf16.msra.mxu0 0
  %1359 = vmatprep.subr.bf16.mxu0 0
  %1360 = vmatpush1.bf16.msra.mxu0 0
  %1361 = vmatprep.subr.bf16.mxu0 0
  %1362 = vmatpush1.bf16.msra.mxu0 0
  %1363 = vmatprep.subr.bf16.mxu0 0
  %1364 = vmatpush1.bf16.msra.mxu0 0
  %1365 = vmatprep.mubr.bf16.mxu0 0
  %1366 = vmatmul.mubr.bf16.gmra.mrb[0].mxu0 %v1275
  %v1367 = vpop.f32.mrb[0].mxu0
  %v1368 = vadd.f32 %v1331, %v1367
  %v1369 = vpop.f32.mrb[0].mxu0
  %v1370 = vpop.f32.mrb[0].mxu0
  %v1371 = vadd.f32 %v1331, %v1370
  %v1372 = vpop.f32.mrb[0].mxu0
  %1373 = vdwg.mxu0
  %s1374 = scalar_lea.vmem %s35, 128
  %v1375 = vld [vmem:[%s1374] sm:$0xff]
  %v1376 = vld [vmem:[%s1374 + $0x8] sm:$0xff]
  %v1377 = vld [vmem:[%s1374 + $0x10] sm:$0xff]
  %v1378 = vld [vmem:[%s1374 + $0x18] sm:$0xff]
  %s1379 = scalar_lea.vmem %s37, 4
  %v1380 = vld [vmem:[%s1379] sm:$0x1]
  %v1381 = vpack.c.bf16 %v1376, %v1375
  %v1382 = vpack.c.bf16 %v1378, %v1377
  %v1384 = vlaneseq
  %v1385 = vshrl.u32 %v1384, 7
  %v1386 = vsub.s32 0, %v1385
  %v1387 = vrot.slane %v1380, %v1386
  %1389 = vmatprep.subr.bf16.mxu0 0
  %1390 = vmatpush1.bf16.msra.mxu0 %v1381
  %1391 = vmatprep.subr.bf16.mxu0 0
  %1392 = vmatpush1.bf16.msra.mxu0 %v1382
  %1393 = vmatprep.subr.bf16.mxu0 0
  %1394 = vmatpush1.bf16.msra.mxu0 0
  %1395 = vmatprep.subr.bf16.mxu0 0
  %1396 = vmatpush1.bf16.msra.mxu0 0
  %1397 = vmatprep.subr.bf16.mxu0 0
  %1398 = vmatpush1.bf16.msra.mxu0 0
  %1399 = vmatprep.subr.bf16.mxu0 0
  %1400 = vmatpush1.bf16.msra.mxu0 0
  %1401 = vmatprep.subr.bf16.mxu0 0
  %1402 = vmatpush1.bf16.msra.mxu0 0
  %1403 = vmatprep.subr.bf16.mxu0 0
  %1404 = vmatpush1.bf16.msra.mxu0 0
  %1405 = vmatprep.subr.bf16.mxu0 0
  %1406 = vmatpush1.bf16.msra.mxu0 0
  %1407 = vmatprep.subr.bf16.mxu0 0
  %1408 = vmatpush1.bf16.msra.mxu0 0
  %1409 = vmatprep.subr.bf16.mxu0 0
  %1410 = vmatpush1.bf16.msra.mxu0 0
  %1411 = vmatprep.subr.bf16.mxu0 0
  %1412 = vmatpush1.bf16.msra.mxu0 0
  %1413 = vmatprep.subr.bf16.mxu0 0
  %1414 = vmatpush1.bf16.msra.mxu0 0
  %1415 = vmatprep.subr.bf16.mxu0 0
  %1416 = vmatpush1.bf16.msra.mxu0 0
  %1417 = vmatprep.subr.bf16.mxu0 0
  %1418 = vmatpush1.bf16.msra.mxu0 0
  %1419 = vmatprep.subr.bf16.mxu0 0
  %1420 = vmatpush1.bf16.msra.mxu0 0
  %1421 = vmatprep.mubr.bf16.mxu0 0
  %1422 = vmatmul.mubr.bf16.gmra.mrb[0].mxu0 %v1275
  %v1423 = vpop.f32.mrb[0].mxu0
  %v1424 = vadd.f32 %v1387, %v1423
  %v1425 = vpop.f32.mrb[0].mxu0
  %v1426 = vpop.f32.mrb[0].mxu0
  %v1427 = vadd.f32 %v1387, %v1426
  %v1428 = vpop.f32.mrb[0].mxu0
  %1429 = vdwg.mxu0
  %v1430 = vpack.c.bf16 %v1312, %v1312
  %v1431 = vpack.c.bf16 %v1315, %v1315
  %v1432 = vpack.c.bf16 %v1368, %v1368
  %v1433 = vpack.c.bf16 %v1371, %v1371
  %v1435 = vsel %vm338, %v1430, 0
  %v1438 = vsel %vm338, %v1432, 0
  %1440 = vmatprep.subr.bf16.mxu0 0
  %1441 = vmatpush1.bf16.xpose.msra.mxu0 %v1438
  %1442 = vmatprep.subr.bf16.mxu0 0
  %1443 = vmatpush1.bf16.xpose.msra.mxu0 0
  %1444 = vmatprep.subr.bf16.mxu0 0
  %1445 = vmatpush1.bf16.xpose.msra.mxu0 0
  %1446 = vmatprep.subr.bf16.mxu0 0
  %1447 = vmatpush1.bf16.xpose.msra.mxu0 0
  %1448 = vmatprep.subr.bf16.mxu0 0
  %1449 = vmatpush1.bf16.xpose.msra.mxu0 0
  %1450 = vmatprep.subr.bf16.mxu0 0
  %1451 = vmatpush1.bf16.xpose.msra.mxu0 0
  %1452 = vmatprep.subr.bf16.mxu0 0
  %1453 = vmatpush1.bf16.xpose.msra.mxu0 0
  %1454 = vmatprep.subr.bf16.mxu0 0
  %1455 = vmatpush1.bf16.xpose.msra.mxu0 0
  %1456 = vmatprep.subr.bf16.mxu0 0
  %1457 = vmatpush1.bf16.xpose.msra.mxu0 0
  %1458 = vmatprep.subr.bf16.mxu0 0
  %1459 = vmatpush1.bf16.xpose.msra.mxu0 0
  %1460 = vmatprep.subr.bf16.mxu0 0
  %1461 = vmatpush1.bf16.xpose.msra.mxu0 0
  %1462 = vmatprep.subr.bf16.mxu0 0
  %1463 = vmatpush1.bf16.xpose.msra.mxu0 0
  %1464 = vmatprep.subr.bf16.mxu0 0
  %1465 = vmatpush1.bf16.xpose.msra.mxu0 0
  %1466 = vmatprep.subr.bf16.mxu0 0
  %1467 = vmatpush1.bf16.xpose.msra.mxu0 0
  %1468 = vmatprep.subr.bf16.mxu0 0
  %1469 = vmatpush1.bf16.xpose.msra.mxu0 0
  %1470 = vmatprep.subr.bf16.mxu0 0
  %1471 = vmatpush1.bf16.xpose.msra.mxu0 0
  %1472 = vmatprep.mubr.bf16.mxu0 0
  %1473 = vmatmul.mubr.bf16.gmra.mrb[0].mxu0 %v1435
  %v1474 = vpop.f32.mrb[0].mxu0
  %v1475 = vadd.f32 %v1254, %v1474
  %v1476 = vpop.f32.mrb[0].mxu0
  %v1477 = vpop.f32.mrb[0].mxu0
  %v1478 = vpop.f32.mrb[0].mxu0
  %1479 = vdwg.mxu0
  %v1481 = vsel %vm338, %v1431, 0
  %v1484 = vsel %vm338, %v1433, 0
  %1486 = vmatprep.subr.bf16.mxu0 0
  %1487 = vmatpush1.bf16.xpose.msra.mxu0 %v1484
  %1488 = vmatprep.subr.bf16.mxu0 0
  %1489 = vmatpush1.bf16.xpose.msra.mxu0 0
  %1490 = vmatprep.subr.bf16.mxu0 0
  %1491 = vmatpush1.bf16.xpose.msra.mxu0 0
  %1492 = vmatprep.subr.bf16.mxu0 0
  %1493 = vmatpush1.bf16.xpose.msra.mxu0 0
  %1494 = vmatprep.subr.bf16.mxu0 0
  %1495 = vmatpush1.bf16.xpose.msra.mxu0 0
  %1496 = vmatprep.subr.bf16.mxu0 0
  %1497 = vmatpush1.bf16.xpose.msra.mxu0 0
  %1498 = vmatprep.subr.bf16.mxu0 0
  %1499 = vmatpush1.bf16.xpose.msra.mxu0 0
  %1500 = vmatprep.subr.bf16.mxu0 0
  %1501 = vmatpush1.bf16.xpose.msra.mxu0 0
  %1502 = vmatprep.subr.bf16.mxu0 0
  %1503 = vmatpush1.bf16.xpose.msra.mxu0 0
  %1504 = vmatprep.subr.bf16.mxu0 0
  %1505 = vmatpush1.bf16.xpose.msra.mxu0 0
  %1506 = vmatprep.subr.bf16.mxu0 0
  %1507 = vmatpush1.bf16.xpose.msra.mxu0 0
  %1508 = vmatprep.subr.bf16.mxu0 0
  %1509 = vmatpush1.bf16.xpose.msra.mxu0 0
  %1510 = vmatprep.subr.bf16.mxu0 0
  %1511 = vmatpush1.bf16.xpose.msra.mxu0 0
  %1512 = vmatprep.subr.bf16.mxu0 0
  %1513 = vmatpush1.bf16.xpose.msra.mxu0 0
  %1514 = vmatprep.subr.bf16.mxu0 0
  %1515 = vmatpush1.bf16.xpose.msra.mxu0 0
  %1516 = vmatprep.subr.bf16.mxu0 0
  %1517 = vmatpush1.bf16.xpose.msra.mxu0 0
  %1518 = vmatprep.mubr.bf16.mxu0 0
  %1519 = vmatmul.mubr.bf16.gmra.mrb[0].mxu0 %v1481
  %v1520 = vpop.f32.mrb[0].mxu0
  %v1521 = vadd.f32 %v1255, %v1520
  %v1522 = vpop.f32.mrb[0].mxu0
  %v1523 = vpop.f32.mrb[0].mxu0
  %v1524 = vpop.f32.mrb[0].mxu0
  %1525 = vdwg.mxu0
  %v1526 = vsel %vm431, %v1475, -inf
  %1527 = vmax.xlane.f32.xlu0 %v1526
  %v1528 = vpop.xlane.xlu0 %1527
  %v1529 = vsel %vm431, %v1521, -inf
  %1530 = vmax.xlane.f32.xlu0 %v1529
  %v1531 = vpop.xlane.xlu0 %1530
  %v1532 = vsub.f32 %v1475, %v1528
  %v1533 = vsub.f32 %v1521, %v1531
  %v1534 = vmul.f32 %v1532, 1.442695
  %v1535 = vpow.pop %v1534
  %v1536 = vmul.f32 %v1533, 1.442695
  %v1537 = vpow.pop %v1536
  %v1538 = vsel %vm431, %v1535, 0.0
  %1539 = vadd.xlane.f32.xlu0 %v1538
  %v1540 = vpop.xlane.xlu0 %1539
  %v1541 = vsel %vm431, %v1537, 0.0
  %1542 = vadd.xlane.f32.xlu0 %v1541
  %v1543 = vpop.xlane.xlu0 %1542
  %v1544 = vrcp.pop %v1540
  %v1545 = vrcp.pop %v1543
  %v1546 = vmul.f32 %v1535, %v1544
  %v1547 = vmul.f32 %v1537, %v1545
  %v1548 = vpack.c.bf16 %v1546, %v1546
  %v1549 = vpack.c.bf16 %v1547, %v1547
  %v1550 = vpack.c.bf16 %v1424, %v1424
  %v1551 = vpack.c.bf16 %v1427, %v1427
  %v1553 = vsel %vm431, %v1548, 0
  %v1556 = vsel %vm461, %v1550, 0
  %1558 = vmatprep.subr.bf16.mxu0 0
  %1559 = vmatpush1.bf16.msra.mxu0 %v1556
  %1560 = vmatprep.subr.bf16.mxu0 0
  %1561 = vmatpush1.bf16.msra.mxu0 0
  %1562 = vmatprep.subr.bf16.mxu0 0
  %1563 = vmatpush1.bf16.msra.mxu0 0
  %1564 = vmatprep.subr.bf16.mxu0 0
  %1565 = vmatpush1.bf16.msra.mxu0 0
  %1566 = vmatprep.subr.bf16.mxu0 0
  %1567 = vmatpush1.bf16.msra.mxu0 0
  %1568 = vmatprep.subr.bf16.mxu0 0
  %1569 = vmatpush1.bf16.msra.mxu0 0
  %1570 = vmatprep.subr.bf16.mxu0 0
  %1571 = vmatpush1.bf16.msra.mxu0 0
  %1572 = vmatprep.subr.bf16.mxu0 0
  %1573 = vmatpush1.bf16.msra.mxu0 0
  %1574 = vmatprep.subr.bf16.mxu0 0
  %1575 = vmatpush1.bf16.msra.mxu0 0
  %1576 = vmatprep.subr.bf16.mxu0 0
  %1577 = vmatpush1.bf16.msra.mxu0 0
  %1578 = vmatprep.subr.bf16.mxu0 0
  %1579 = vmatpush1.bf16.msra.mxu0 0
  %1580 = vmatprep.subr.bf16.mxu0 0
  %1581 = vmatpush1.bf16.msra.mxu0 0
  %1582 = vmatprep.subr.bf16.mxu0 0
  %1583 = vmatpush1.bf16.msra.mxu0 0
  %1584 = vmatprep.subr.bf16.mxu0 0
  %1585 = vmatpush1.bf16.msra.mxu0 0
  %1586 = vmatprep.subr.bf16.mxu0 0
  %1587 = vmatpush1.bf16.msra.mxu0 0
  %1588 = vmatprep.subr.bf16.mxu0 0
  %1589 = vmatpush1.bf16.msra.mxu0 0
  %1590 = vmatprep.mubr.bf16.mxu0 0
  %1591 = vmatmul.mubr.bf16.gmra.mrb[0].mxu0 %v1553
  %v1592 = vpop.f32.mrb[0].mxu0
  %v1593 = vadd.f32 0.0, %v1592
  %v1594 = vpop.f32.mrb[0].mxu0
  %v1595 = vpop.f32.mrb[0].mxu0
  %v1596 = vpop.f32.mrb[0].mxu0
  %1597 = vdwg.mxu0
  %v1599 = vsel %vm431, %v1549, 0
  %v1602 = vsel %vm461, %v1551, 0
  %1604 = vmatprep.subr.bf16.mxu0 0
  %1605 = vmatpush1.bf16.msra.mxu0 %v1602
  %1606 = vmatprep.subr.bf16.mxu0 0
  %1607 = vmatpush1.bf16.msra.mxu0 0
  %1608 = vmatprep.subr.bf16.mxu0 0
  %1609 = vmatpush1.bf16.msra.mxu0 0
  %1610 = vmatprep.subr.bf16.mxu0 0
  %1611 = vmatpush1.bf16.msra.mxu0 0
  %1612 = vmatprep.subr.bf16.mxu0 0
  %1613 = vmatpush1.bf16.msra.mxu0 0
  %1614 = vmatprep.subr.bf16.mxu0 0
  %1615 = vmatpush1.bf16.msra.mxu0 0
  %1616 = vmatprep.subr.bf16.mxu0 0
  %1617 = vmatpush1.bf16.msra.mxu0 0
  %1618 = vmatprep.subr.bf16.mxu0 0
  %1619 = vmatpush1.bf16.msra.mxu0 0
  %1620 = vmatprep.subr.bf16.mxu0 0
  %1621 = vmatpush1.bf16.msra.mxu0 0
  %1622 = vmatprep.subr.bf16.mxu0 0
  %1623 = vmatpush1.bf16.msra.mxu0 0
  %1624 = vmatprep.subr.bf16.mxu0 0
  %1625 = vmatpush1.bf16.msra.mxu0 0
  %1626 = vmatprep.subr.bf16.mxu0 0
  %1627 = vmatpush1.bf16.msra.mxu0 0
  %1628 = vmatprep.subr.bf16.mxu0 0
  %1629 = vmatpush1.bf16.msra.mxu0 0
  %1630 = vmatprep.subr.bf16.mxu0 0
  %1631 = vmatpush1.bf16.msra.mxu0 0
  %1632 = vmatprep.subr.bf16.mxu0 0
  %1633 = vmatpush1.bf16.msra.mxu0 0
  %1634 = vmatprep.subr.bf16.mxu0 0
  %1635 = vmatpush1.bf16.msra.mxu0 0
  %1636 = vmatprep.mubr.bf16.mxu0 0
  %1637 = vmatmul.mubr.bf16.gmra.mrb[0].mxu0 %v1599
  %v1638 = vpop.f32.mrb[0].mxu0
  %v1639 = vadd.f32 0.0, %v1638
  %v1640 = vpop.f32.mrb[0].mxu0
  %v1641 = vpop.f32.mrb[0].mxu0
  %v1642 = vpop.f32.mrb[0].mxu0
  %1643 = vdwg.mxu0
  %v1644 = vpack.c.bf16 %v1639, %v1593
  %v1645 = vpack.c.bf16 %v1257, %v1256
  %s1646 = scalar_lea.vmem %s35, 32
  %v1647 = vld [vmem:[%s1646] sm:$0xff]
  %v1648 = vld [vmem:[%s1646 + $0x8] sm:$0xff]
  %v1649 = vld [vmem:[%s1646 + $0x10] sm:$0xff]
  %v1650 = vld [vmem:[%s1646 + $0x18] sm:$0xff]
  %s1651 = scalar_lea.vmem %s37, 1
  %v1652 = vld [vmem:[%s1651] sm:$0x1]
  %v1653 = vpack.c.bf16 %v1648, %v1647
  %v1654 = vpack.c.bf16 %v1650, %v1649
  %v1656 = vlaneseq
  %v1657 = vshrl.u32 %v1656, 7
  %v1658 = vsub.s32 0, %v1657
  %v1659 = vrot.slane %v1652, %v1658
  %1661 = vmatprep.subr.bf16.mxu0 0
  %1662 = vmatpush1.bf16.msra.mxu0 %v1653
  %1663 = vmatprep.subr.bf16.mxu0 0
  %1664 = vmatpush1.bf16.msra.mxu0 %v1654
  %1665 = vmatprep.subr.bf16.mxu0 0
  %1666 = vmatpush1.bf16.msra.mxu0 0
  %1667 = vmatprep.subr.bf16.mxu0 0
  %1668 = vmatpush1.bf16.msra.mxu0 0
  %1669 = vmatprep.subr.bf16.mxu0 0
  %1670 = vmatpush1.bf16.msra.mxu0 0
  %1671 = vmatprep.subr.bf16.mxu0 0
  %1672 = vmatpush1.bf16.msra.mxu0 0
  %1673 = vmatprep.subr.bf16.mxu0 0
  %1674 = vmatpush1.bf16.msra.mxu0 0
  %1675 = vmatprep.subr.bf16.mxu0 0
  %1676 = vmatpush1.bf16.msra.mxu0 0
  %1677 = vmatprep.subr.bf16.mxu0 0
  %1678 = vmatpush1.bf16.msra.mxu0 0
  %1679 = vmatprep.subr.bf16.mxu0 0
  %1680 = vmatpush1.bf16.msra.mxu0 0
  %1681 = vmatprep.subr.bf16.mxu0 0
  %1682 = vmatpush1.bf16.msra.mxu0 0
  %1683 = vmatprep.subr.bf16.mxu0 0
  %1684 = vmatpush1.bf16.msra.mxu0 0
  %1685 = vmatprep.subr.bf16.mxu0 0
  %1686 = vmatpush1.bf16.msra.mxu0 0
  %1687 = vmatprep.subr.bf16.mxu0 0
  %1688 = vmatpush1.bf16.msra.mxu0 0
  %1689 = vmatprep.subr.bf16.mxu0 0
  %1690 = vmatpush1.bf16.msra.mxu0 0
  %1691 = vmatprep.subr.bf16.mxu0 0
  %1692 = vmatpush1.bf16.msra.mxu0 0
  %1693 = vmatprep.mubr.bf16.mxu0 0
  %1694 = vmatmul.mubr.bf16.gmra.mrb[0].mxu0 %v1275
  %v1695 = vpop.f32.mrb[0].mxu0
  %v1696 = vadd.f32 %v1659, %v1695
  %v1697 = vpop.f32.mrb[0].mxu0
  %v1698 = vpop.f32.mrb[0].mxu0
  %v1699 = vadd.f32 %v1659, %v1698
  %v1700 = vpop.f32.mrb[0].mxu0
  %1701 = vdwg.mxu0
  %s1702 = scalar_lea.vmem %s35, 96
  %v1703 = vld [vmem:[%s1702] sm:$0xff]
  %v1704 = vld [vmem:[%s1702 + $0x8] sm:$0xff]
  %v1705 = vld [vmem:[%s1702 + $0x10] sm:$0xff]
  %v1706 = vld [vmem:[%s1702 + $0x18] sm:$0xff]
  %s1707 = scalar_lea.vmem %s37, 3
  %v1708 = vld [vmem:[%s1707] sm:$0x1]
  %v1709 = vpack.c.bf16 %v1704, %v1703
  %v1710 = vpack.c.bf16 %v1706, %v1705
  %v1712 = vlaneseq
  %v1713 = vshrl.u32 %v1712, 7
  %v1714 = vsub.s32 0, %v1713
  %v1715 = vrot.slane %v1708, %v1714
  %1717 = vmatprep.subr.bf16.mxu0 0
  %1718 = vmatpush1.bf16.msra.mxu0 %v1709
  %1719 = vmatprep.subr.bf16.mxu0 0
  %1720 = vmatpush1.bf16.msra.mxu0 %v1710
  %1721 = vmatprep.subr.bf16.mxu0 0
  %1722 = vmatpush1.bf16.msra.mxu0 0
  %1723 = vmatprep.subr.bf16.mxu0 0
  %1724 = vmatpush1.bf16.msra.mxu0 0
  %1725 = vmatprep.subr.bf16.mxu0 0
  %1726 = vmatpush1.bf16.msra.mxu0 0
  %1727 = vmatprep.subr.bf16.mxu0 0
  %1728 = vmatpush1.bf16.msra.mxu0 0
  %1729 = vmatprep.subr.bf16.mxu0 0
  %1730 = vmatpush1.bf16.msra.mxu0 0
  %1731 = vmatprep.subr.bf16.mxu0 0
  %1732 = vmatpush1.bf16.msra.mxu0 0
  %1733 = vmatprep.subr.bf16.mxu0 0
  %1734 = vmatpush1.bf16.msra.mxu0 0
  %1735 = vmatprep.subr.bf16.mxu0 0
  %1736 = vmatpush1.bf16.msra.mxu0 0
  %1737 = vmatprep.subr.bf16.mxu0 0
  %1738 = vmatpush1.bf16.msra.mxu0 0
  %1739 = vmatprep.subr.bf16.mxu0 0
  %1740 = vmatpush1.bf16.msra.mxu0 0
  %1741 = vmatprep.subr.bf16.mxu0 0
  %1742 = vmatpush1.bf16.msra.mxu0 0
  %1743 = vmatprep.subr.bf16.mxu0 0
  %1744 = vmatpush1.bf16.msra.mxu0 0
  %1745 = vmatprep.subr.bf16.mxu0 0
  %1746 = vmatpush1.bf16.msra.mxu0 0
  %1747 = vmatprep.subr.bf16.mxu0 0
  %1748 = vmatpush1.bf16.msra.mxu0 0
  %1749 = vmatprep.mubr.bf16.mxu0 0
  %1750 = vmatmul.mubr.bf16.gmra.mrb[0].mxu0 %v1275
  %v1751 = vpop.f32.mrb[0].mxu0
  %v1752 = vadd.f32 %v1715, %v1751
  %v1753 = vpop.f32.mrb[0].mxu0
  %v1754 = vpop.f32.mrb[0].mxu0
  %v1755 = vadd.f32 %v1715, %v1754
  %v1756 = vpop.f32.mrb[0].mxu0
  %1757 = vdwg.mxu0
  %s1758 = scalar_lea.vmem %s35, 160
  %v1759 = vld [vmem:[%s1758] sm:$0xff]
  %v1760 = vld [vmem:[%s1758 + $0x8] sm:$0xff]
  %v1761 = vld [vmem:[%s1758 + $0x10] sm:$0xff]
  %v1762 = vld [vmem:[%s1758 + $0x18] sm:$0xff]
  %s1763 = scalar_lea.vmem %s37, 5
  %v1764 = vld [vmem:[%s1763] sm:$0x1]
  %v1765 = vpack.c.bf16 %v1760, %v1759
  %v1766 = vpack.c.bf16 %v1762, %v1761
  %v1768 = vlaneseq
  %v1769 = vshrl.u32 %v1768, 7
  %v1770 = vsub.s32 0, %v1769
  %v1771 = vrot.slane %v1764, %v1770
  %1773 = vmatprep.subr.bf16.mxu0 0
  %1774 = vmatpush1.bf16.msra.mxu0 %v1765
  %1775 = vmatprep.subr.bf16.mxu0 0
  %1776 = vmatpush1.bf16.msra.mxu0 %v1766
  %1777 = vmatprep.subr.bf16.mxu0 0
  %1778 = vmatpush1.bf16.msra.mxu0 0
  %1779 = vmatprep.subr.bf16.mxu0 0
  %1780 = vmatpush1.bf16.msra.mxu0 0
  %1781 = vmatprep.subr.bf16.mxu0 0
  %1782 = vmatpush1.bf16.msra.mxu0 0
  %1783 = vmatprep.subr.bf16.mxu0 0
  %1784 = vmatpush1.bf16.msra.mxu0 0
  %1785 = vmatprep.subr.bf16.mxu0 0
  %1786 = vmatpush1.bf16.msra.mxu0 0
  %1787 = vmatprep.subr.bf16.mxu0 0
  %1788 = vmatpush1.bf16.msra.mxu0 0
  %1789 = vmatprep.subr.bf16.mxu0 0
  %1790 = vmatpush1.bf16.msra.mxu0 0
  %1791 = vmatprep.subr.bf16.mxu0 0
  %1792 = vmatpush1.bf16.msra.mxu0 0
  %1793 = vmatprep.subr.bf16.mxu0 0
  %1794 = vmatpush1.bf16.msra.mxu0 0
  %1795 = vmatprep.subr.bf16.mxu0 0
  %1796 = vmatpush1.bf16.msra.mxu0 0
  %1797 = vmatprep.subr.bf16.mxu0 0
  %1798 = vmatpush1.bf16.msra.mxu0 0
  %1799 = vmatprep.subr.bf16.mxu0 0
  %1800 = vmatpush1.bf16.msra.mxu0 0
  %1801 = vmatprep.subr.bf16.mxu0 0
  %1802 = vmatpush1.bf16.msra.mxu0 0
  %1803 = vmatprep.subr.bf16.mxu0 0
  %1804 = vmatpush1.bf16.msra.mxu0 0
  %1805 = vmatprep.mubr.bf16.mxu0 0
  %1806 = vmatmul.mubr.bf16.gmra.mrb[0].mxu0 %v1275
  %v1807 = vpop.f32.mrb[0].mxu0
  %v1808 = vadd.f32 %v1771, %v1807
  %v1809 = vpop.f32.mrb[0].mxu0
  %v1810 = vpop.f32.mrb[0].mxu0
  %v1811 = vadd.f32 %v1771, %v1810
  %v1812 = vpop.f32.mrb[0].mxu0
  %1813 = vdwg.mxu0
  %v1814 = vpack.c.bf16 %v1696, %v1696
  %v1815 = vpack.c.bf16 %v1699, %v1699
  %v1816 = vpack.c.bf16 %v1752, %v1752
  %v1817 = vpack.c.bf16 %v1755, %v1755
  %v1819 = vsel %vm338, %v1814, 0
  %v1822 = vsel %vm338, %v1816, 0
  %1824 = vmatprep.subr.bf16.mxu0 0
  %1825 = vmatpush1.bf16.xpose.msra.mxu0 %v1822
  %1826 = vmatprep.subr.bf16.mxu0 0
  %1827 = vmatpush1.bf16.xpose.msra.mxu0 0
  %1828 = vmatprep.subr.bf16.mxu0 0
  %1829 = vmatpush1.bf16.xpose.msra.mxu0 0
  %1830 = vmatprep.subr.bf16.mxu0 0
  %1831 = vmatpush1.bf16.xpose.msra.mxu0 0
  %1832 = vmatprep.subr.bf16.mxu0 0
  %1833 = vmatpush1.bf16.xpose.msra.mxu0 0
  %1834 = vmatprep.subr.bf16.mxu0 0
  %1835 = vmatpush1.bf16.xpose.msra.mxu0 0
  %1836 = vmatprep.subr.bf16.mxu0 0
  %1837 = vmatpush1.bf16.xpose.msra.mxu0 0
  %1838 = vmatprep.subr.bf16.mxu0 0
  %1839 = vmatpush1.bf16.xpose.msra.mxu0 0
  %1840 = vmatprep.subr.bf16.mxu0 0
  %1841 = vmatpush1.bf16.xpose.msra.mxu0 0
  %1842 = vmatprep.subr.bf16.mxu0 0
  %1843 = vmatpush1.bf16.xpose.msra.mxu0 0
  %1844 = vmatprep.subr.bf16.mxu0 0
  %1845 = vmatpush1.bf16.xpose.msra.mxu0 0
  %1846 = vmatprep.subr.bf16.mxu0 0
  %1847 = vmatpush1.bf16.xpose.msra.mxu0 0
  %1848 = vmatprep.subr.bf16.mxu0 0
  %1849 = vmatpush1.bf16.xpose.msra.mxu0 0
  %1850 = vmatprep.subr.bf16.mxu0 0
  %1851 = vmatpush1.bf16.xpose.msra.mxu0 0
  %1852 = vmatprep.subr.bf16.mxu0 0
  %1853 = vmatpush1.bf16.xpose.msra.mxu0 0
  %1854 = vmatprep.subr.bf16.mxu0 0
  %1855 = vmatpush1.bf16.xpose.msra.mxu0 0
  %1856 = vmatprep.mubr.bf16.mxu0 0
  %1857 = vmatmul.mubr.bf16.gmra.mrb[0].mxu0 %v1819
  %v1858 = vpop.f32.mrb[0].mxu0
  %v1859 = vadd.f32 %v1254, %v1858
  %v1860 = vpop.f32.mrb[0].mxu0
  %v1861 = vpop.f32.mrb[0].mxu0
  %v1862 = vpop.f32.mrb[0].mxu0
  %1863 = vdwg.mxu0
  %v1865 = vsel %vm338, %v1815, 0
  %v1868 = vsel %vm338, %v1817, 0
  %1870 = vmatprep.subr.bf16.mxu0 0
  %1871 = vmatpush1.bf16.xpose.msra.mxu0 %v1868
  %1872 = vmatprep.subr.bf16.mxu0 0
  %1873 = vmatpush1.bf16.xpose.msra.mxu0 0
  %1874 = vmatprep.subr.bf16.mxu0 0
  %1875 = vmatpush1.bf16.xpose.msra.mxu0 0
  %1876 = vmatprep.subr.bf16.mxu0 0
  %1877 = vmatpush1.bf16.xpose.msra.mxu0 0
  %1878 = vmatprep.subr.bf16.mxu0 0
  %1879 = vmatpush1.bf16.xpose.msra.mxu0 0
  %1880 = vmatprep.subr.bf16.mxu0 0
  %1881 = vmatpush1.bf16.xpose.msra.mxu0 0
  %1882 = vmatprep.subr.bf16.mxu0 0
  %1883 = vmatpush1.bf16.xpose.msra.mxu0 0
  %1884 = vmatprep.subr.bf16.mxu0 0
  %1885 = vmatpush1.bf16.xpose.msra.mxu0 0
  %1886 = vmatprep.subr.bf16.mxu0 0
  %1887 = vmatpush1.bf16.xpose.msra.mxu0 0
  %1888 = vmatprep.subr.bf16.mxu0 0
  %1889 = vmatpush1.bf16.xpose.msra.mxu0 0
  %1890 = vmatprep.subr.bf16.mxu0 0
  %1891 = vmatpush1.bf16.xpose.msra.mxu0 0
  %1892 = vmatprep.subr.bf16.mxu0 0
  %1893 = vmatpush1.bf16.xpose.msra.mxu0 0
  %1894 = vmatprep.subr.bf16.mxu0 0
  %1895 = vmatpush1.bf16.xpose.msra.mxu0 0
  %1896 = vmatprep.subr.bf16.mxu0 0
  %1897 = vmatpush1.bf16.xpose.msra.mxu0 0
  %1898 = vmatprep.subr.bf16.mxu0 0
  %1899 = vmatpush1.bf16.xpose.msra.mxu0 0
  %1900 = vmatprep.subr.bf16.mxu0 0
  %1901 = vmatpush1.bf16.xpose.msra.mxu0 0
  %1902 = vmatprep.mubr.bf16.mxu0 0
  %1903 = vmatmul.mubr.bf16.gmra.mrb[0].mxu0 %v1865
  %v1904 = vpop.f32.mrb[0].mxu0
  %v1905 = vadd.f32 %v1255, %v1904
  %v1906 = vpop.f32.mrb[0].mxu0
  %v1907 = vpop.f32.mrb[0].mxu0
  %v1908 = vpop.f32.mrb[0].mxu0
  %1909 = vdwg.mxu0
  %v1910 = vsel %vm431, %v1859, -inf
  %1911 = vmax.xlane.f32.xlu0 %v1910
  %v1912 = vpop.xlane.xlu0 %1911
  %v1913 = vsel %vm431, %v1905, -inf
  %1914 = vmax.xlane.f32.xlu0 %v1913
  %v1915 = vpop.xlane.xlu0 %1914
  %v1916 = vsub.f32 %v1859, %v1912
  %v1917 = vsub.f32 %v1905, %v1915
  %v1918 = vmul.f32 %v1916, 1.442695
  %v1919 = vpow.pop %v1918
  %v1920 = vmul.f32 %v1917, 1.442695
  %v1921 = vpow.pop %v1920
  %v1922 = vsel %vm431, %v1919, 0.0
  %1923 = vadd.xlane.f32.xlu0 %v1922
  %v1924 = vpop.xlane.xlu0 %1923
  %v1925 = vsel %vm431, %v1921, 0.0
  %1926 = vadd.xlane.f32.xlu0 %v1925
  %v1927 = vpop.xlane.xlu0 %1926
  %v1928 = vrcp.pop %v1924
  %v1929 = vrcp.pop %v1927
  %v1930 = vmul.f32 %v1919, %v1928
  %v1931 = vmul.f32 %v1921, %v1929
  %v1932 = vpack.c.bf16 %v1930, %v1930
  %v1933 = vpack.c.bf16 %v1931, %v1931
  %v1934 = vpack.c.bf16 %v1808, %v1808
  %v1935 = vpack.c.bf16 %v1811, %v1811
  %v1937 = vsel %vm431, %v1932, 0
  %v1940 = vsel %vm461, %v1934, 0
  %1942 = vmatprep.subr.bf16.mxu0 0
  %1943 = vmatpush1.bf16.msra.mxu0 %v1940
  %1944 = vmatprep.subr.bf16.mxu0 0
  %1945 = vmatpush1.bf16.msra.mxu0 0
  %1946 = vmatprep.subr.bf16.mxu0 0
  %1947 = vmatpush1.bf16.msra.mxu0 0
  %1948 = vmatprep.subr.bf16.mxu0 0
  %1949 = vmatpush1.bf16.msra.mxu0 0
  %1950 = vmatprep.subr.bf16.mxu0 0
  %1951 = vmatpush1.bf16.msra.mxu0 0
  %1952 = vmatprep.subr.bf16.mxu0 0
  %1953 = vmatpush1.bf16.msra.mxu0 0
  %1954 = vmatprep.subr.bf16.mxu0 0
  %1955 = vmatpush1.bf16.msra.mxu0 0
  %1956 = vmatprep.subr.bf16.mxu0 0
  %1957 = vmatpush1.bf16.msra.mxu0 0
  %1958 = vmatprep.subr.bf16.mxu0 0
  %1959 = vmatpush1.bf16.msra.mxu0 0
  %1960 = vmatprep.subr.bf16.mxu0 0
  %1961 = vmatpush1.bf16.msra.mxu0 0
  %1962 = vmatprep.subr.bf16.mxu0 0
  %1963 = vmatpush1.bf16.msra.mxu0 0
  %1964 = vmatprep.subr.bf16.mxu0 0
  %1965 = vmatpush1.bf16.msra.mxu0 0
  %1966 = vmatprep.subr.bf16.mxu0 0
  %1967 = vmatpush1.bf16.msra.mxu0 0
  %1968 = vmatprep.subr.bf16.mxu0 0
  %1969 = vmatpush1.bf16.msra.mxu0 0
  %1970 = vmatprep.subr.bf16.mxu0 0
  %1971 = vmatpush1.bf16.msra.mxu0 0
  %1972 = vmatprep.subr.bf16.mxu0 0
  %1973 = vmatpush1.bf16.msra.mxu0 0
  %1974 = vmatprep.mubr.bf16.mxu0 0
  %1975 = vmatmul.mubr.bf16.gmra.mrb[0].mxu0 %v1937
  %v1976 = vpop.f32.mrb[0].mxu0
  %v1977 = vadd.f32 0.0, %v1976
  %v1978 = vpop.f32.mrb[0].mxu0
  %v1979 = vpop.f32.mrb[0].mxu0
  %v1980 = vpop.f32.mrb[0].mxu0
  %1981 = vdwg.mxu0
  %v1983 = vsel %vm431, %v1933, 0
  %v1986 = vsel %vm461, %v1935, 0
  %1988 = vmatprep.subr.bf16.mxu0 0
  %1989 = vmatpush1.bf16.msra.mxu0 %v1986
  %1990 = vmatprep.subr.bf16.mxu0 0
  %1991 = vmatpush1.bf16.msra.mxu0 0
  %1992 = vmatprep.subr.bf16.mxu0 0
  %1993 = vmatpush1.bf16.msra.mxu0 0
  %1994 = vmatprep.subr.bf16.mxu0 0
  %1995 = vmatpush1.bf16.msra.mxu0 0
  %1996 = vmatprep.subr.bf16.mxu0 0
  %1997 = vmatpush1.bf16.msra.mxu0 0
  %1998 = vmatprep.subr.bf16.mxu0 0
  %1999 = vmatpush1.bf16.msra.mxu0 0
  %2000 = vmatprep.subr.bf16.mxu0 0
  %2001 = vmatpush1.bf16.msra.mxu0 0
  %2002 = vmatprep.subr.bf16.mxu0 0
  %2003 = vmatpush1.bf16.msra.mxu0 0
  %2004 = vmatprep.subr.bf16.mxu0 0
  %2005 = vmatpush1.bf16.msra.mxu0 0
  %2006 = vmatprep.subr.bf16.mxu0 0
  %2007 = vmatpush1.bf16.msra.mxu0 0
  %2008 = vmatprep.subr.bf16.mxu0 0
  %2009 = vmatpush1.bf16.msra.mxu0 0
  %2010 = vmatprep.subr.bf16.mxu0 0
  %2011 = vmatpush1.bf16.msra.mxu0 0
  %2012 = vmatprep.subr.bf16.mxu0 0
  %2013 = vmatpush1.bf16.msra.mxu0 0
  %2014 = vmatprep.subr.bf16.mxu0 0
  %2015 = vmatpush1.bf16.msra.mxu0 0
  %2016 = vmatprep.subr.bf16.mxu0 0
  %2017 = vmatpush1.bf16.msra.mxu0 0
  %2018 = vmatprep.subr.bf16.mxu0 0
  %2019 = vmatpush1.bf16.msra.mxu0 0
  %2020 = vmatprep.mubr.bf16.mxu0 0
  %2021 = vmatmul.mubr.bf16.gmra.mrb[0].mxu0 %v1983
  %v2022 = vpop.f32.mrb[0].mxu0
  %v2023 = vadd.f32 0.0, %v2022
  %v2024 = vpop.f32.mrb[0].mxu0
  %v2025 = vpop.f32.mrb[0].mxu0
  %v2026 = vpop.f32.mrb[0].mxu0
  %2027 = vdwg.mxu0
  %v2028 = vpack.c.bf16 %v2023, %v1977
  %v2029 = vpack.c.bf16 %v1259, %v1258
  %v2031 = vsel %vm338, %v2028, 0
  %2033 = vmatprep.subr.bf16.mxu0 0
  %2034 = vmatpush1.bf16.msra.mxu0 %v2029
  %2035 = vmatprep.subr.bf16.mxu0 0
  %2036 = vmatpush1.bf16.msra.mxu0 0
  %2037 = vmatprep.subr.bf16.mxu0 0
  %2038 = vmatpush1.bf16.msra.mxu0 0
  %2039 = vmatprep.subr.bf16.mxu0 0
  %2040 = vmatpush1.bf16.msra.mxu0 0
  %2041 = vmatprep.subr.bf16.mxu0 0
  %2042 = vmatpush1.bf16.msra.mxu0 0
  %2043 = vmatprep.subr.bf16.mxu0 0
  %2044 = vmatpush1.bf16.msra.mxu0 0
  %2045 = vmatprep.subr.bf16.mxu0 0
  %2046 = vmatpush1.bf16.msra.mxu0 0
  %2047 = vmatprep.subr.bf16.mxu0 0
  %2048 = vmatpush1.bf16.msra.mxu0 0
  %2049 = vmatprep.subr.bf16.mxu0 0
  %2050 = vmatpush1.bf16.msra.mxu0 0
  %2051 = vmatprep.subr.bf16.mxu0 0
  %2052 = vmatpush1.bf16.msra.mxu0 0
  %2053 = vmatprep.subr.bf16.mxu0 0
  %2054 = vmatpush1.bf16.msra.mxu0 0
  %2055 = vmatprep.subr.bf16.mxu0 0
  %2056 = vmatpush1.bf16.msra.mxu0 0
  %2057 = vmatprep.subr.bf16.mxu0 0
  %2058 = vmatpush1.bf16.msra.mxu0 0
  %2059 = vmatprep.subr.bf16.mxu0 0
  %2060 = vmatpush1.bf16.msra.mxu0 0
  %2061 = vmatprep.subr.bf16.mxu0 0
  %2062 = vmatpush1.bf16.msra.mxu0 0
  %2063 = vmatprep.subr.bf16.mxu0 0
  %2064 = vmatpush1.bf16.msra.mxu0 0
  %2065 = vmatprep.mubr.bf16.mxu0 0
  %2066 = vmatmul.mubr.bf16.gmra.mrb[0].mxu0 %v2031
  %v2067 = vpop.f32.mrb[0].mxu0
  %v2068 = vadd.f32 0.0, %v2067
  %v2069 = vpop.f32.mrb[0].mxu0
  %v2070 = vpop.f32.mrb[0].mxu0
  %v2071 = vadd.f32 0.0, %v2070
  %v2072 = vpop.f32.mrb[0].mxu0
  %2073 = vdwg.mxu0
  %v2075 = vsel %vm338, %v1644, 0
  %2077 = vmatprep.subr.bf16.mxu0 0
  %2078 = vmatpush1.bf16.msra.mxu0 %v1645
  %2079 = vmatprep.subr.bf16.mxu0 0
  %2080 = vmatpush1.bf16.msra.mxu0 0
  %2081 = vmatprep.subr.bf16.mxu0 0
  %2082 = vmatpush1.bf16.msra.mxu0 0
  %2083 = vmatprep.subr.bf16.mxu0 0
  %2084 = vmatpush1.bf16.msra.mxu0 0
  %2085 = vmatprep.subr.bf16.mxu0 0
  %2086 = vmatpush1.bf16.msra.mxu0 0
  %2087 = vmatprep.subr.bf16.mxu0 0
  %2088 = vmatpush1.bf16.msra.mxu0 0
  %2089 = vmatprep.subr.bf16.mxu0 0
  %2090 = vmatpush1.bf16.msra.mxu0 0
  %2091 = vmatprep.subr.bf16.mxu0 0
  %2092 = vmatpush1.bf16.msra.mxu0 0
  %2093 = vmatprep.subr.bf16.mxu0 0
  %2094 = vmatpush1.bf16.msra.mxu0 0
  %2095 = vmatprep.subr.bf16.mxu0 0
  %2096 = vmatpush1.bf16.msra.mxu0 0
  %2097 = vmatprep.subr.bf16.mxu0 0
  %2098 = vmatpush1.bf16.msra.mxu0 0
  %2099 = vmatprep.subr.bf16.mxu0 0
  %2100 = vmatpush1.bf16.msra.mxu0 0
  %2101 = vmatprep.subr.bf16.mxu0 0
  %2102 = vmatpush1.bf16.msra.mxu0 0
  %2103 = vmatprep.subr.bf16.mxu0 0
  %2104 = vmatpush1.bf16.msra.mxu0 0
  %2105 = vmatprep.subr.bf16.mxu0 0
  %2106 = vmatpush1.bf16.msra.mxu0 0
  %2107 = vmatprep.subr.bf16.mxu0 0
  %2108 = vmatpush1.bf16.msra.mxu0 0
  %2109 = vmatprep.mubr.bf16.mxu0 0
  %2110 = vmatmul.mubr.bf16.gmra.mrb[0].mxu0 %v2075
  %v2111 = vpop.f32.mrb[0].mxu0
  %v2112 = vadd.f32 %v2068, %v2111
  %v2113 = vpop.f32.mrb[0].mxu0
  %v2114 = vpop.f32.mrb[0].mxu0
  %v2115 = vadd.f32 %v2071, %v2114
  %v2116 = vpop.f32.mrb[0].mxu0
  %2117 = vdwg.mxu0
  %v2118 = vld [vmem:[%s41] sm:$0x1]
  %v2120 = vlaneseq
  %v2121 = vshrl.u32 %v2120, 7
  %v2122 = vsub.s32 0, %v2121
  %v2123 = vrot.slane %v2118, %v2122
  %v2125 = vadd.f32 %v2112, %v2123
  %v2126 = vadd.f32 %v2115, %v2123
  %v2127 = vadd.f32 %v1252, %v2125
  %v2128 = vadd.f32 %v1253, %v2126
  %v2129 = vsel %vm177, %v2127, 0.0
  %2130 = vadd.xlane.f32.xlu0 %v2129
  %v2131 = vpop.xlane.xlu0 %2130
  %v2132 = vsel %vm177, %v2128, 0.0
  %2133 = vadd.xlane.f32.xlu0 %v2132
  %v2134 = vpop.xlane.xlu0 %2133
  %v2135 = vmul.f32 %v2131, %v1042
  %v2136 = vmul.f32 %v2134, %v1042
  %v2137 = vsub.f32 %v2127, %v2135
  %v2138 = vsub.f32 %v2128, %v2136
  %v2139 = vmul.f32 %v2137, %v2137
  %v2140 = vmul.f32 %v2138, %v2138
  %v2141 = vsel %vm177, %v2139, 0.0
  %2142 = vadd.xlane.f32.xlu0 %v2141
  %v2143 = vpop.xlane.xlu0 %2142
  %v2144 = vsel %vm177, %v2140, 0.0
  %2145 = vadd.xlane.f32.xlu0 %v2144
  %v2146 = vpop.xlane.xlu0 %2145
  %v2147 = vmul.f32 %v2143, %v1042
  %v2148 = vmul.f32 %v2146, %v1042
  %v2149 = vadd.f32 %v2147, 1e-05
  %v2150 = vadd.f32 %v2148, 1e-05
  %v2151 = vrsqrt.pop %v2149
  %v2152 = vrsqrt.pop %v2150
  %v2153 = vmul.f32 %v2137, %v2151
  %v2154 = vmul.f32 %v2138, %v2152
  %v2155 = vld [vmem:[%s51] sm:$0x1]
  %v2157 = vlaneseq
  %v2158 = vshrl.u32 %v2157, 7
  %v2159 = vsub.s32 0, %v2158
  %v2160 = vrot.slane %v2155, %v2159
  %v2162 = vmul.f32 %v2153, %v2160
  %v2163 = vmul.f32 %v2154, %v2160
  %v2164 = vld [vmem:[%s53] sm:$0x1]
  %v2166 = vlaneseq
  %v2167 = vshrl.u32 %v2166, 7
  %v2168 = vsub.s32 0, %v2167
  %v2169 = vrot.slane %v2164, %v2168
  %v2171 = vadd.f32 %v2162, %v2169
  %v2172 = vadd.f32 %v2163, %v2169
  %v2173 = vld [vmem:[%s9] sm:$0xff]
  %v2174 = vld [vmem:[%s9 + $0x8] sm:$0xff]
  %v2175 = vld [vmem:[%s47] sm:$0xff]
  %v2176 = vld [vmem:[%s47 + $0x8] sm:$0xff]
  %v2177 = vld [vmem:[%s47 + $0x10] sm:$0xff]
  %v2178 = vld [vmem:[%s47 + $0x18] sm:$0xff]
  %v2179 = vld [vmem:[%s43] sm:$0xff]
  %v2180 = vld [vmem:[%s43 + $0x8] sm:$0xff]
  %v2181 = vld [vmem:[%s43 + $0x10] sm:$0xff]
  %v2182 = vld [vmem:[%s43 + $0x18] sm:$0xff]
  %v2183 = vld [vmem:[%s45] sm:$0x1]
  %v2184 = vpack.c.bf16 %v2172, %v2171
  %v2185 = vpack.c.bf16 %v2180, %v2179
  %v2186 = vpack.c.bf16 %v2182, %v2181
  %v2188 = vlaneseq
  %v2189 = vshrl.u32 %v2188, 7
  %v2190 = vsub.s32 0, %v2189
  %v2191 = vrot.slane %v2183, %v2190
  %v2194 = vsel %vm177, %v2184, 0
  %2196 = vmatprep.subr.bf16.mxu0 0
  %2197 = vmatpush1.bf16.msra.mxu0 %v2185
  %2198 = vmatprep.subr.bf16.mxu0 0
  %2199 = vmatpush1.bf16.msra.mxu0 %v2186
  %2200 = vmatprep.subr.bf16.mxu0 0
  %2201 = vmatpush1.bf16.msra.mxu0 0
  %2202 = vmatprep.subr.bf16.mxu0 0
  %2203 = vmatpush1.bf16.msra.mxu0 0
  %2204 = vmatprep.subr.bf16.mxu0 0
  %2205 = vmatpush1.bf16.msra.mxu0 0
  %2206 = vmatprep.subr.bf16.mxu0 0
  %2207 = vmatpush1.bf16.msra.mxu0 0
  %2208 = vmatprep.subr.bf16.mxu0 0
  %2209 = vmatpush1.bf16.msra.mxu0 0
  %2210 = vmatprep.subr.bf16.mxu0 0
  %2211 = vmatpush1.bf16.msra.mxu0 0
  %2212 = vmatprep.subr.bf16.mxu0 0
  %2213 = vmatpush1.bf16.msra.mxu0 0
  %2214 = vmatprep.subr.bf16.mxu0 0
  %2215 = vmatpush1.bf16.msra.mxu0 0
  %2216 = vmatprep.subr.bf16.mxu0 0
  %2217 = vmatpush1.bf16.msra.mxu0 0
  %2218 = vmatprep.subr.bf16.mxu0 0
  %2219 = vmatpush1.bf16.msra.mxu0 0
  %2220 = vmatprep.subr.bf16.mxu0 0
  %2221 = vmatpush1.bf16.msra.mxu0 0
  %2222 = vmatprep.subr.bf16.mxu0 0
  %2223 = vmatpush1.bf16.msra.mxu0 0
  %2224 = vmatprep.subr.bf16.mxu0 0
  %2225 = vmatpush1.bf16.msra.mxu0 0
  %2226 = vmatprep.subr.bf16.mxu0 0
  %2227 = vmatpush1.bf16.msra.mxu0 0
  %2228 = vmatprep.mubr.bf16.mxu0 0
  %2229 = vmatmul.mubr.bf16.gmra.mrb[0].mxu0 %v2194
  %v2230 = vpop.f32.mrb[0].mxu0
  %v2231 = vadd.f32 %v2191, %v2230
  %v2232 = vpop.f32.mrb[0].mxu0
  %v2233 = vpop.f32.mrb[0].mxu0
  %v2234 = vadd.f32 %v2191, %v2233
  %v2235 = vpop.f32.mrb[0].mxu0
  %2236 = vdwg.mxu0
  %s2237 = scalar_lea.vmem %s43, 64
  %v2238 = vld [vmem:[%s2237] sm:$0xff]
  %v2239 = vld [vmem:[%s2237 + $0x8] sm:$0xff]
  %v2240 = vld [vmem:[%s2237 + $0x10] sm:$0xff]
  %v2241 = vld [vmem:[%s2237 + $0x18] sm:$0xff]
  %s2242 = scalar_lea.vmem %s45, 2
  %v2243 = vld [vmem:[%s2242] sm:$0x1]
  %v2244 = vpack.c.bf16 %v1251, %v1250
  %v2245 = vpack.c.bf16 %v2239, %v2238
  %v2246 = vpack.c.bf16 %v2241, %v2240
  %v2248 = vlaneseq
  %v2249 = vshrl.u32 %v2248, 7
  %v2250 = vsub.s32 0, %v2249
  %v2251 = vrot.slane %v2243, %v2250
  %v2254 = vsel %vm177, %v2244, 0
  %2256 = vmatprep.subr.bf16.mxu0 0
  %2257 = vmatpush1.bf16.msra.mxu0 %v2245
  %2258 = vmatprep.subr.bf16.mxu0 0
  %2259 = vmatpush1.bf16.msra.mxu0 %v2246
  %2260 = vmatprep.subr.bf16.mxu0 0
  %2261 = vmatpush1.bf16.msra.mxu0 0
  %2262 = vmatprep.subr.bf16.mxu0 0
  %2263 = vmatpush1.bf16.msra.mxu0 0
  %2264 = vmatprep.subr.bf16.mxu0 0
  %2265 = vmatpush1.bf16.msra.mxu0 0
  %2266 = vmatprep.subr.bf16.mxu0 0
  %2267 = vmatpush1.bf16.msra.mxu0 0
  %2268 = vmatprep.subr.bf16.mxu0 0
  %2269 = vmatpush1.bf16.msra.mxu0 0
  %2270 = vmatprep.subr.bf16.mxu0 0
  %2271 = vmatpush1.bf16.msra.mxu0 0
  %2272 = vmatprep.subr.bf16.mxu0 0
  %2273 = vmatpush1.bf16.msra.mxu0 0
  %2274 = vmatprep.subr.bf16.mxu0 0
  %2275 = vmatpush1.bf16.msra.mxu0 0
  %2276 = vmatprep.subr.bf16.mxu0 0
  %2277 = vmatpush1.bf16.msra.mxu0 0
  %2278 = vmatprep.subr.bf16.mxu0 0
  %2279 = vmatpush1.bf16.msra.mxu0 0
  %2280 = vmatprep.subr.bf16.mxu0 0
  %2281 = vmatpush1.bf16.msra.mxu0 0
  %2282 = vmatprep.subr.bf16.mxu0 0
  %2283 = vmatpush1.bf16.msra.mxu0 0
  %2284 = vmatprep.subr.bf16.mxu0 0
  %2285 = vmatpush1.bf16.msra.mxu0 0
  %2286 = vmatprep.subr.bf16.mxu0 0
  %2287 = vmatpush1.bf16.msra.mxu0 0
  %2288 = vmatprep.mubr.bf16.mxu0 0
  %2289 = vmatmul.mubr.bf16.gmra.mrb[0].mxu0 %v2254
  %v2290 = vpop.f32.mrb[0].mxu0
  %v2291 = vadd.f32 %v2251, %v2290
  %v2292 = vpop.f32.mrb[0].mxu0
  %v2293 = vpop.f32.mrb[0].mxu0
  %v2294 = vadd.f32 %v2251, %v2293
  %v2295 = vpop.f32.mrb[0].mxu0
  %2296 = vdwg.mxu0
  %s2297 = scalar_lea.vmem %s43, 128
  %v2298 = vld [vmem:[%s2297] sm:$0xff]
  %v2299 = vld [vmem:[%s2297 + $0x8] sm:$0xff]
  %v2300 = vld [vmem:[%s2297 + $0x10] sm:$0xff]
  %v2301 = vld [vmem:[%s2297 + $0x18] sm:$0xff]
  %s2302 = scalar_lea.vmem %s45, 4
  %v2303 = vld [vmem:[%s2302] sm:$0x1]
  %v2304 = vpack.c.bf16 %v2299, %v2298
  %v2305 = vpack.c.bf16 %v2301, %v2300
  %v2307 = vlaneseq
  %v2308 = vshrl.u32 %v2307, 7
  %v2309 = vsub.s32 0, %v2308
  %v2310 = vrot.slane %v2303, %v2309
  %2312 = vmatprep.subr.bf16.mxu0 0
  %2313 = vmatpush1.bf16.msra.mxu0 %v2304
  %2314 = vmatprep.subr.bf16.mxu0 0
  %2315 = vmatpush1.bf16.msra.mxu0 %v2305
  %2316 = vmatprep.subr.bf16.mxu0 0
  %2317 = vmatpush1.bf16.msra.mxu0 0
  %2318 = vmatprep.subr.bf16.mxu0 0
  %2319 = vmatpush1.bf16.msra.mxu0 0
  %2320 = vmatprep.subr.bf16.mxu0 0
  %2321 = vmatpush1.bf16.msra.mxu0 0
  %2322 = vmatprep.subr.bf16.mxu0 0
  %2323 = vmatpush1.bf16.msra.mxu0 0
  %2324 = vmatprep.subr.bf16.mxu0 0
  %2325 = vmatpush1.bf16.msra.mxu0 0
  %2326 = vmatprep.subr.bf16.mxu0 0
  %2327 = vmatpush1.bf16.msra.mxu0 0
  %2328 = vmatprep.subr.bf16.mxu0 0
  %2329 = vmatpush1.bf16.msra.mxu0 0
  %2330 = vmatprep.subr.bf16.mxu0 0
  %2331 = vmatpush1.bf16.msra.mxu0 0
  %2332 = vmatprep.subr.bf16.mxu0 0
  %2333 = vmatpush1.bf16.msra.mxu0 0
  %2334 = vmatprep.subr.bf16.mxu0 0
  %2335 = vmatpush1.bf16.msra.mxu0 0
  %2336 = vmatprep.subr.bf16.mxu0 0
  %2337 = vmatpush1.bf16.msra.mxu0 0
  %2338 = vmatprep.subr.bf16.mxu0 0
  %2339 = vmatpush1.bf16.msra.mxu0 0
  %2340 = vmatprep.subr.bf16.mxu0 0
  %2341 = vmatpush1.bf16.msra.mxu0 0
  %2342 = vmatprep.subr.bf16.mxu0 0
  %2343 = vmatpush1.bf16.msra.mxu0 0
  %2344 = vmatprep.mubr.bf16.mxu0 0
  %2345 = vmatmul.mubr.bf16.gmra.mrb[0].mxu0 %v2254
  %v2346 = vpop.f32.mrb[0].mxu0
  %v2347 = vadd.f32 %v2310, %v2346
  %v2348 = vpop.f32.mrb[0].mxu0
  %v2349 = vpop.f32.mrb[0].mxu0
  %v2350 = vadd.f32 %v2310, %v2349
  %v2351 = vpop.f32.mrb[0].mxu0
  %2352 = vdwg.mxu0
  %v2353 = vpack.c.bf16 %v2231, %v2231
  %v2354 = vpack.c.bf16 %v2234, %v2234
  %v2355 = vpack.c.bf16 %v2291, %v2291
  %v2356 = vpack.c.bf16 %v2294, %v2294
  %v2358 = vsel %vm338, %v2353, 0
  %v2361 = vsel %vm338, %v2355, 0
  %2363 = vmatprep.subr.bf16.mxu0 0
  %2364 = vmatpush1.bf16.xpose.msra.mxu0 %v2361
  %2365 = vmatprep.subr.bf16.mxu0 0
  %2366 = vmatpush1.bf16.xpose.msra.mxu0 0
  %2367 = vmatprep.subr.bf16.mxu0 0
  %2368 = vmatpush1.bf16.xpose.msra.mxu0 0
  %2369 = vmatprep.subr.bf16.mxu0 0
  %2370 = vmatpush1.bf16.xpose.msra.mxu0 0
  %2371 = vmatprep.subr.bf16.mxu0 0
  %2372 = vmatpush1.bf16.xpose.msra.mxu0 0
  %2373 = vmatprep.subr.bf16.mxu0 0
  %2374 = vmatpush1.bf16.xpose.msra.mxu0 0
  %2375 = vmatprep.subr.bf16.mxu0 0
  %2376 = vmatpush1.bf16.xpose.msra.mxu0 0
  %2377 = vmatprep.subr.bf16.mxu0 0
  %2378 = vmatpush1.bf16.xpose.msra.mxu0 0
  %2379 = vmatprep.subr.bf16.mxu0 0
  %2380 = vmatpush1.bf16.xpose.msra.mxu0 0
  %2381 = vmatprep.subr.bf16.mxu0 0
  %2382 = vmatpush1.bf16.xpose.msra.mxu0 0
  %2383 = vmatprep.subr.bf16.mxu0 0
  %2384 = vmatpush1.bf16.xpose.msra.mxu0 0
  %2385 = vmatprep.subr.bf16.mxu0 0
  %2386 = vmatpush1.bf16.xpose.msra.mxu0 0
  %2387 = vmatprep.subr.bf16.mxu0 0
  %2388 = vmatpush1.bf16.xpose.msra.mxu0 0
  %2389 = vmatprep.subr.bf16.mxu0 0
  %2390 = vmatpush1.bf16.xpose.msra.mxu0 0
  %2391 = vmatprep.subr.bf16.mxu0 0
  %2392 = vmatpush1.bf16.xpose.msra.mxu0 0
  %2393 = vmatprep.subr.bf16.mxu0 0
  %2394 = vmatpush1.bf16.xpose.msra.mxu0 0
  %2395 = vmatprep.mubr.bf16.mxu0 0
  %2396 = vmatmul.mubr.bf16.gmra.mrb[0].mxu0 %v2358
  %v2397 = vpop.f32.mrb[0].mxu0
  %v2398 = vadd.f32 %v2173, %v2397
  %v2399 = vpop.f32.mrb[0].mxu0
  %v2400 = vpop.f32.mrb[0].mxu0
  %v2401 = vpop.f32.mrb[0].mxu0
  %2402 = vdwg.mxu0
  %v2404 = vsel %vm338, %v2354, 0
  %v2407 = vsel %vm338, %v2356, 0
  %2409 = vmatprep.subr.bf16.mxu0 0
  %2410 = vmatpush1.bf16.xpose.msra.mxu0 %v2407
  %2411 = vmatprep.subr.bf16.mxu0 0
  %2412 = vmatpush1.bf16.xpose.msra.mxu0 0
  %2413 = vmatprep.subr.bf16.mxu0 0
  %2414 = vmatpush1.bf16.xpose.msra.mxu0 0
  %2415 = vmatprep.subr.bf16.mxu0 0
  %2416 = vmatpush1.bf16.xpose.msra.mxu0 0
  %2417 = vmatprep.subr.bf16.mxu0 0
  %2418 = vmatpush1.bf16.xpose.msra.mxu0 0
  %2419 = vmatprep.subr.bf16.mxu0 0
  %2420 = vmatpush1.bf16.xpose.msra.mxu0 0
  %2421 = vmatprep.subr.bf16.mxu0 0
  %2422 = vmatpush1.bf16.xpose.msra.mxu0 0
  %2423 = vmatprep.subr.bf16.mxu0 0
  %2424 = vmatpush1.bf16.xpose.msra.mxu0 0
  %2425 = vmatprep.subr.bf16.mxu0 0
  %2426 = vmatpush1.bf16.xpose.msra.mxu0 0
  %2427 = vmatprep.subr.bf16.mxu0 0
  %2428 = vmatpush1.bf16.xpose.msra.mxu0 0
  %2429 = vmatprep.subr.bf16.mxu0 0
  %2430 = vmatpush1.bf16.xpose.msra.mxu0 0
  %2431 = vmatprep.subr.bf16.mxu0 0
  %2432 = vmatpush1.bf16.xpose.msra.mxu0 0
  %2433 = vmatprep.subr.bf16.mxu0 0
  %2434 = vmatpush1.bf16.xpose.msra.mxu0 0
  %2435 = vmatprep.subr.bf16.mxu0 0
  %2436 = vmatpush1.bf16.xpose.msra.mxu0 0
  %2437 = vmatprep.subr.bf16.mxu0 0
  %2438 = vmatpush1.bf16.xpose.msra.mxu0 0
  %2439 = vmatprep.subr.bf16.mxu0 0
  %2440 = vmatpush1.bf16.xpose.msra.mxu0 0
  %2441 = vmatprep.mubr.bf16.mxu0 0
  %2442 = vmatmul.mubr.bf16.gmra.mrb[0].mxu0 %v2404
  %v2443 = vpop.f32.mrb[0].mxu0
  %v2444 = vadd.f32 %v2174, %v2443
  %v2445 = vpop.f32.mrb[0].mxu0
  %v2446 = vpop.f32.mrb[0].mxu0
  %v2447 = vpop.f32.mrb[0].mxu0
  %2448 = vdwg.mxu0
  %v2449 = vsel %vm431, %v2398, -inf
  %2450 = vmax.xlane.f32.xlu0 %v2449
  %v2451 = vpop.xlane.xlu0 %2450
  %v2452 = vsel %vm431, %v2444, -inf
  %2453 = vmax.xlane.f32.xlu0 %v2452
  %v2454 = vpop.xlane.xlu0 %2453
  %v2455 = vsub.f32 %v2398, %v2451
  %v2456 = vsub.f32 %v2444, %v2454
  %v2457 = vmul.f32 %v2455, 1.442695
  %v2458 = vpow.pop %v2457
  %v2459 = vmul.f32 %v2456, 1.442695
  %v2460 = vpow.pop %v2459
  %v2461 = vsel %vm431, %v2458, 0.0
  %2462 = vadd.xlane.f32.xlu0 %v2461
  %v2463 = vpop.xlane.xlu0 %2462
  %v2464 = vsel %vm431, %v2460, 0.0
  %2465 = vadd.xlane.f32.xlu0 %v2464
  %v2466 = vpop.xlane.xlu0 %2465
  %v2467 = vrcp.pop %v2463
  %v2468 = vrcp.pop %v2466
  %v2469 = vmul.f32 %v2458, %v2467
  %v2470 = vmul.f32 %v2460, %v2468
  %v2471 = vpack.c.bf16 %v2469, %v2469
  %v2472 = vpack.c.bf16 %v2470, %v2470
  %v2473 = vpack.c.bf16 %v2347, %v2347
  %v2474 = vpack.c.bf16 %v2350, %v2350
  %v2476 = vsel %vm431, %v2471, 0
  %v2479 = vsel %vm461, %v2473, 0
  %2481 = vmatprep.subr.bf16.mxu0 0
  %2482 = vmatpush1.bf16.msra.mxu0 %v2479
  %2483 = vmatprep.subr.bf16.mxu0 0
  %2484 = vmatpush1.bf16.msra.mxu0 0
  %2485 = vmatprep.subr.bf16.mxu0 0
  %2486 = vmatpush1.bf16.msra.mxu0 0
  %2487 = vmatprep.subr.bf16.mxu0 0
  %2488 = vmatpush1.bf16.msra.mxu0 0
  %2489 = vmatprep.subr.bf16.mxu0 0
  %2490 = vmatpush1.bf16.msra.mxu0 0
  %2491 = vmatprep.subr.bf16.mxu0 0
  %2492 = vmatpush1.bf16.msra.mxu0 0
  %2493 = vmatprep.subr.bf16.mxu0 0
  %2494 = vmatpush1.bf16.msra.mxu0 0
  %2495 = vmatprep.subr.bf16.mxu0 0
  %2496 = vmatpush1.bf16.msra.mxu0 0
  %2497 = vmatprep.subr.bf16.mxu0 0
  %2498 = vmatpush1.bf16.msra.mxu0 0
  %2499 = vmatprep.subr.bf16.mxu0 0
  %2500 = vmatpush1.bf16.msra.mxu0 0
  %2501 = vmatprep.subr.bf16.mxu0 0
  %2502 = vmatpush1.bf16.msra.mxu0 0
  %2503 = vmatprep.subr.bf16.mxu0 0
  %2504 = vmatpush1.bf16.msra.mxu0 0
  %2505 = vmatprep.subr.bf16.mxu0 0
  %2506 = vmatpush1.bf16.msra.mxu0 0
  %2507 = vmatprep.subr.bf16.mxu0 0
  %2508 = vmatpush1.bf16.msra.mxu0 0
  %2509 = vmatprep.subr.bf16.mxu0 0
  %2510 = vmatpush1.bf16.msra.mxu0 0
  %2511 = vmatprep.subr.bf16.mxu0 0
  %2512 = vmatpush1.bf16.msra.mxu0 0
  %2513 = vmatprep.mubr.bf16.mxu0 0
  %2514 = vmatmul.mubr.bf16.gmra.mrb[0].mxu0 %v2476
  %v2515 = vpop.f32.mrb[0].mxu0
  %v2516 = vadd.f32 0.0, %v2515
  %v2517 = vpop.f32.mrb[0].mxu0
  %v2518 = vpop.f32.mrb[0].mxu0
  %v2519 = vpop.f32.mrb[0].mxu0
  %2520 = vdwg.mxu0
  %v2522 = vsel %vm431, %v2472, 0
  %v2525 = vsel %vm461, %v2474, 0
  %2527 = vmatprep.subr.bf16.mxu0 0
  %2528 = vmatpush1.bf16.msra.mxu0 %v2525
  %2529 = vmatprep.subr.bf16.mxu0 0
  %2530 = vmatpush1.bf16.msra.mxu0 0
  %2531 = vmatprep.subr.bf16.mxu0 0
  %2532 = vmatpush1.bf16.msra.mxu0 0
  %2533 = vmatprep.subr.bf16.mxu0 0
  %2534 = vmatpush1.bf16.msra.mxu0 0
  %2535 = vmatprep.subr.bf16.mxu0 0
  %2536 = vmatpush1.bf16.msra.mxu0 0
  %2537 = vmatprep.subr.bf16.mxu0 0
  %2538 = vmatpush1.bf16.msra.mxu0 0
  %2539 = vmatprep.subr.bf16.mxu0 0
  %2540 = vmatpush1.bf16.msra.mxu0 0
  %2541 = vmatprep.subr.bf16.mxu0 0
  %2542 = vmatpush1.bf16.msra.mxu0 0
  %2543 = vmatprep.subr.bf16.mxu0 0
  %2544 = vmatpush1.bf16.msra.mxu0 0
  %2545 = vmatprep.subr.bf16.mxu0 0
  %2546 = vmatpush1.bf16.msra.mxu0 0
  %2547 = vmatprep.subr.bf16.mxu0 0
  %2548 = vmatpush1.bf16.msra.mxu0 0
  %2549 = vmatprep.subr.bf16.mxu0 0
  %2550 = vmatpush1.bf16.msra.mxu0 0
  %2551 = vmatprep.subr.bf16.mxu0 0
  %2552 = vmatpush1.bf16.msra.mxu0 0
  %2553 = vmatprep.subr.bf16.mxu0 0
  %2554 = vmatpush1.bf16.msra.mxu0 0
  %2555 = vmatprep.subr.bf16.mxu0 0
  %2556 = vmatpush1.bf16.msra.mxu0 0
  %2557 = vmatprep.subr.bf16.mxu0 0
  %2558 = vmatpush1.bf16.msra.mxu0 0
  %2559 = vmatprep.mubr.bf16.mxu0 0
  %2560 = vmatmul.mubr.bf16.gmra.mrb[0].mxu0 %v2522
  %v2561 = vpop.f32.mrb[0].mxu0
  %v2562 = vadd.f32 0.0, %v2561
  %v2563 = vpop.f32.mrb[0].mxu0
  %v2564 = vpop.f32.mrb[0].mxu0
  %v2565 = vpop.f32.mrb[0].mxu0
  %2566 = vdwg.mxu0
  %v2567 = vpack.c.bf16 %v2562, %v2516
  %v2568 = vpack.c.bf16 %v2176, %v2175
  %s2569 = scalar_lea.vmem %s43, 32
  %v2570 = vld [vmem:[%s2569] sm:$0xff]
  %v2571 = vld [vmem:[%s2569 + $0x8] sm:$0xff]
  %v2572 = vld [vmem:[%s2569 + $0x10] sm:$0xff]
  %v2573 = vld [vmem:[%s2569 + $0x18] sm:$0xff]
  %s2574 = scalar_lea.vmem %s45, 1
  %v2575 = vld [vmem:[%s2574] sm:$0x1]
  %v2576 = vpack.c.bf16 %v2571, %v2570
  %v2577 = vpack.c.bf16 %v2573, %v2572
  %v2579 = vlaneseq
  %v2580 = vshrl.u32 %v2579, 7
  %v2581 = vsub.s32 0, %v2580
  %v2582 = vrot.slane %v2575, %v2581
  %2584 = vmatprep.subr.bf16.mxu0 0
  %2585 = vmatpush1.bf16.msra.mxu0 %v2576
  %2586 = vmatprep.subr.bf16.mxu0 0
  %2587 = vmatpush1.bf16.msra.mxu0 %v2577
  %2588 = vmatprep.subr.bf16.mxu0 0
  %2589 = vmatpush1.bf16.msra.mxu0 0
  %2590 = vmatprep.subr.bf16.mxu0 0
  %2591 = vmatpush1.bf16.msra.mxu0 0
  %2592 = vmatprep.subr.bf16.mxu0 0
  %2593 = vmatpush1.bf16.msra.mxu0 0
  %2594 = vmatprep.subr.bf16.mxu0 0
  %2595 = vmatpush1.bf16.msra.mxu0 0
  %2596 = vmatprep.subr.bf16.mxu0 0
  %2597 = vmatpush1.bf16.msra.mxu0 0
  %2598 = vmatprep.subr.bf16.mxu0 0
  %2599 = vmatpush1.bf16.msra.mxu0 0
  %2600 = vmatprep.subr.bf16.mxu0 0
  %2601 = vmatpush1.bf16.msra.mxu0 0
  %2602 = vmatprep.subr.bf16.mxu0 0
  %2603 = vmatpush1.bf16.msra.mxu0 0
  %2604 = vmatprep.subr.bf16.mxu0 0
  %2605 = vmatpush1.bf16.msra.mxu0 0
  %2606 = vmatprep.subr.bf16.mxu0 0
  %2607 = vmatpush1.bf16.msra.mxu0 0
  %2608 = vmatprep.subr.bf16.mxu0 0
  %2609 = vmatpush1.bf16.msra.mxu0 0
  %2610 = vmatprep.subr.bf16.mxu0 0
  %2611 = vmatpush1.bf16.msra.mxu0 0
  %2612 = vmatprep.subr.bf16.mxu0 0
  %2613 = vmatpush1.bf16.msra.mxu0 0
  %2614 = vmatprep.subr.bf16.mxu0 0
  %2615 = vmatpush1.bf16.msra.mxu0 0
  %2616 = vmatprep.mubr.bf16.mxu0 0
  %2617 = vmatmul.mubr.bf16.gmra.mrb[0].mxu0 %v2194
  %v2618 = vpop.f32.mrb[0].mxu0
  %v2619 = vadd.f32 %v2582, %v2618
  %v2620 = vpop.f32.mrb[0].mxu0
  %v2621 = vpop.f32.mrb[0].mxu0
  %v2622 = vadd.f32 %v2582, %v2621
  %v2623 = vpop.f32.mrb[0].mxu0
  %2624 = vdwg.mxu0
  %s2625 = scalar_lea.vmem %s43, 96
  %v2626 = vld [vmem:[%s2625] sm:$0xff]
  %v2627 = vld [vmem:[%s2625 + $0x8] sm:$0xff]
  %v2628 = vld [vmem:[%s2625 + $0x10] sm:$0xff]
  %v2629 = vld [vmem:[%s2625 + $0x18] sm:$0xff]
  %s2630 = scalar_lea.vmem %s45, 3
  %v2631 = vld [vmem:[%s2630] sm:$0x1]
  %v2632 = vpack.c.bf16 %v2627, %v2626
  %v2633 = vpack.c.bf16 %v2629, %v2628
  %v2635 = vlaneseq
  %v2636 = vshrl.u32 %v2635, 7
  %v2637 = vsub.s32 0, %v2636
  %v2638 = vrot.slane %v2631, %v2637
  %2640 = vmatprep.subr.bf16.mxu0 0
  %2641 = vmatpush1.bf16.msra.mxu0 %v2632
  %2642 = vmatprep.subr.bf16.mxu0 0
  %2643 = vmatpush1.bf16.msra.mxu0 %v2633
  %2644 = vmatprep.subr.bf16.mxu0 0
  %2645 = vmatpush1.bf16.msra.mxu0 0
  %2646 = vmatprep.subr.bf16.mxu0 0
  %2647 = vmatpush1.bf16.msra.mxu0 0
  %2648 = vmatprep.subr.bf16.mxu0 0
  %2649 = vmatpush1.bf16.msra.mxu0 0
  %2650 = vmatprep.subr.bf16.mxu0 0
  %2651 = vmatpush1.bf16.msra.mxu0 0
  %2652 = vmatprep.subr.bf16.mxu0 0
  %2653 = vmatpush1.bf16.msra.mxu0 0
  %2654 = vmatprep.subr.bf16.mxu0 0
  %2655 = vmatpush1.bf16.msra.mxu0 0
  %2656 = vmatprep.subr.bf16.mxu0 0
  %2657 = vmatpush1.bf16.msra.mxu0 0
  %2658 = vmatprep.subr.bf16.mxu0 0
  %2659 = vmatpush1.bf16.msra.mxu0 0
  %2660 = vmatprep.subr.bf16.mxu0 0
  %2661 = vmatpush1.bf16.msra.mxu0 0
  %2662 = vmatprep.subr.bf16.mxu0 0
  %2663 = vmatpush1.bf16.msra.mxu0 0
  %2664 = vmatprep.subr.bf16.mxu0 0
  %2665 = vmatpush1.bf16.msra.mxu0 0
  %2666 = vmatprep.subr.bf16.mxu0 0
  %2667 = vmatpush1.bf16.msra.mxu0 0
  %2668 = vmatprep.subr.bf16.mxu0 0
  %2669 = vmatpush1.bf16.msra.mxu0 0
  %2670 = vmatprep.subr.bf16.mxu0 0
  %2671 = vmatpush1.bf16.msra.mxu0 0
  %2672 = vmatprep.mubr.bf16.mxu0 0
  %2673 = vmatmul.mubr.bf16.gmra.mrb[0].mxu0 %v2254
  %v2674 = vpop.f32.mrb[0].mxu0
  %v2675 = vadd.f32 %v2638, %v2674
  %v2676 = vpop.f32.mrb[0].mxu0
  %v2677 = vpop.f32.mrb[0].mxu0
  %v2678 = vadd.f32 %v2638, %v2677
  %v2679 = vpop.f32.mrb[0].mxu0
  %2680 = vdwg.mxu0
  %s2681 = scalar_lea.vmem %s43, 160
  %v2682 = vld [vmem:[%s2681] sm:$0xff]
  %v2683 = vld [vmem:[%s2681 + $0x8] sm:$0xff]
  %v2684 = vld [vmem:[%s2681 + $0x10] sm:$0xff]
  %v2685 = vld [vmem:[%s2681 + $0x18] sm:$0xff]
  %s2686 = scalar_lea.vmem %s45, 5
  %v2687 = vld [vmem:[%s2686] sm:$0x1]
  %v2688 = vpack.c.bf16 %v2683, %v2682
  %v2689 = vpack.c.bf16 %v2685, %v2684
  %v2691 = vlaneseq
  %v2692 = vshrl.u32 %v2691, 7
  %v2693 = vsub.s32 0, %v2692
  %v2694 = vrot.slane %v2687, %v2693
  %2696 = vmatprep.subr.bf16.mxu0 0
  %2697 = vmatpush1.bf16.msra.mxu0 %v2688
  %2698 = vmatprep.subr.bf16.mxu0 0
  %2699 = vmatpush1.bf16.msra.mxu0 %v2689
  %2700 = vmatprep.subr.bf16.mxu0 0
  %2701 = vmatpush1.bf16.msra.mxu0 0
  %2702 = vmatprep.subr.bf16.mxu0 0
  %2703 = vmatpush1.bf16.msra.mxu0 0
  %2704 = vmatprep.subr.bf16.mxu0 0
  %2705 = vmatpush1.bf16.msra.mxu0 0
  %2706 = vmatprep.subr.bf16.mxu0 0
  %2707 = vmatpush1.bf16.msra.mxu0 0
  %2708 = vmatprep.subr.bf16.mxu0 0
  %2709 = vmatpush1.bf16.msra.mxu0 0
  %2710 = vmatprep.subr.bf16.mxu0 0
  %2711 = vmatpush1.bf16.msra.mxu0 0
  %2712 = vmatprep.subr.bf16.mxu0 0
  %2713 = vmatpush1.bf16.msra.mxu0 0
  %2714 = vmatprep.subr.bf16.mxu0 0
  %2715 = vmatpush1.bf16.msra.mxu0 0
  %2716 = vmatprep.subr.bf16.mxu0 0
  %2717 = vmatpush1.bf16.msra.mxu0 0
  %2718 = vmatprep.subr.bf16.mxu0 0
  %2719 = vmatpush1.bf16.msra.mxu0 0
  %2720 = vmatprep.subr.bf16.mxu0 0
  %2721 = vmatpush1.bf16.msra.mxu0 0
  %2722 = vmatprep.subr.bf16.mxu0 0
  %2723 = vmatpush1.bf16.msra.mxu0 0
  %2724 = vmatprep.subr.bf16.mxu0 0
  %2725 = vmatpush1.bf16.msra.mxu0 0
  %2726 = vmatprep.subr.bf16.mxu0 0
  %2727 = vmatpush1.bf16.msra.mxu0 0
  %2728 = vmatprep.mubr.bf16.mxu0 0
  %2729 = vmatmul.mubr.bf16.gmra.mrb[0].mxu0 %v2254
  %v2730 = vpop.f32.mrb[0].mxu0
  %v2731 = vadd.f32 %v2694, %v2730
  %v2732 = vpop.f32.mrb[0].mxu0
  %v2733 = vpop.f32.mrb[0].mxu0
  %v2734 = vadd.f32 %v2694, %v2733
  %v2735 = vpop.f32.mrb[0].mxu0
  %2736 = vdwg.mxu0
  %v2737 = vpack.c.bf16 %v2619, %v2619
  %v2738 = vpack.c.bf16 %v2622, %v2622
  %v2739 = vpack.c.bf16 %v2675, %v2675
  %v2740 = vpack.c.bf16 %v2678, %v2678
  %v2742 = vsel %vm338, %v2737, 0
  %v2745 = vsel %vm338, %v2739, 0
  %2747 = vmatprep.subr.bf16.mxu0 0
  %2748 = vmatpush1.bf16.xpose.msra.mxu0 %v2745
  %2749 = vmatprep.subr.bf16.mxu0 0
  %2750 = vmatpush1.bf16.xpose.msra.mxu0 0
  %2751 = vmatprep.subr.bf16.mxu0 0
  %2752 = vmatpush1.bf16.xpose.msra.mxu0 0
  %2753 = vmatprep.subr.bf16.mxu0 0
  %2754 = vmatpush1.bf16.xpose.msra.mxu0 0
  %2755 = vmatprep.subr.bf16.mxu0 0
  %2756 = vmatpush1.bf16.xpose.msra.mxu0 0
  %2757 = vmatprep.subr.bf16.mxu0 0
  %2758 = vmatpush1.bf16.xpose.msra.mxu0 0
  %2759 = vmatprep.subr.bf16.mxu0 0
  %2760 = vmatpush1.bf16.xpose.msra.mxu0 0
  %2761 = vmatprep.subr.bf16.mxu0 0
  %2762 = vmatpush1.bf16.xpose.msra.mxu0 0
  %2763 = vmatprep.subr.bf16.mxu0 0
  %2764 = vmatpush1.bf16.xpose.msra.mxu0 0
  %2765 = vmatprep.subr.bf16.mxu0 0
  %2766 = vmatpush1.bf16.xpose.msra.mxu0 0
  %2767 = vmatprep.subr.bf16.mxu0 0
  %2768 = vmatpush1.bf16.xpose.msra.mxu0 0
  %2769 = vmatprep.subr.bf16.mxu0 0
  %2770 = vmatpush1.bf16.xpose.msra.mxu0 0
  %2771 = vmatprep.subr.bf16.mxu0 0
  %2772 = vmatpush1.bf16.xpose.msra.mxu0 0
  %2773 = vmatprep.subr.bf16.mxu0 0
  %2774 = vmatpush1.bf16.xpose.msra.mxu0 0
  %2775 = vmatprep.subr.bf16.mxu0 0
  %2776 = vmatpush1.bf16.xpose.msra.mxu0 0
  %2777 = vmatprep.subr.bf16.mxu0 0
  %2778 = vmatpush1.bf16.xpose.msra.mxu0 0
  %2779 = vmatprep.mubr.bf16.mxu0 0
  %2780 = vmatmul.mubr.bf16.gmra.mrb[0].mxu0 %v2742
  %v2781 = vpop.f32.mrb[0].mxu0
  %v2782 = vadd.f32 %v2173, %v2781
  %v2783 = vpop.f32.mrb[0].mxu0
  %v2784 = vpop.f32.mrb[0].mxu0
  %v2785 = vpop.f32.mrb[0].mxu0
  %2786 = vdwg.mxu0
  %v2788 = vsel %vm338, %v2738, 0
  %v2791 = vsel %vm338, %v2740, 0
  %2793 = vmatprep.subr.bf16.mxu0 0
  %2794 = vmatpush1.bf16.xpose.msra.mxu0 %v2791
  %2795 = vmatprep.subr.bf16.mxu0 0
  %2796 = vmatpush1.bf16.xpose.msra.mxu0 0
  %2797 = vmatprep.subr.bf16.mxu0 0
  %2798 = vmatpush1.bf16.xpose.msra.mxu0 0
  %2799 = vmatprep.subr.bf16.mxu0 0
  %2800 = vmatpush1.bf16.xpose.msra.mxu0 0
  %2801 = vmatprep.subr.bf16.mxu0 0
  %2802 = vmatpush1.bf16.xpose.msra.mxu0 0
  %2803 = vmatprep.subr.bf16.mxu0 0
  %2804 = vmatpush1.bf16.xpose.msra.mxu0 0
  %2805 = vmatprep.subr.bf16.mxu0 0
  %2806 = vmatpush1.bf16.xpose.msra.mxu0 0
  %2807 = vmatprep.subr.bf16.mxu0 0
  %2808 = vmatpush1.bf16.xpose.msra.mxu0 0
  %2809 = vmatprep.subr.bf16.mxu0 0
  %2810 = vmatpush1.bf16.xpose.msra.mxu0 0
  %2811 = vmatprep.subr.bf16.mxu0 0
  %2812 = vmatpush1.bf16.xpose.msra.mxu0 0
  %2813 = vmatprep.subr.bf16.mxu0 0
  %2814 = vmatpush1.bf16.xpose.msra.mxu0 0
  %2815 = vmatprep.subr.bf16.mxu0 0
  %2816 = vmatpush1.bf16.xpose.msra.mxu0 0
  %2817 = vmatprep.subr.bf16.mxu0 0
  %2818 = vmatpush1.bf16.xpose.msra.mxu0 0
  %2819 = vmatprep.subr.bf16.mxu0 0
  %2820 = vmatpush1.bf16.xpose.msra.mxu0 0
  %2821 = vmatprep.subr.bf16.mxu0 0
  %2822 = vmatpush1.bf16.xpose.msra.mxu0 0
  %2823 = vmatprep.subr.bf16.mxu0 0
  %2824 = vmatpush1.bf16.xpose.msra.mxu0 0
  %2825 = vmatprep.mubr.bf16.mxu0 0
  %2826 = vmatmul.mubr.bf16.gmra.mrb[0].mxu0 %v2788
  %v2827 = vpop.f32.mrb[0].mxu0
  %v2828 = vadd.f32 %v2174, %v2827
  %v2829 = vpop.f32.mrb[0].mxu0
  %v2830 = vpop.f32.mrb[0].mxu0
  %v2831 = vpop.f32.mrb[0].mxu0
  %2832 = vdwg.mxu0
  %v2833 = vsel %vm431, %v2782, -inf
  %2834 = vmax.xlane.f32.xlu0 %v2833
  %v2835 = vpop.xlane.xlu0 %2834
  %v2836 = vsel %vm431, %v2828, -inf
  %2837 = vmax.xlane.f32.xlu0 %v2836
  %v2838 = vpop.xlane.xlu0 %2837
  %v2839 = vsub.f32 %v2782, %v2835
  %v2840 = vsub.f32 %v2828, %v2838
  %v2841 = vmul.f32 %v2839, 1.442695
  %v2842 = vpow.pop %v2841
  %v2843 = vmul.f32 %v2840, 1.442695
  %v2844 = vpow.pop %v2843
  %v2845 = vsel %vm431, %v2842, 0.0
  %2846 = vadd.xlane.f32.xlu0 %v2845
  %v2847 = vpop.xlane.xlu0 %2846
  %v2848 = vsel %vm431, %v2844, 0.0
  %2849 = vadd.xlane.f32.xlu0 %v2848
  %v2850 = vpop.xlane.xlu0 %2849
  %v2851 = vrcp.pop %v2847
  %v2852 = vrcp.pop %v2850
  %v2853 = vmul.f32 %v2842, %v2851
  %v2854 = vmul.f32 %v2844, %v2852
  %v2855 = vpack.c.bf16 %v2853, %v2853
  %v2856 = vpack.c.bf16 %v2854, %v2854
  %v2857 = vpack.c.bf16 %v2731, %v2731
  %v2858 = vpack.c.bf16 %v2734, %v2734
  %v2860 = vsel %vm431, %v2855, 0
  %v2863 = vsel %vm461, %v2857, 0
  %2865 = vmatprep.subr.bf16.mxu0 0
  %2866 = vmatpush1.bf16.msra.mxu0 %v2863
  %2867 = vmatprep.subr.bf16.mxu0 0
  %2868 = vmatpush1.bf16.msra.mxu0 0
  %2869 = vmatprep.subr.bf16.mxu0 0
  %2870 = vmatpush1.bf16.msra.mxu0 0
  %2871 = vmatprep.subr.bf16.mxu0 0
  %2872 = vmatpush1.bf16.msra.mxu0 0
  %2873 = vmatprep.subr.bf16.mxu0 0
  %2874 = vmatpush1.bf16.msra.mxu0 0
  %2875 = vmatprep.subr.bf16.mxu0 0
  %2876 = vmatpush1.bf16.msra.mxu0 0
  %2877 = vmatprep.subr.bf16.mxu0 0
  %2878 = vmatpush1.bf16.msra.mxu0 0
  %2879 = vmatprep.subr.bf16.mxu0 0
  %2880 = vmatpush1.bf16.msra.mxu0 0
  %2881 = vmatprep.subr.bf16.mxu0 0
  %2882 = vmatpush1.bf16.msra.mxu0 0
  %2883 = vmatprep.subr.bf16.mxu0 0
  %2884 = vmatpush1.bf16.msra.mxu0 0
  %2885 = vmatprep.subr.bf16.mxu0 0
  %2886 = vmatpush1.bf16.msra.mxu0 0
  %2887 = vmatprep.subr.bf16.mxu0 0
  %2888 = vmatpush1.bf16.msra.mxu0 0
  %2889 = vmatprep.subr.bf16.mxu0 0
  %2890 = vmatpush1.bf16.msra.mxu0 0
  %2891 = vmatprep.subr.bf16.mxu0 0
  %2892 = vmatpush1.bf16.msra.mxu0 0
  %2893 = vmatprep.subr.bf16.mxu0 0
  %2894 = vmatpush1.bf16.msra.mxu0 0
  %2895 = vmatprep.subr.bf16.mxu0 0
  %2896 = vmatpush1.bf16.msra.mxu0 0
  %2897 = vmatprep.mubr.bf16.mxu0 0
  %2898 = vmatmul.mubr.bf16.gmra.mrb[0].mxu0 %v2860
  %v2899 = vpop.f32.mrb[0].mxu0
  %v2900 = vadd.f32 0.0, %v2899
  %v2901 = vpop.f32.mrb[0].mxu0
  %v2902 = vpop.f32.mrb[0].mxu0
  %v2903 = vpop.f32.mrb[0].mxu0
  %2904 = vdwg.mxu0
  %v2906 = vsel %vm431, %v2856, 0
  %v2909 = vsel %vm461, %v2858, 0
  %2911 = vmatprep.subr.bf16.mxu0 0
  %2912 = vmatpush1.bf16.msra.mxu0 %v2909
  %2913 = vmatprep.subr.bf16.mxu0 0
  %2914 = vmatpush1.bf16.msra.mxu0 0
  %2915 = vmatprep.subr.bf16.mxu0 0
  %2916 = vmatpush1.bf16.msra.mxu0 0
  %2917 = vmatprep.subr.bf16.mxu0 0
  %2918 = vmatpush1.bf16.msra.mxu0 0
  %2919 = vmatprep.subr.bf16.mxu0 0
  %2920 = vmatpush1.bf16.msra.mxu0 0
  %2921 = vmatprep.subr.bf16.mxu0 0
  %2922 = vmatpush1.bf16.msra.mxu0 0
  %2923 = vmatprep.subr.bf16.mxu0 0
  %2924 = vmatpush1.bf16.msra.mxu0 0
  %2925 = vmatprep.subr.bf16.mxu0 0
  %2926 = vmatpush1.bf16.msra.mxu0 0
  %2927 = vmatprep.subr.bf16.mxu0 0
  %2928 = vmatpush1.bf16.msra.mxu0 0
  %2929 = vmatprep.subr.bf16.mxu0 0
  %2930 = vmatpush1.bf16.msra.mxu0 0
  %2931 = vmatprep.subr.bf16.mxu0 0
  %2932 = vmatpush1.bf16.msra.mxu0 0
  %2933 = vmatprep.subr.bf16.mxu0 0
  %2934 = vmatpush1.bf16.msra.mxu0 0
  %2935 = vmatprep.subr.bf16.mxu0 0
  %2936 = vmatpush1.bf16.msra.mxu0 0
  %2937 = vmatprep.subr.bf16.mxu0 0
  %2938 = vmatpush1.bf16.msra.mxu0 0
  %2939 = vmatprep.subr.bf16.mxu0 0
  %2940 = vmatpush1.bf16.msra.mxu0 0
  %2941 = vmatprep.subr.bf16.mxu0 0
  %2942 = vmatpush1.bf16.msra.mxu0 0
  %2943 = vmatprep.mubr.bf16.mxu0 0
  %2944 = vmatmul.mubr.bf16.gmra.mrb[0].mxu0 %v2906
  %v2945 = vpop.f32.mrb[0].mxu0
  %v2946 = vadd.f32 0.0, %v2945
  %v2947 = vpop.f32.mrb[0].mxu0
  %v2948 = vpop.f32.mrb[0].mxu0
  %v2949 = vpop.f32.mrb[0].mxu0
  %2950 = vdwg.mxu0
  %v2951 = vpack.c.bf16 %v2946, %v2900
  %v2952 = vpack.c.bf16 %v2178, %v2177
  %v2954 = vsel %vm338, %v2951, 0
  %2956 = vmatprep.subr.bf16.mxu0 0
  %2957 = vmatpush1.bf16.msra.mxu0 %v2952
  %2958 = vmatprep.subr.bf16.mxu0 0
  %2959 = vmatpush1.bf16.msra.mxu0 0
  %2960 = vmatprep.subr.bf16.mxu0 0
  %2961 = vmatpush1.bf16.msra.mxu0 0
  %2962 = vmatprep.subr.bf16.mxu0 0
  %2963 = vmatpush1.bf16.msra.mxu0 0
  %2964 = vmatprep.subr.bf16.mxu0 0
  %2965 = vmatpush1.bf16.msra.mxu0 0
  %2966 = vmatprep.subr.bf16.mxu0 0
  %2967 = vmatpush1.bf16.msra.mxu0 0
  %2968 = vmatprep.subr.bf16.mxu0 0
  %2969 = vmatpush1.bf16.msra.mxu0 0
  %2970 = vmatprep.subr.bf16.mxu0 0
  %2971 = vmatpush1.bf16.msra.mxu0 0
  %2972 = vmatprep.subr.bf16.mxu0 0
  %2973 = vmatpush1.bf16.msra.mxu0 0
  %2974 = vmatprep.subr.bf16.mxu0 0
  %2975 = vmatpush1.bf16.msra.mxu0 0
  %2976 = vmatprep.subr.bf16.mxu0 0
  %2977 = vmatpush1.bf16.msra.mxu0 0
  %2978 = vmatprep.subr.bf16.mxu0 0
  %2979 = vmatpush1.bf16.msra.mxu0 0
  %2980 = vmatprep.subr.bf16.mxu0 0
  %2981 = vmatpush1.bf16.msra.mxu0 0
  %2982 = vmatprep.subr.bf16.mxu0 0
  %2983 = vmatpush1.bf16.msra.mxu0 0
  %2984 = vmatprep.subr.bf16.mxu0 0
  %2985 = vmatpush1.bf16.msra.mxu0 0
  %2986 = vmatprep.subr.bf16.mxu0 0
  %2987 = vmatpush1.bf16.msra.mxu0 0
  %2988 = vmatprep.mubr.bf16.mxu0 0
  %2989 = vmatmul.mubr.bf16.gmra.mrb[0].mxu0 %v2954
  %v2990 = vpop.f32.mrb[0].mxu0
  %v2991 = vadd.f32 0.0, %v2990
  %v2992 = vpop.f32.mrb[0].mxu0
  %v2993 = vpop.f32.mrb[0].mxu0
  %v2994 = vadd.f32 0.0, %v2993
  %v2995 = vpop.f32.mrb[0].mxu0
  %2996 = vdwg.mxu0
  %v2998 = vsel %vm338, %v2567, 0
  %3000 = vmatprep.subr.bf16.mxu0 0
  %3001 = vmatpush1.bf16.msra.mxu0 %v2568
  %3002 = vmatprep.subr.bf16.mxu0 0
  %3003 = vmatpush1.bf16.msra.mxu0 0
  %3004 = vmatprep.subr.bf16.mxu0 0
  %3005 = vmatpush1.bf16.msra.mxu0 0
  %3006 = vmatprep.subr.bf16.mxu0 0
  %3007 = vmatpush1.bf16.msra.mxu0 0
  %3008 = vmatprep.subr.bf16.mxu0 0
  %3009 = vmatpush1.bf16.msra.mxu0 0
  %3010 = vmatprep.subr.bf16.mxu0 0
  %3011 = vmatpush1.bf16.msra.mxu0 0
  %3012 = vmatprep.subr.bf16.mxu0 0
  %3013 = vmatpush1.bf16.msra.mxu0 0
  %3014 = vmatprep.subr.bf16.mxu0 0
  %3015 = vmatpush1.bf16.msra.mxu0 0
  %3016 = vmatprep.subr.bf16.mxu0 0
  %3017 = vmatpush1.bf16.msra.mxu0 0
  %3018 = vmatprep.subr.bf16.mxu0 0
  %3019 = vmatpush1.bf16.msra.mxu0 0
  %3020 = vmatprep.subr.bf16.mxu0 0
  %3021 = vmatpush1.bf16.msra.mxu0 0
  %3022 = vmatprep.subr.bf16.mxu0 0
  %3023 = vmatpush1.bf16.msra.mxu0 0
  %3024 = vmatprep.subr.bf16.mxu0 0
  %3025 = vmatpush1.bf16.msra.mxu0 0
  %3026 = vmatprep.subr.bf16.mxu0 0
  %3027 = vmatpush1.bf16.msra.mxu0 0
  %3028 = vmatprep.subr.bf16.mxu0 0
  %3029 = vmatpush1.bf16.msra.mxu0 0
  %3030 = vmatprep.subr.bf16.mxu0 0
  %3031 = vmatpush1.bf16.msra.mxu0 0
  %3032 = vmatprep.mubr.bf16.mxu0 0
  %3033 = vmatmul.mubr.bf16.gmra.mrb[0].mxu0 %v2998
  %v3034 = vpop.f32.mrb[0].mxu0
  %v3035 = vadd.f32 %v2991, %v3034
  %v3036 = vpop.f32.mrb[0].mxu0
  %v3037 = vpop.f32.mrb[0].mxu0
  %v3038 = vadd.f32 %v2994, %v3037
  %v3039 = vpop.f32.mrb[0].mxu0
  %3040 = vdwg.mxu0
  %v3041 = vld [vmem:[%s49] sm:$0x1]
  %v3043 = vlaneseq
  %v3044 = vshrl.u32 %v3043, 7
  %v3045 = vsub.s32 0, %v3044
  %v3046 = vrot.slane %v3041, %v3045
  %v3048 = vadd.f32 %v3035, %v3046
  %v3049 = vadd.f32 %v3038, %v3046
  %v3050 = vadd.f32 %v2171, %v3048
  %v3051 = vadd.f32 %v2172, %v3049
  %v3052 = vsel %vm177, %v3050, 0.0
  %3053 = vadd.xlane.f32.xlu0 %v3052
  %v3054 = vpop.xlane.xlu0 %3053
  %v3055 = vsel %vm177, %v3051, 0.0
  %3056 = vadd.xlane.f32.xlu0 %v3055
  %v3057 = vpop.xlane.xlu0 %3056
  %v3058 = vmul.f32 %v3054, %v1042
  %v3059 = vmul.f32 %v3057, %v1042
  %v3060 = vsub.f32 %v3050, %v3058
  %v3061 = vsub.f32 %v3051, %v3059
  %v3062 = vmul.f32 %v3060, %v3060
  %v3063 = vmul.f32 %v3061, %v3061
  %v3064 = vsel %vm177, %v3062, 0.0
  %3065 = vadd.xlane.f32.xlu0 %v3064
  %v3066 = vpop.xlane.xlu0 %3065
  %v3067 = vsel %vm177, %v3063, 0.0
  %3068 = vadd.xlane.f32.xlu0 %v3067
  %v3069 = vpop.xlane.xlu0 %3068
  %v3070 = vmul.f32 %v3066, %v1042
  %v3071 = vmul.f32 %v3069, %v1042
  %v3072 = vadd.f32 %v3070, 1e-05
  %v3073 = vadd.f32 %v3071, 1e-05
  %v3074 = vrsqrt.pop %v3072
  %v3075 = vrsqrt.pop %v3073
  %v3076 = vmul.f32 %v3060, %v3074
  %v3077 = vmul.f32 %v3061, %v3075
  %v3078 = vld [vmem:[%s55] sm:$0x1]
  %v3080 = vlaneseq
  %v3081 = vshrl.u32 %v3080, 7
  %v3082 = vsub.s32 0, %v3081
  %v3083 = vrot.slane %v3078, %v3082
  %v3085 = vmul.f32 %v3076, %v3083
  %v3086 = vmul.f32 %v3077, %v3083
  %v3087 = vld [vmem:[%s57] sm:$0x1]
  %v3089 = vlaneseq
  %v3090 = vshrl.u32 %v3089, 7
  %v3091 = vsub.s32 0, %v3090
  %v3092 = vrot.slane %v3087, %v3091
  %v3094 = vadd.f32 %v3085, %v3092
  %v3095 = vadd.f32 %v3086, %v3092
  %v3096 = vld [vmem:[%s63] sm:$0xff]
  %v3097 = vld [vmem:[%s63 + $0x8] sm:$0xff]
  %v3098 = vld [vmem:[%s63 + $0x10] sm:$0xff]
  %v3099 = vld [vmem:[%s63 + $0x18] sm:$0xff]
  %v3100 = vld [vmem:[%s65] sm:$0x1]
  %v3101 = vpack.c.bf16 %v3095, %v3094
  %v3102 = vpack.c.bf16 %v3097, %v3096
  %v3103 = vpack.c.bf16 %v3099, %v3098
  %v3105 = vlaneseq
  %v3106 = vshrl.u32 %v3105, 7
  %v3107 = vsub.s32 0, %v3106
  %v3108 = vrot.slane %v3100, %v3107
  %v3111 = vsel %vm177, %v3101, 0
  %3113 = vmatprep.subr.bf16.mxu0 0
  %3114 = vmatpush1.bf16.msra.mxu0 %v3102
  %3115 = vmatprep.subr.bf16.mxu0 0
  %3116 = vmatpush1.bf16.msra.mxu0 %v3103
  %3117 = vmatprep.subr.bf16.mxu0 0
  %3118 = vmatpush1.bf16.msra.mxu0 0
  %3119 = vmatprep.subr.bf16.mxu0 0
  %3120 = vmatpush1.bf16.msra.mxu0 0
  %3121 = vmatprep.subr.bf16.mxu0 0
  %3122 = vmatpush1.bf16.msra.mxu0 0
  %3123 = vmatprep.subr.bf16.mxu0 0
  %3124 = vmatpush1.bf16.msra.mxu0 0
  %3125 = vmatprep.subr.bf16.mxu0 0
  %3126 = vmatpush1.bf16.msra.mxu0 0
  %3127 = vmatprep.subr.bf16.mxu0 0
  %3128 = vmatpush1.bf16.msra.mxu0 0
  %3129 = vmatprep.subr.bf16.mxu0 0
  %3130 = vmatpush1.bf16.msra.mxu0 0
  %3131 = vmatprep.subr.bf16.mxu0 0
  %3132 = vmatpush1.bf16.msra.mxu0 0
  %3133 = vmatprep.subr.bf16.mxu0 0
  %3134 = vmatpush1.bf16.msra.mxu0 0
  %3135 = vmatprep.subr.bf16.mxu0 0
  %3136 = vmatpush1.bf16.msra.mxu0 0
  %3137 = vmatprep.subr.bf16.mxu0 0
  %3138 = vmatpush1.bf16.msra.mxu0 0
  %3139 = vmatprep.subr.bf16.mxu0 0
  %3140 = vmatpush1.bf16.msra.mxu0 0
  %3141 = vmatprep.subr.bf16.mxu0 0
  %3142 = vmatpush1.bf16.msra.mxu0 0
  %3143 = vmatprep.subr.bf16.mxu0 0
  %3144 = vmatpush1.bf16.msra.mxu0 0
  %3145 = vmatprep.mubr.bf16.mxu0 0
  %3146 = vmatmul.mubr.bf16.gmra.mrb[0].mxu0 %v3111
  %v3147 = vpop.f32.mrb[0].mxu0
  %v3148 = vadd.f32 %v3108, %v3147
  %v3149 = vpop.f32.mrb[0].mxu0
  %v3150 = vpop.f32.mrb[0].mxu0
  %v3151 = vadd.f32 %v3108, %v3150
  %v3152 = vpop.f32.mrb[0].mxu0
  %3153 = vdwg.mxu0
  %v3154 = vmax.f32 %v3148, 0.0
  %v3155 = vmax.f32 %v3151, 0.0
  %v3156 = vld [vmem:[%s67] sm:$0xff]
  %v3157 = vld [vmem:[%s67 + $0x8] sm:$0xff]
  %v3158 = vld [vmem:[%s67 + $0x10] sm:$0xff]
  %v3159 = vld [vmem:[%s67 + $0x18] sm:$0xff]
  %v3160 = vld [vmem:[%s67 + $0x20] sm:$0xff]
  %v3161 = vld [vmem:[%s67 + $0x28] sm:$0xff]
  %v3162 = vld [vmem:[%s67 + $0x30] sm:$0xff]
  %v3163 = vld [vmem:[%s67 + $0x38] sm:$0xff]
  %v3164 = vld [vmem:[%s69] sm:$0x1]
  %v3165 = vpack.c.bf16 %v3155, %v3154
  %v3166 = vpack.c.bf16 %v3157, %v3156
  %v3167 = vpack.c.bf16 %v3159, %v3158
  %v3168 = vpack.c.bf16 %v3161, %v3160
  %v3169 = vpack.c.bf16 %v3163, %v3162
  %v3171 = vlaneseq
  %v3172 = vshrl.u32 %v3171, 7
  %v3173 = vsub.s32 0, %v3172
  %v3174 = vrot.slane %v3164, %v3173
  %v3177 = vsel %vm1161, %v3165, 0
  %3179 = vmatprep.subr.bf16.mxu0 0
  %3180 = vmatpush1.bf16.msra.mxu0 %v3166
  %3181 = vmatprep.subr.bf16.mxu0 0
  %3182 = vmatpush1.bf16.msra.mxu0 %v3167
  %3183 = vmatprep.subr.bf16.mxu0 0
  %3184 = vmatpush1.bf16.msra.mxu0 %v3168
  %3185 = vmatprep.subr.bf16.mxu0 0
  %3186 = vmatpush1.bf16.msra.mxu0 %v3169
  %3187 = vmatprep.subr.bf16.mxu0 0
  %3188 = vmatpush1.bf16.msra.mxu0 0
  %3189 = vmatprep.subr.bf16.mxu0 0
  %3190 = vmatpush1.bf16.msra.mxu0 0
  %3191 = vmatprep.subr.bf16.mxu0 0
  %3192 = vmatpush1.bf16.msra.mxu0 0
  %3193 = vmatprep.subr.bf16.mxu0 0
  %3194 = vmatpush1.bf16.msra.mxu0 0
  %3195 = vmatprep.subr.bf16.mxu0 0
  %3196 = vmatpush1.bf16.msra.mxu0 0
  %3197 = vmatprep.subr.bf16.mxu0 0
  %3198 = vmatpush1.bf16.msra.mxu0 0
  %3199 = vmatprep.subr.bf16.mxu0 0
  %3200 = vmatpush1.bf16.msra.mxu0 0
  %3201 = vmatprep.subr.bf16.mxu0 0
  %3202 = vmatpush1.bf16.msra.mxu0 0
  %3203 = vmatprep.subr.bf16.mxu0 0
  %3204 = vmatpush1.bf16.msra.mxu0 0
  %3205 = vmatprep.subr.bf16.mxu0 0
  %3206 = vmatpush1.bf16.msra.mxu0 0
  %3207 = vmatprep.subr.bf16.mxu0 0
  %3208 = vmatpush1.bf16.msra.mxu0 0
  %3209 = vmatprep.subr.bf16.mxu0 0
  %3210 = vmatpush1.bf16.msra.mxu0 0
  %3211 = vmatprep.mubr.bf16.mxu0 0
  %3212 = vmatmul.mubr.bf16.gmra.mrb[0].mxu0 %v3177
  %v3213 = vpop.f32.mrb[0].mxu0
  %v3214 = vadd.f32 %v3174, %v3213
  %v3215 = vpop.f32.mrb[0].mxu0
  %v3216 = vpop.f32.mrb[0].mxu0
  %v3217 = vadd.f32 %v3174, %v3216
  %v3218 = vpop.f32.mrb[0].mxu0
  %3219 = vdwg.mxu0
  %v3220 = vadd.f32 %v3094, %v3214
  %v3221 = vadd.f32 %v3095, %v3217
  %v3222 = vsel %vm177, %v3220, 0.0
  %3223 = vadd.xlane.f32.xlu0 %v3222
  %v3224 = vpop.xlane.xlu0 %3223
  %v3225 = vsel %vm177, %v3221, 0.0
  %3226 = vadd.xlane.f32.xlu0 %v3225
  %v3227 = vpop.xlane.xlu0 %3226
  %v3228 = vmul.f32 %v3224, %v1042
  %v3229 = vmul.f32 %v3227, %v1042
  %v3230 = vsub.f32 %v3220, %v3228
  %v3231 = vsub.f32 %v3221, %v3229
  %v3232 = vmul.f32 %v3230, %v3230
  %v3233 = vmul.f32 %v3231, %v3231
  %v3234 = vsel %vm177, %v3232, 0.0
  %3235 = vadd.xlane.f32.xlu0 %v3234
  %v3236 = vpop.xlane.xlu0 %3235
  %v3237 = vsel %vm177, %v3233, 0.0
  %3238 = vadd.xlane.f32.xlu0 %v3237
  %v3239 = vpop.xlane.xlu0 %3238
  %v3240 = vmul.f32 %v3236, %v1042
  %v3241 = vmul.f32 %v3239, %v1042
  %v3242 = vadd.f32 %v3240, 1e-05
  %v3243 = vadd.f32 %v3241, 1e-05
  %v3244 = vrsqrt.pop %v3242
  %v3245 = vrsqrt.pop %v3243
  %v3246 = vmul.f32 %v3230, %v3244
  %v3247 = vmul.f32 %v3231, %v3245
  %v3248 = vld [vmem:[%s59] sm:$0x1]
  %v3250 = vlaneseq
  %v3251 = vshrl.u32 %v3250, 7
  %v3252 = vsub.s32 0, %v3251
  %v3253 = vrot.slane %v3248, %v3252
  %v3255 = vmul.f32 %v3246, %v3253
  %v3256 = vmul.f32 %v3247, %v3253
  %v3257 = vld [vmem:[%s61] sm:$0x1]
  %v3259 = vlaneseq
  %v3260 = vshrl.u32 %v3259, 7
  %v3261 = vsub.s32 0, %v3260
  %v3262 = vrot.slane %v3257, %v3261
  %v3264 = vadd.f32 %v3255, %v3262
  %v3265 = vadd.f32 %v3256, %v3262
  %v3266 = vld [vmem:[%s71] sm:$0xff]
  %v3267 = vld [vmem:[%s71 + $0x8] sm:$0xff]
  %v3268 = vld [vmem:[%s71 + $0x10] sm:$0xff]
  %v3269 = vld [vmem:[%s71 + $0x18] sm:$0xff]
  %v3270 = vld [vmem:[%s73] sm:$0x1]
  %v3271 = vpack.c.bf16 %v3265, %v3264
  %v3272 = vpack.c.bf16 %v3267, %v3266
  %v3273 = vpack.c.bf16 %v3269, %v3268
  %v3275 = vlaneseq
  %v3276 = vshrl.u32 %v3275, 7
  %v3277 = vsub.s32 0, %v3276
  %v3278 = vrot.slane %v3270, %v3277
  %v3281 = vsel %vm177, %v3271, 0
  %3283 = vmatprep.subr.bf16.mxu0 0
  %3284 = vmatpush1.bf16.msra.mxu0 %v3272
  %3285 = vmatprep.subr.bf16.mxu0 0
  %3286 = vmatpush1.bf16.msra.mxu0 %v3273
  %3287 = vmatprep.subr.bf16.mxu0 0
  %3288 = vmatpush1.bf16.msra.mxu0 0
  %3289 = vmatprep.subr.bf16.mxu0 0
  %3290 = vmatpush1.bf16.msra.mxu0 0
  %3291 = vmatprep.subr.bf16.mxu0 0
  %3292 = vmatpush1.bf16.msra.mxu0 0
  %3293 = vmatprep.subr.bf16.mxu0 0
  %3294 = vmatpush1.bf16.msra.mxu0 0
  %3295 = vmatprep.subr.bf16.mxu0 0
  %3296 = vmatpush1.bf16.msra.mxu0 0
  %3297 = vmatprep.subr.bf16.mxu0 0
  %3298 = vmatpush1.bf16.msra.mxu0 0
  %3299 = vmatprep.subr.bf16.mxu0 0
  %3300 = vmatpush1.bf16.msra.mxu0 0
  %3301 = vmatprep.subr.bf16.mxu0 0
  %3302 = vmatpush1.bf16.msra.mxu0 0
  %3303 = vmatprep.subr.bf16.mxu0 0
  %3304 = vmatpush1.bf16.msra.mxu0 0
  %3305 = vmatprep.subr.bf16.mxu0 0
  %3306 = vmatpush1.bf16.msra.mxu0 0
  %3307 = vmatprep.subr.bf16.mxu0 0
  %3308 = vmatpush1.bf16.msra.mxu0 0
  %3309 = vmatprep.subr.bf16.mxu0 0
  %3310 = vmatpush1.bf16.msra.mxu0 0
  %3311 = vmatprep.subr.bf16.mxu0 0
  %3312 = vmatpush1.bf16.msra.mxu0 0
  %3313 = vmatprep.subr.bf16.mxu0 0
  %3314 = vmatpush1.bf16.msra.mxu0 0
  %3315 = vmatprep.mubr.bf16.mxu0 0
  %3316 = vmatmul.mubr.bf16.gmra.mrb[0].mxu0 %v3281
  %v3317 = vpop.f32.mrb[0].mxu0
  %v3318 = vadd.f32 %v3278, %v3317
  %v3319 = vpop.f32.mrb[0].mxu0
  %v3320 = vpop.f32.mrb[0].mxu0
  %v3321 = vadd.f32 %v3278, %v3320
  %v3322 = vpop.f32.mrb[0].mxu0
  %3323 = vdwg.mxu0
  %3324 = vst.msk [vmem:[%s75] sm:$0xff] %vm338, %v3318
  %3325 = vst.msk [vmem:[%s75 + $0x8] sm:$0xff] %vm338, %v3321
  // Predicated region
  $region150: #{seq2seq_forward.1} parent=0 // pred_check
    _
  $region151: #{seq2seq_forward.1} parent=0 // pred_check_branch
    %3327 = sbr.rel (0) target = $region153
  $region152: #{seq2seq_forward.1} parent=0 // pred_region
    _
  $region153: #{seq2seq_forward.1} parent=0 // pred_fallthru
    _
  // Predicated region
  $region154: #{seq2seq_forward.1} parent=0 // pred_check
    _
  $region155: #{seq2seq_forward.1} parent=0 // pred_check_branch
    %3329 = sbr.rel (0) target = $region157
  $region156: #{seq2seq_forward.1} parent=0 // pred_region
    _
  $region157: #{seq2seq_forward.1} parent=0 // pred_fallthru
    _

</llo_original>
